<compile_context>
chip_gen: v6e
topology: v6e:2x2x1
jax: 0.10.0
libtpu: 0.0.40
codegen_flags: <defaults>
</compile_context>

<pallas_src>
import functools

import jax
import jax.numpy as jnp
from jax.experimental import pallas as pl
from jax.experimental.pallas import tpu as pltpu

TIMES = 2  # `times` in the PyTorch reference


# ----------------------------------------------------------------------------
# Plain-JAX glue: exact bilinear factor-2 resize (align_corners=False).
# ----------------------------------------------------------------------------
def downsample2x(x_nchw):
    """Bilinear 0.5x with align_corners=False == 2x2 average pooling."""
    B, C, H, W = x_nchw.shape
    return x_nchw.reshape(B, C, H // 2, 2, W // 2, 2).mean(axis=(3, 5))


def _upsample1d(x, axis):
    n = x.shape[axis]
    idx = jnp.arange(n)
    xm1 = jnp.take(x, jnp.clip(idx - 1, 0, n - 1), axis=axis)
    xp1 = jnp.take(x, jnp.clip(idx + 1, 0, n - 1), axis=axis)
    even = 0.25 * xm1 + 0.75 * x
    odd = 0.75 * x + 0.25 * xp1
    out = jnp.stack([even, odd], axis=axis + 1)
    shape = list(x.shape)
    shape[axis] = 2 * n
    return out.reshape(shape)


def upsample2x(x_nchw):
    """Bilinear 2x with align_corners=False (separable [0.25, 0.75] stencil)."""
    return _upsample1d(_upsample1d(x_nchw, 2), 3)


def make_col_masks(H, W):
    """Column-validity masks for horizontal conv taps dx in (-1, 0, +1)."""
    j = jnp.arange(H * W, dtype=jnp.int32) % W
    rows = [jnp.logical_and(j + dx >= 0, j + dx <= W - 1).astype(jnp.float32)
            for dx in (-1, 0, 1)]
    return jnp.stack(rows, axis=0)  # (3, H*W)


# ----------------------------------------------------------------------------
# Pallas kernel 1: FlashCrossAttention (1x1 q/k/v convs + SDPA + 1x1 proj).
# Channels-first: activations are (C, N) tiles, spatial axis on lanes.
# ----------------------------------------------------------------------------
def _attn_kernel(qd_ref, kd_ref, wq_ref, wk_ref, wv_ref, wp_ref, bp_ref,
                 qo_ref, ko_ref, po_ref, *, scale):
    qd = qd_ref[0].astype(jnp.bfloat16)                  # (C, N)
    kd = kd_ref[0].astype(jnp.bfloat16)                  # (C, N)
    q = jnp.dot(wq_ref[...], qd, preferred_element_type=jnp.float32)
    k = jnp.dot(wk_ref[...], kd, preferred_element_type=jnp.float32)
    v = jnp.dot(wv_ref[...], kd, preferred_element_type=jnp.float32)
    # scores[n, m] = sum_c q[c, n] * k[c, m].  SDPA on (B, N, C) tensors is
    # single-head with scale 1/sqrt(C) (heads/dim_head only size `width`).
    s = jax.lax.dot_general(q.astype(jnp.bfloat16), k.astype(jnp.bfloat16),
                            (((0,), (0,)), ((), ())),
                            preferred_element_type=jnp.float32) * scale
    s = s - jnp.max(s, axis=-1, keepdims=True)
    p = jnp.exp(s)
    p = p * pl.reciprocal(jnp.sum(p, axis=-1, keepdims=True), approx=True)
    # attn[c, n] = sum_m v[c, m] * p[n, m]
    attn = jax.lax.dot_general(v.astype(jnp.bfloat16), p.astype(jnp.bfloat16),
                               (((1,), (1,)), ((), ())),
                               preferred_element_type=jnp.float32)
    proj = jnp.dot(wp_ref[...], attn.astype(jnp.bfloat16),
                   preferred_element_type=jnp.float32) + bp_ref[...]
    qo_ref[0] = q
    ko_ref[0] = k
    po_ref[0] = proj


def cross_attention(qd_cf, kd_cf, wq, wk, wv, wp, bp):
    B, C, N = qd_cf.shape
    kern = functools.partial(_attn_kernel, scale=1.0 / (C ** 0.5))
    bmap = lambda b: (b, 0, 0)
    wmap = lambda b: (0, 0)
    return pl.pallas_call(
        kern,
        out_shape=[jax.ShapeDtypeStruct((B, C, N), jnp.float32)] * 3,
        grid=(B,),
        in_specs=[
            pl.BlockSpec((1, C, N), bmap),
            pl.BlockSpec((1, C, N), bmap),
            pl.BlockSpec((C, C), wmap),
            pl.BlockSpec((C, C), wmap),
            pl.BlockSpec((C, C), wmap),
            pl.BlockSpec((C, C), wmap),
            pl.BlockSpec((C, 1), wmap),
        ],
        out_specs=[pl.BlockSpec((1, C, N), bmap)] * 3,
        compiler_params=pltpu.CompilerParams(dimension_semantics=("parallel",)),
    )(qd_cf, kd_cf, wq, wk, wv, wp, bp)


# ----------------------------------------------------------------------------
# Pallas kernel 2: FNO spectral mixing.  All modes in ONE kernel invocation
# via block-diagonal (M*Cin, M*Cout) real/imag weights; grid=(2,) over the
# two FNO inputs (x1, x2) keeps a parallel axis for v7x.
# ----------------------------------------------------------------------------
def _spectral_kernel(xr_ref, xi_ref, wr_ref, wi_ref, or_ref, oi_ref):
    xr = xr_ref[0].astype(jnp.bfloat16)                  # (B, M*Cin)
    xi = xi_ref[0].astype(jnp.bfloat16)
    wr = wr_ref[...]                                     # (M*Cin, M*Cout) bf16
    wi = wi_ref[...]
    or_ref[0] = (jnp.dot(xr, wr, preferred_element_type=jnp.float32)
                 - jnp.dot(xi, wi, preferred_element_type=jnp.float32))
    oi_ref[0] = (jnp.dot(xr, wi, preferred_element_type=jnp.float32)
                 + jnp.dot(xi, wr, preferred_element_type=jnp.float32))


def spectral_mix_pair(x1_fft, x2_fft, wr_bd, wi_bd):
    """einsum('bikl,iokl->bokl', x, W) with complex W for both FNO inputs."""
    B, Cin, m0, m1 = x1_fft.shape
    M = m0 * m1
    MK = M * Cin
    MO = wr_bd.shape[1]
    Cout = MO // M
    xs = jnp.stack([x1_fft, x2_fft], axis=0)             # (2, B, Cin, m0, m1)
    xs = xs.transpose(0, 1, 3, 4, 2).reshape(2, B, MK)   # mode-major packing
    xr = jnp.real(xs).astype(jnp.float32)
    xi = jnp.imag(xs).astype(jnp.float32)
    smap = lambda s: (s, 0, 0)
    wmap = lambda s: (0, 0)
    o_r, o_i = pl.pallas_call(
        _spectral_kernel,
        out_shape=[jax.ShapeDtypeStruct((2, B, MO), jnp.float32)] * 2,
        grid=(2,),
        in_specs=[
            pl.BlockSpec((1, B, MK), smap),
            pl.BlockSpec((1, B, MK), smap),
            pl.BlockSpec((MK, MO), wmap),
            pl.BlockSpec((MK, MO), wmap),
        ],
        out_specs=[pl.BlockSpec((1, B, MO), smap)] * 2,
        compiler_params=pltpu.CompilerParams(dimension_semantics=("parallel",)),
    )(xr, xi, wr_bd, wi_bd)
    out = (o_r + 1j * o_i).reshape(2, B, m0, m1, Cout).transpose(0, 1, 4, 2, 3)
    return out[0], out[1]


# ----------------------------------------------------------------------------
# Pallas kernel 3: the entire NBPFilter chain + final fusion, fused.
# 3x3 convs are done in-kernel: the (Cin, N) activation row is written into a
# zero-padded flat scratch, the 9 taps are static shifted views (plus column
# masks for the row wrap), concatenated to a (9*Cin, N) patch matrix and fed
# to a single MXU matmul per conv layer (K = 72 / 144).
# ----------------------------------------------------------------------------
def _nbp_kernel(cmask_ref, m_ref, attn_ref, wi_ref, bi_ref, wc_ref, bc_ref,
                esc_ref, esh_ref, wf_ref, bf_ref, o_ref, pad_ref,
                *, H, W, num_blocks, eps):
    N = H * W
    PAD = W + 1
    Ch = wi_ref.shape[0]
    M = m_ref[0]                                         # (C, N) f32

    pad_ref[...] = jnp.zeros(pad_ref.shape, jnp.float32)  # zero halo once

    def im2col(x):
        """(Cin, N) f32 -> (9*Cin, N) bf16 patch matrix (tap-major rows)."""
        cin = x.shape[0]
        pad_ref[:cin, PAD:PAD + N] = x
        pieces = []
        for dy in (-1, 0, 1):
            for dx in (-1, 0, 1):
                off = dy * W + dx
                sh = pad_ref[:cin, PAD + off:PAD + off + N]
                if dx != 0:                               # kill row wrap
                    sh = sh * cmask_ref[pl.ds(dx + 1, 1), :]
                pieces.append(sh)
        return jnp.concatenate(pieces, axis=0).astype(jnp.bfloat16)

    # init 3x3 conv
    x = (jnp.dot(wi_ref[...], im2col(M), preferred_element_type=jnp.float32)
         + bi_ref[...])                                  # (Ch, N)

    ones_row = jnp.full((1, Ch), 1.0 / Ch, dtype=jnp.float32)
    for l in range(num_blocks):
        y = (jnp.dot(wc_ref[l], im2col(x), preferred_element_type=jnp.float32)
             + bc_ref[l])                                # (Ch, N)
        # LayerNorm over the channel (sublane) axis; stats via MXU row-sums.
        mean = jnp.dot(ones_row, y, preferred_element_type=jnp.float32)
        cent = y - mean
        var = jnp.dot(ones_row, cent * cent, preferred_element_type=jnp.float32)
        yn = cent * jax.lax.rsqrt(var + eps)
        # LayerNorm affine folded into the precomputed FiLM scale/shift.
        x = jnp.maximum(yn * esc_ref[l, 0] + esh_ref[l, 0], 0.0)

    # final 1x1 conv + sigmoid, NBP output M*filt, fuse with attention branch.
    logits = (jnp.dot(wf_ref[...], x.astype(jnp.bfloat16),
                      preferred_element_type=jnp.float32) + bf_ref[...])
    o_ref[0] = M * jax.nn.sigmoid(logits) * attn_ref[0]


def nbp_fused(m_cf, attn_cf, col_masks, nbp, eff_scale, eff_shift, *, H, W):
    B, C, N = m_cf.shape
    Ch = nbp["w_init"].shape[0]
    L = nbp["w_conv"].shape[0]
    kern = functools.partial(_nbp_kernel, H=H, W=W, num_blocks=L, eps=1e-5)
    bmap = lambda b: (b, 0, 0)
    f2 = lambda b: (0, 0)
    f3 = lambda b: (0, 0, 0)
    return pl.pallas_call(
        kern,
        out_shape=jax.ShapeDtypeStruct((B, C, N), jnp.float32),
        grid=(B,),
        in_specs=[
            pl.BlockSpec((3, N), f2),                        # column masks
            pl.BlockSpec((1, C, N), bmap),                   # M (FNO product)
            pl.BlockSpec((1, C, N), bmap),                   # upsampled attn
            pl.BlockSpec((Ch, 9 * C), f2),                   # init conv W
            pl.BlockSpec((Ch, 1), f2),                       # init conv b
            pl.BlockSpec((L, Ch, 9 * Ch), f3),               # block conv W
            pl.BlockSpec((L, Ch, 1), f3),                    # block conv b
            pl.BlockSpec((L, 1, Ch, 1), lambda b: (0, b, 0, 0)),  # eff scale
            pl.BlockSpec((L, 1, Ch, 1), lambda b: (0, b, 0, 0)),  # eff shift
            pl.BlockSpec((C, Ch), f2),                       # final conv W
            pl.BlockSpec((C, 1), f2),                        # final conv b
        ],
        out_specs=pl.BlockSpec((1, C, N), bmap),
        scratch_shapes=[pltpu.VMEM((max(C, Ch), N + 2 * (W + 1)), jnp.float32)],
        compiler_params=pltpu.CompilerParams(dimension_semantics=("parallel",)),
    )(col_masks, m_cf, attn_cf, nbp["w_init"], nbp["b_init"],
      nbp["w_conv"], nbp["b_conv"], eff_scale, eff_shift,
      nbp["w_final"], nbp["b_final"])


# ----------------------------------------------------------------------------
# Parameters (deterministic, synthetic) and kernel-layout packing.
# ----------------------------------------------------------------------------
def init_params(key, C, Ch, num_blocks, modes, time_dim):
    keys = iter(jax.random.split(key, 64))

    def nrm(shape, s=0.1):
        return (s * jax.random.normal(next(keys), shape)).astype(jnp.float32)

    p = {
        "wq": nrm((C, C)), "wk": nrm((C, C)), "wv": nrm((C, C)),
        "wp": nrm((C, C)), "bp": nrm((C, 1)),
        "fno_wr": nrm((C, C, modes[0], modes[1]), 1.0 / (C * C)),
        "fno_wi": nrm((C, C, modes[0], modes[1]), 1.0 / (C * C)),
        "init_w": nrm((Ch, C, 3, 3)), "init_b": nrm((Ch,)),
        "final_w": nrm((C, Ch)), "final_b": nrm((C,)),
        "blocks": [],
    }
    for _ in range(num_blocks):
        p["blocks"].append(dict(
            conv_w=nrm((Ch, Ch, 3, 3)), conv_b=nrm((Ch,)),
            ln_g=(jnp.ones((Ch,), jnp.float32) + nrm((Ch,), 0.05)),
            ln_b=nrm((Ch,), 0.05),
            ws=nrm((time_dim, Ch)), bs=nrm((Ch,)),
            wh=nrm((time_dim, Ch)), bh=nrm((Ch,)),
        ))
    return p


def pack_params(p):
    """Repack PyTorch-shaped params into kernel-ready layouts (bf16 weights)."""
    C = p["wq"].shape[0]
    Ch = p["init_w"].shape[0]
    m0, m1 = p["fno_wr"].shape[2:]
    M = m0 * m1
    L = len(p["blocks"])

    def block_diag(w):  # (Cin, Cout, m0, m1) -> block-diag (M*Cin, M*Cout) bf16
        Cin, Cout = w.shape[:2]
        wm = w.transpose(2, 3, 0, 1).reshape(M, Cin, Cout)
        z = jnp.zeros((M, Cin, M, Cout), w.dtype)
        z = z.at[jnp.arange(M), :, jnp.arange(M), :].set(wm)
        return z.reshape(M * Cin, M * Cout).astype(jnp.bfloat16)

    def conv_pack(w):   # (Cout, Cin, 3, 3) -> (Cout, 9*Cin), tap-major rows
        Cout, Cin = w.shape[:2]
        return w.transpose(0, 2, 3, 1).reshape(Cout, 9 * Cin).astype(jnp.bfloat16)

    blocks = p["blocks"]
    return {
        "wq": p["wq"].astype(jnp.bfloat16), "wk": p["wk"].astype(jnp.bfloat16),
        "wv": p["wv"].astype(jnp.bfloat16), "wp": p["wp"].astype(jnp.bfloat16),
        "bp": p["bp"],
        "fno_wr_bd": block_diag(p["fno_wr"]),
        "fno_wi_bd": block_diag(p["fno_wi"]),
        "nbp": {
            "w_init": conv_pack(p["init_w"]),
            "b_init": p["init_b"].reshape(Ch, 1),
            "w_conv": jnp.stack([conv_pack(b["conv_w"]) for b in blocks]),
            "b_conv": jnp.stack([b["conv_b"] for b in blocks]).reshape(L, Ch, 1),
            "w_final": p["final_w"].astype(jnp.bfloat16),
            "b_final": p["final_b"].reshape(C, 1),
        },
        "film": {
            "ln_g": jnp.stack([b["ln_g"] for b in blocks]),   # (L, Ch)
            "ln_b": jnp.stack([b["ln_b"] for b in blocks]),
            "ws": jnp.stack([b["ws"] for b in blocks]),       # (L, T, Ch)
            "bs": jnp.stack([b["bs"] for b in blocks]),
            "wh": jnp.stack([b["wh"] for b in blocks]),
            "bh": jnp.stack([b["bh"] for b in blocks]),
        },
    }


# ----------------------------------------------------------------------------
# Full ATTFNOBlock forward
# ----------------------------------------------------------------------------
def attfno_forward(Qc, Kc, t_emb, params, *, modes):
    B, C, H, W = Qc.shape
    h, w = H // TIMES, W // TIMES
    Ndn, Nup = h * w, H * W

    # --- bilinear downsample (factor 2, align_corners=False) ---
    qd = downsample2x(Qc).reshape(B, C, Ndn)
    kd = downsample2x(Kc).reshape(B, C, Ndn)

    # --- fused cross attention (Pallas).  FlashCrossAttention returns
    #     (Q_sp, K_sp, proj(attn)); ATTFNOBlock unpacks them as
    #     (attn_out, K_spatial, Q_spatial). ---
    q_cf, k_cf, proj_cf = cross_attention(qd, kd, params["wq"], params["wk"],
                                          params["wv"], params["wp"], params["bp"])
    attn_branch = q_cf.reshape(B, C, h, w)     # "attn_out" (raw query proj)
    K_spatial = k_cf.reshape(B, C, h, w)       # x2 for FNO
    Q_spatial = proj_cf.reshape(B, C, h, w)    # x1 for FNO

    # --- FNOBlockNd spectral path ---
    # TODO(synk): rFFT/irFFT have no Pallas TPU equivalent; computed with jnp.fft.
    m0, m1 = modes
    x1_fft = jnp.fft.rfftn(Q_spatial, axes=(-2, -1), norm="ortho")[:, :, :m0, :m1]
    x2_fft = jnp.fft.rfftn(K_spatial, axes=(-2, -1), norm="ortho")[:, :, :m0, :m1]
    out1_fft, out2_fft = spectral_mix_pair(x1_fft, x2_fft,
                                           params["fno_wr_bd"], params["fno_wi_bd"])
    x1_spec = jnp.fft.irfftn(out1_fft, s=(H, W), axes=(-2, -1), norm="ortho")
    x2_spec = jnp.fft.irfftn(out2_fft, s=(H, W), axes=(-2, -1), norm="ortho")
    m_cf = (x1_spec * x2_spec).astype(jnp.float32).reshape(B, C, Nup)

    # --- FiLM scale/shift + LayerNorm affine, precomputed per batch (tiny) ---
    film = params["film"]
    scale = jnp.einsum("bt,lth->lbh", t_emb, film["ws"]) + film["bs"][:, None, :]
    shift = jnp.einsum("bt,lth->lbh", t_emb, film["wh"]) + film["bh"][:, None, :]
    eff_scale = (film["ln_g"][:, None, :] * scale)[..., None]            # (L,B,Ch,1)
    eff_shift = (film["ln_b"][:, None, :] * scale + shift)[..., None]

    # --- upsample attention branch (bilinear 2x, plain JAX glue) ---
    attn_up = upsample2x(attn_branch).reshape(B, C, Nup)

    # --- fused NBPFilter chain + final fusion (single Pallas kernel) ---
    col_masks = make_col_masks(H, W)
    out_cf = nbp_fused(m_cf, attn_up, col_masks, params["nbp"],
                       eff_scale, eff_shift, H=H, W=W)
    return out_cf.reshape(B, C, H, W)


# ----------------------------------------------------------------------------
if __name__ == "__main__":
    B, width, H, W = 2, 8, 16, 16          # heads=2, dim_head=4 -> width=8
    fno_modes = (4, 4)
    nbf_hidden, nbf_blocks = 16, 2

    key = jax.random.PRNGKey(0)
    kq, kk, kt, kp = jax.random.split(key, 4)
    Q_candidate = jax.random.normal(kq, (B, width, H, W), jnp.float32)
    K_candidate = jax.random.normal(kk, (B, width, H, W), jnp.float32)
    t_emb = jax.random.normal(kt, (B, width), jnp.float32)

    params = init_params(kp, width, nbf_hidden, nbf_blocks, fno_modes, width)
    packed = pack_params(params)

    fwd = jax.jit(functools.partial(attfno_forward, modes=fno_modes))
    out = jax.block_until_ready(fwd(Q_candidate, K_candidate, t_emb, packed))

    assert out.shape == (B, width, H, W), out.shape
    assert bool(jnp.all(jnp.isfinite(out)))
    print("KERNEL_OK")
</pallas_src>

<mosaic_0001>
module attributes {stable_mosaic.version = 11 : i64} {
  func.func @_attn_kernel(%arg0: i32, %arg1: memref<1x8x64xf32, #tpu.memory_space<vmem>>, %arg2: memref<1x8x64xf32, #tpu.memory_space<vmem>>, %arg3: memref<8x8xbf16, #tpu.memory_space<vmem>>, %arg4: memref<8x8xbf16, #tpu.memory_space<vmem>>, %arg5: memref<8x8xbf16, #tpu.memory_space<vmem>>, %arg6: memref<8x8xbf16, #tpu.memory_space<vmem>>, %arg7: memref<8x1xf32, #tpu.memory_space<vmem>>, %arg8: memref<1x8x64xf32, #tpu.memory_space<vmem>>, %arg9: memref<1x8x64xf32, #tpu.memory_space<vmem>>, %arg10: memref<1x8x64xf32, #tpu.memory_space<vmem>>) attributes {dimension_semantics = [#tpu.dimension_semantics<parallel>], iteration_bounds = array<i64: 2>, scalar_prefetch = 0 : i64, scratch_operands = 0 : i64, tpu.core_type = #tpu.core_type<tc>, window_params = [{transform_indices = @transform_0, window_bounds = array<i64: 1, 8, 64>}, {transform_indices = @transform_1, window_bounds = array<i64: 1, 8, 64>}, {pipeline_mode = #tpu.pipeline_mode<synchronous>, transform_indices = @transform_2, window_bounds = array<i64: 8, 8>}, {pipeline_mode = #tpu.pipeline_mode<synchronous>, transform_indices = @transform_3, window_bounds = array<i64: 8, 8>}, {pipeline_mode = #tpu.pipeline_mode<synchronous>, transform_indices = @transform_4, window_bounds = array<i64: 8, 8>}, {pipeline_mode = #tpu.pipeline_mode<synchronous>, transform_indices = @transform_5, window_bounds = array<i64: 8, 8>}, {pipeline_mode = #tpu.pipeline_mode<synchronous>, transform_indices = @transform_6, window_bounds = array<i64: 8, 1>}, {transform_indices = @transform_7, window_bounds = array<i64: 1, 8, 64>}, {transform_indices = @transform_8, window_bounds = array<i64: 1, 8, 64>}, {transform_indices = @transform_9, window_bounds = array<i64: 1, 8, 64>}]} {
    %c0 = arith.constant 0 : index
    %c0_0 = arith.constant 0 : index
    %c0_1 = arith.constant 0 : index
    %0 = vector.load %arg1[%c0, %c0_0, %c0_1] : memref<1x8x64xf32, #tpu.memory_space<vmem>>, vector<1x8x64xf32>
    %1 = vector.shape_cast %0 : vector<1x8x64xf32> to vector<8x64xf32>
    %2 = arith.truncf %1 : vector<8x64xf32> to vector<8x64xbf16>
    %c0_2 = arith.constant 0 : index
    %c0_3 = arith.constant 0 : index
    %c0_4 = arith.constant 0 : index
    %3 = vector.load %arg2[%c0_2, %c0_3, %c0_4] : memref<1x8x64xf32, #tpu.memory_space<vmem>>, vector<1x8x64xf32>
    %4 = vector.shape_cast %3 : vector<1x8x64xf32> to vector<8x64xf32>
    %5 = arith.truncf %4 : vector<8x64xf32> to vector<8x64xbf16>
    %c0_5 = arith.constant 0 : index
    %c0_6 = arith.constant 0 : index
    %6 = vector.load %arg3[%c0_5, %c0_6] : memref<8x8xbf16, #tpu.memory_space<vmem>>, vector<8x8xbf16>
    %cst = arith.constant dense<0.000000e+00> : vector<8x64xf32>
    %7 = tpu.matmul %6, %2, %cst {dimension_numbers = #tpu.dot_dimension_numbers<[1], [0], [0], [1], [0, 0, 1, 1], [], []>} : vector<8x8xbf16>, vector<8x64xbf16>, vector<8x64xf32> -> vector<8x64xf32>
    %c0_7 = arith.constant 0 : index
    %c0_8 = arith.constant 0 : index
    %8 = vector.load %arg4[%c0_7, %c0_8] : memref<8x8xbf16, #tpu.memory_space<vmem>>, vector<8x8xbf16>
    %cst_9 = arith.constant dense<0.000000e+00> : vector<8x64xf32>
    %9 = tpu.matmul %8, %5, %cst_9 {dimension_numbers = #tpu.dot_dimension_numbers<[1], [0], [0], [1], [0, 0, 1, 1], [], []>} : vector<8x8xbf16>, vector<8x64xbf16>, vector<8x64xf32> -> vector<8x64xf32>
    %c0_10 = arith.constant 0 : index
    %c0_11 = arith.constant 0 : index
    %10 = vector.load %arg5[%c0_10, %c0_11] : memref<8x8xbf16, #tpu.memory_space<vmem>>, vector<8x8xbf16>
    %cst_12 = arith.constant dense<0.000000e+00> : vector<8x64xf32>
    %11 = tpu.matmul %10, %5, %cst_12 {dimension_numbers = #tpu.dot_dimension_numbers<[1], [0], [0], [1], [0, 0, 1, 1], [], []>} : vector<8x8xbf16>, vector<8x64xbf16>, vector<8x64xf32> -> vector<8x64xf32>
    %12 = arith.truncf %7 : vector<8x64xf32> to vector<8x64xbf16>
    %13 = arith.truncf %9 : vector<8x64xf32> to vector<8x64xbf16>
    %cst_13 = arith.constant dense<0.000000e+00> : vector<64x64xf32>
    %14 = tpu.matmul %12, %13, %cst_13 {dimension_numbers = #tpu.dot_dimension_numbers<[0], [0], [1], [1], [0, 1, 1, 1], [], []>} : vector<8x64xbf16>, vector<8x64xbf16>, vector<64x64xf32> -> vector<64x64xf32>
    %cst_14 = arith.constant 0.353553385 : f32
    %15 = vector.broadcast %cst_14 : f32 to vector<64x64xf32>
    %16 = arith.mulf %14, %15 : vector<64x64xf32>
    %cst_15 = arith.constant dense<0xFF800000> : vector<64xf32>
    %17 = vector.multi_reduction <maximumf>, %16, %cst_15 [1] : vector<64x64xf32> to vector<64xf32>
    %18 = vector.shape_cast %17 : vector<64xf32> to vector<64x1xf32>
    %19 = vector.broadcast %18 : vector<64x1xf32> to vector<64x64xf32>
    %20 = arith.subf %16, %19 : vector<64x64xf32>
    %21 = math.exp %20 : vector<64x64xf32>
    %cst_16 = arith.constant dense<0.000000e+00> : vector<64xf32>
    %22 = vector.multi_reduction <add>, %21, %cst_16 [1] : vector<64x64xf32> to vector<64xf32>
    %23 = vector.shape_cast %22 : vector<64xf32> to vector<64x1xf32>
    %24 = tpu.reciprocal %23 {approx = true} : vector<64x1xf32> -> vector<64x1xf32>
    %25 = vector.broadcast %24 : vector<64x1xf32> to vector<64x64xf32>
    %26 = arith.mulf %21, %25 : vector<64x64xf32>
    %27 = arith.truncf %11 : vector<8x64xf32> to vector<8x64xbf16>
    %28 = arith.truncf %26 : vector<64x64xf32> to vector<64x64xbf16>
    %cst_17 = arith.constant dense<0.000000e+00> : vector<8x64xf32>
    %29 = tpu.matmul %27, %28, %cst_17 {dimension_numbers = #tpu.dot_dimension_numbers<[1], [1], [0], [0], [0, 0, 1, 0], [], []>} : vector<8x64xbf16>, vector<64x64xbf16>, vector<8x64xf32> -> vector<8x64xf32>
    %c0_18 = arith.constant 0 : index
    %c0_19 = arith.constant 0 : index
    %30 = vector.load %arg6[%c0_18, %c0_19] : memref<8x8xbf16, #tpu.memory_space<vmem>>, vector<8x8xbf16>
    %31 = arith.truncf %29 : vector<8x64xf32> to vector<8x64xbf16>
    %cst_20 = arith.constant dense<0.000000e+00> : vector<8x64xf32>
    %32 = tpu.matmul %30, %31, %cst_20 {dimension_numbers = #tpu.dot_dimension_numbers<[1], [0], [0], [1], [0, 0, 1, 1], [], []>} : vector<8x8xbf16>, vector<8x64xbf16>, vector<8x64xf32> -> vector<8x64xf32>
    %c0_21 = arith.constant 0 : index
    %c0_22 = arith.constant 0 : index
    %33 = vector.load %arg7[%c0_21, %c0_22] : memref<8x1xf32, #tpu.memory_space<vmem>>, vector<8x1xf32>
    %34 = vector.broadcast %33 : vector<8x1xf32> to vector<8x64xf32>
    %35 = arith.addf %32, %34 : vector<8x64xf32>
    %c0_23 = arith.constant 0 : index
    %c0_24 = arith.constant 0 : index
    %c0_25 = arith.constant 0 : index
    %36 = vector.load %arg8[%c0_23, %c0_24, %c0_25] : memref<1x8x64xf32, #tpu.memory_space<vmem>>, vector<1x8x64xf32>
    %37 = vector.shape_cast %36 : vector<1x8x64xf32> to vector<8x64xf32>
    %38 = vector.shape_cast %7 : vector<8x64xf32> to vector<1x8x64xf32>
    tpu.vector_store %arg8[%c0_23, %c0_24, %c0_25], %38 {strides = array<i32>} : memref<1x8x64xf32, #tpu.memory_space<vmem>>, vector<1x8x64xf32>,
    %c0_26 = arith.constant 0 : index
    %c0_27 = arith.constant 0 : index
    %c0_28 = arith.constant 0 : index
    %39 = vector.load %arg9[%c0_26, %c0_27, %c0_28] : memref<1x8x64xf32, #tpu.memory_space<vmem>>, vector<1x8x64xf32>
    %40 = vector.shape_cast %39 : vector<1x8x64xf32> to vector<8x64xf32>
    %41 = vector.shape_cast %9 : vector<8x64xf32> to vector<1x8x64xf32>
    tpu.vector_store %arg9[%c0_26, %c0_27, %c0_28], %41 {strides = array<i32>} : memref<1x8x64xf32, #tpu.memory_space<vmem>>, vector<1x8x64xf32>,
    %c0_29 = arith.constant 0 : index
    %c0_30 = arith.constant 0 : index
    %c0_31 = arith.constant 0 : index
    %42 = vector.load %arg10[%c0_29, %c0_30, %c0_31] : memref<1x8x64xf32, #tpu.memory_space<vmem>>, vector<1x8x64xf32>
    %43 = vector.shape_cast %42 : vector<1x8x64xf32> to vector<8x64xf32>
    %44 = vector.shape_cast %35 : vector<8x64xf32> to vector<1x8x64xf32>
    tpu.vector_store %arg10[%c0_29, %c0_30, %c0_31], %44 {strides = array<i32>} : memref<1x8x64xf32, #tpu.memory_space<vmem>>, vector<1x8x64xf32>,
    return
  }
  func.func @transform_0(%arg0: i32) -> (i32, i32, i32) {
    %c0_i32 = arith.constant 0 : i32
    %c0_i32_0 = arith.constant 0 : i32
    %c0_i32_1 = arith.constant 0 : i32
    return %arg0, %c0_i32, %c0_i32_0 : i32, i32, i32
  }
  func.func @transform_1(%arg0: i32) -> (i32, i32, i32) {
    %c0_i32 = arith.constant 0 : i32
    %c0_i32_0 = arith.constant 0 : i32
    %c0_i32_1 = arith.constant 0 : i32
    return %arg0, %c0_i32, %c0_i32_0 : i32, i32, i32
  }
  func.func @transform_2(%arg0: i32) -> (i32, i32) {
    %c0_i32 = arith.constant 0 : i32
    %c0_i32_0 = arith.constant 0 : i32
    %c0_i32_1 = arith.constant 0 : i32
    return %c0_i32, %c0_i32_0 : i32, i32
  }
  func.func @transform_3(%arg0: i32) -> (i32, i32) {
    %c0_i32 = arith.constant 0 : i32
    %c0_i32_0 = arith.constant 0 : i32
    %c0_i32_1 = arith.constant 0 : i32
    return %c0_i32, %c0_i32_0 : i32, i32
  }
  func.func @transform_4(%arg0: i32) -> (i32, i32) {
    %c0_i32 = arith.constant 0 : i32
    %c0_i32_0 = arith.constant 0 : i32
    %c0_i32_1 = arith.constant 0 : i32
    return %c0_i32, %c0_i32_0 : i32, i32
  }
  func.func @transform_5(%arg0: i32) -> (i32, i32) {
    %c0_i32 = arith.constant 0 : i32
    %c0_i32_0 = arith.constant 0 : i32
    %c0_i32_1 = arith.constant 0 : i32
    return %c0_i32, %c0_i32_0 : i32, i32
  }
  func.func @transform_6(%arg0: i32) -> (i32, i32) {
    %c0_i32 = arith.constant 0 : i32
    %c0_i32_0 = arith.constant 0 : i32
    %c0_i32_1 = arith.constant 0 : i32
    return %c0_i32, %c0_i32_0 : i32, i32
  }
  func.func @transform_7(%arg0: i32) -> (i32, i32, i32) {
    %c0_i32 = arith.constant 0 : i32
    %c0_i32_0 = arith.constant 0 : i32
    %c0_i32_1 = arith.constant 0 : i32
    return %arg0, %c0_i32, %c0_i32_0 : i32, i32, i32
  }
  func.func @transform_8(%arg0: i32) -> (i32, i32, i32) {
    %c0_i32 = arith.constant 0 : i32
    %c0_i32_0 = arith.constant 0 : i32
    %c0_i32_1 = arith.constant 0 : i32
    return %arg0, %c0_i32, %c0_i32_0 : i32, i32, i32
  }
  func.func @transform_9(%arg0: i32) -> (i32, i32, i32) {
    %c0_i32 = arith.constant 0 : i32
    %c0_i32_0 = arith.constant 0 : i32
    %c0_i32_1 = arith.constant 0 : i32
    return %arg0, %c0_i32, %c0_i32_0 : i32, i32, i32
  }
}

module attributes {stable_mosaic.version = 11 : i64} {
  func.func @_spectral_kernel(%arg0: i32, %arg1: memref<1x2x128xf32, #tpu.memory_space<vmem>>, %arg2: memref<1x2x128xf32, #tpu.memory_space<vmem>>, %arg3: memref<128x128xbf16, #tpu.memory_space<vmem>>, %arg4: memref<128x128xbf16, #tpu.memory_space<vmem>>, %arg5: memref<1x2x128xf32, #tpu.memory_space<vmem>>, %arg6: memref<1x2x128xf32, #tpu.memory_space<vmem>>) attributes {dimension_semantics = [#tpu.dimension_semantics<parallel>], iteration_bounds = array<i64: 2>, scalar_prefetch = 0 : i64, scratch_operands = 0 : i64, tpu.core_type = #tpu.core_type<tc>, window_params = [{transform_indices = @transform_0, window_bounds = array<i64: 1, 2, 128>}, {transform_indices = @transform_1, window_bounds = array<i64: 1, 2, 128>}, {pipeline_mode = #tpu.pipeline_mode<synchronous>, transform_indices = @transform_2, window_bounds = array<i64: 128, 128>}, {pipeline_mode = #tpu.pipeline_mode<synchronous>, transform_indices = @transform_3, window_bounds = array<i64: 128, 128>}, {transform_indices = @transform_4, window_bounds = array<i64: 1, 2, 128>}, {transform_indices = @transform_5, window_bounds = array<i64: 1, 2, 128>}]} {
    %c0 = arith.constant 0 : index
    %c0_0 = arith.constant 0 : index
    %c0_1 = arith.constant 0 : index
    %0 = vector.load %arg1[%c0, %c0_0, %c0_1] : memref<1x2x128xf32, #tpu.memory_space<vmem>>, vector<1x2x128xf32>
    %1 = vector.shape_cast %0 : vector<1x2x128xf32> to vector<2x128xf32>
    %2 = arith.truncf %1 : vector<2x128xf32> to vector<2x128xbf16>
    %c0_2 = arith.constant 0 : index
    %c0_3 = arith.constant 0 : index
    %c0_4 = arith.constant 0 : index
    %3 = vector.load %arg2[%c0_2, %c0_3, %c0_4] : memref<1x2x128xf32, #tpu.memory_space<vmem>>, vector<1x2x128xf32>
    %4 = vector.shape_cast %3 : vector<1x2x128xf32> to vector<2x128xf32>
    %5 = arith.truncf %4 : vector<2x128xf32> to vector<2x128xbf16>
    %c0_5 = arith.constant 0 : index
    %c0_6 = arith.constant 0 : index
    %6 = vector.load %arg3[%c0_5, %c0_6] : memref<128x128xbf16, #tpu.memory_space<vmem>>, vector<128x128xbf16>
    %c0_7 = arith.constant 0 : index
    %c0_8 = arith.constant 0 : index
    %7 = vector.load %arg4[%c0_7, %c0_8] : memref<128x128xbf16, #tpu.memory_space<vmem>>, vector<128x128xbf16>
    %cst = arith.constant dense<0.000000e+00> : vector<2x128xf32>
    %8 = tpu.matmul %2, %6, %cst {dimension_numbers = #tpu.dot_dimension_numbers<[1], [0], [0], [1], [0, 0, 1, 1], [], []>} : vector<2x128xbf16>, vector<128x128xbf16>, vector<2x128xf32> -> vector<2x128xf32>
    %cst_9 = arith.constant dense<0.000000e+00> : vector<2x128xf32>
    %9 = tpu.matmul %5, %7, %cst_9 {dimension_numbers = #tpu.dot_dimension_numbers<[1], [0], [0], [1], [0, 0, 1, 1], [], []>} : vector<2x128xbf16>, vector<128x128xbf16>, vector<2x128xf32> -> vector<2x128xf32>
    %10 = arith.subf %8, %9 : vector<2x128xf32>
    %c0_10 = arith.constant 0 : index
    %c0_11 = arith.constant 0 : index
    %c0_12 = arith.constant 0 : index
    %11 = vector.load %arg5[%c0_10, %c0_11, %c0_12] : memref<1x2x128xf32, #tpu.memory_space<vmem>>, vector<1x2x128xf32>
    %12 = vector.shape_cast %11 : vector<1x2x128xf32> to vector<2x128xf32>
    %13 = vector.shape_cast %10 : vector<2x128xf32> to vector<1x2x128xf32>
    tpu.vector_store %arg5[%c0_10, %c0_11, %c0_12], %13 {strides = array<i32>} : memref<1x2x128xf32, #tpu.memory_space<vmem>>, vector<1x2x128xf32>,
    %cst_13 = arith.constant dense<0.000000e+00> : vector<2x128xf32>
    %14 = tpu.matmul %2, %7, %cst_13 {dimension_numbers = #tpu.dot_dimension_numbers<[1], [0], [0], [1], [0, 0, 1, 1], [], []>} : vector<2x128xbf16>, vector<128x128xbf16>, vector<2x128xf32> -> vector<2x128xf32>
    %cst_14 = arith.constant dense<0.000000e+00> : vector<2x128xf32>
    %15 = tpu.matmul %5, %6, %cst_14 {dimension_numbers = #tpu.dot_dimension_numbers<[1], [0], [0], [1], [0, 0, 1, 1], [], []>} : vector<2x128xbf16>, vector<128x128xbf16>, vector<2x128xf32> -> vector<2x128xf32>
    %16 = arith.addf %14, %15 : vector<2x128xf32>
    %c0_15 = arith.constant 0 : index
    %c0_16 = arith.constant 0 : index
    %c0_17 = arith.constant 0 : index
    %17 = vector.load %arg6[%c0_15, %c0_16, %c0_17] : memref<1x2x128xf32, #tpu.memory_space<vmem>>, vector<1x2x128xf32>
    %18 = vector.shape_cast %17 : vector<1x2x128xf32> to vector<2x128xf32>
    %19 = vector.shape_cast %16 : vector<2x128xf32> to vector<1x2x128xf32>
    tpu.vector_store %arg6[%c0_15, %c0_16, %c0_17], %19 {strides = array<i32>} : memref<1x2x128xf32, #tpu.memory_space<vmem>>, vector<1x2x128xf32>,
    return
  }
  func.func @transform_0(%arg0: i32) -> (i32, i32, i32) {
    %c0_i32 = arith.constant 0 : i32
    %c0_i32_0 = arith.constant 0 : i32
    %c0_i32_1 = arith.constant 0 : i32
    return %arg0, %c0_i32, %c0_i32_0 : i32, i32, i32
  }
  func.func @transform_1(%arg0: i32) -> (i32, i32, i32) {
    %c0_i32 = arith.constant 0 : i32
    %c0_i32_0 = arith.constant 0 : i32
    %c0_i32_1 = arith.constant 0 : i32
    return %arg0, %c0_i32, %c0_i32_0 : i32, i32, i32
  }
  func.func @transform_2(%arg0: i32) -> (i32, i32) {
    %c0_i32 = arith.constant 0 : i32
    %c0_i32_0 = arith.constant 0 : i32
    %c0_i32_1 = arith.constant 0 : i32
    return %c0_i32, %c0_i32_0 : i32, i32
  }
  func.func @transform_3(%arg0: i32) -> (i32, i32) {
    %c0_i32 = arith.constant 0 : i32
    %c0_i32_0 = arith.constant 0 : i32
    %c0_i32_1 = arith.constant 0 : i32
    return %c0_i32, %c0_i32_0 : i32, i32
  }
  func.func @transform_4(%arg0: i32) -> (i32, i32, i32) {
    %c0_i32 = arith.constant 0 : i32
    %c0_i32_0 = arith.constant 0 : i32
    %c0_i32_1 = arith.constant 0 : i32
    return %arg0, %c0_i32, %c0_i32_0 : i32, i32, i32
  }
  func.func @transform_5(%arg0: i32) -> (i32, i32, i32) {
    %c0_i32 = arith.constant 0 : i32
    %c0_i32_0 = arith.constant 0 : i32
    %c0_i32_1 = arith.constant 0 : i32
    return %arg0, %c0_i32, %c0_i32_0 : i32, i32, i32
  }
}

module attributes {stable_mosaic.version = 11 : i64} {
  func.func @_nbp_kernel(%arg0: i32, %arg1: memref<3x256xf32, #tpu.memory_space<vmem>>, %arg2: memref<1x8x256xf32, #tpu.memory_space<vmem>>, %arg3: memref<1x8x256xf32, #tpu.memory_space<vmem>>, %arg4: memref<16x72xbf16, #tpu.memory_space<vmem>>, %arg5: memref<16x1xf32, #tpu.memory_space<vmem>>, %arg6: memref<2x16x144xbf16, #tpu.memory_space<vmem>>, %arg7: memref<2x16x1xf32, #tpu.memory_space<vmem>>, %arg8: memref<2x1x16x1xf32, #tpu.memory_space<vmem>>, %arg9: memref<2x1x16x1xf32, #tpu.memory_space<vmem>>, %arg10: memref<8x16xbf16, #tpu.memory_space<vmem>>, %arg11: memref<8x1xf32, #tpu.memory_space<vmem>>, %arg12: memref<1x8x256xf32, #tpu.memory_space<vmem>>, %arg13: memref<16x290xf32, #tpu.memory_space<vmem>>) attributes {dimension_semantics = [#tpu.dimension_semantics<parallel>], iteration_bounds = array<i64: 2>, scalar_prefetch = 0 : i64, scratch_operands = 1 : i64, tpu.core_type = #tpu.core_type<tc>, window_params = [{pipeline_mode = #tpu.pipeline_mode<synchronous>, transform_indices = @transform_0, window_bounds = array<i64: 3, 256>}, {transform_indices = @transform_1, window_bounds = array<i64: 1, 8, 256>}, {transform_indices = @transform_2, window_bounds = array<i64: 1, 8, 256>}, {pipeline_mode = #tpu.pipeline_mode<synchronous>, transform_indices = @transform_3, window_bounds = array<i64: 16, 72>}, {pipeline_mode = #tpu.pipeline_mode<synchronous>, transform_indices = @transform_4, window_bounds = array<i64: 16, 1>}, {pipeline_mode = #tpu.pipeline_mode<synchronous>, transform_indices = @transform_5, window_bounds = array<i64: 2, 16, 144>}, {pipeline_mode = #tpu.pipeline_mode<synchronous>, transform_indices = @transform_6, window_bounds = array<i64: 2, 16, 1>}, {transform_indices = @transform_7, window_bounds = array<i64: 2, 1, 16, 1>}, {transform_indices = @transform_8, window_bounds = array<i64: 2, 1, 16, 1>}, {pipeline_mode = #tpu.pipeline_mode<synchronous>, transform_indices = @transform_9, window_bounds = array<i64: 8, 16>}, {pipeline_mode = #tpu.pipeline_mode<synchronous>, transform_indices = @transform_10, window_bounds = array<i64: 8, 1>}, {transform_indices = @transform_11, window_bounds = array<i64: 1, 8, 256>}]} {
    %c0 = arith.constant 0 : index
    %c0_0 = arith.constant 0 : index
    %c0_1 = arith.constant 0 : index
    %0 = vector.load %arg2[%c0, %c0_0, %c0_1] : memref<1x8x256xf32, #tpu.memory_space<vmem>>, vector<1x8x256xf32>
    %1 = vector.shape_cast %0 : vector<1x8x256xf32> to vector<8x256xf32>
    %cst = arith.constant 0.000000e+00 : f32
    %2 = vector.broadcast %cst : f32 to vector<16x290xf32>
    %c0_2 = arith.constant 0 : index
    %c0_3 = arith.constant 0 : index
    %3 = vector.load %arg13[%c0_2, %c0_3] : memref<16x290xf32, #tpu.memory_space<vmem>>, vector<16x290xf32>
    tpu.vector_store %arg13[%c0_2, %c0_3], %2 {strides = array<i32>} : memref<16x290xf32, #tpu.memory_space<vmem>>, vector<16x290xf32>,
    %c0_4 = arith.constant 0 : index
    %c0_5 = arith.constant 0 : index
    %4 = vector.load %arg4[%c0_4, %c0_5] : memref<16x72xbf16, #tpu.memory_space<vmem>>, vector<16x72xbf16>
    %c0_6 = arith.constant 0 : index
    %c17 = arith.constant 17 : index
    %5 = vector.load %arg13[%c0_6, %c17] : memref<16x290xf32, #tpu.memory_space<vmem>>, vector<8x256xf32>
    tpu.vector_store %arg13[%c0_6, %c17], %1 {strides = array<i32>} : memref<16x290xf32, #tpu.memory_space<vmem>>, vector<8x256xf32>,
    %c0_7 = arith.constant 0 : index
    %c0_8 = arith.constant 0 : index
    %6 = vector.load %arg13[%c0_7, %c0_8] : memref<16x290xf32, #tpu.memory_space<vmem>>, vector<8x256xf32>
    %c0_9 = arith.constant 0 : index
    %c0_10 = arith.constant 0 : index
    %7 = vector.load %arg1[%c0_9, %c0_10] : memref<3x256xf32, #tpu.memory_space<vmem>>, vector<1x256xf32>
    %8 = vector.broadcast %7 : vector<1x256xf32> to vector<8x256xf32>
    %9 = arith.mulf %6, %8 : vector<8x256xf32>
    %c0_11 = arith.constant 0 : index
    %c1 = arith.constant 1 : index
    %10 = vector.load %arg13[%c0_11, %c1] : memref<16x290xf32, #tpu.memory_space<vmem>>, vector<8x256xf32>
    %c0_12 = arith.constant 0 : index
    %c2 = arith.constant 2 : index
    %11 = vector.load %arg13[%c0_12, %c2] : memref<16x290xf32, #tpu.memory_space<vmem>>, vector<8x256xf32>
    %c2_13 = arith.constant 2 : index
    %c0_14 = arith.constant 0 : index
    %12 = vector.load %arg1[%c2_13, %c0_14] : memref<3x256xf32, #tpu.memory_space<vmem>>, vector<1x256xf32>
    %13 = vector.broadcast %12 : vector<1x256xf32> to vector<8x256xf32>
    %14 = arith.mulf %11, %13 : vector<8x256xf32>
    %c0_15 = arith.constant 0 : index
    %c16 = arith.constant 16 : index
    %15 = vector.load %arg13[%c0_15, %c16] : memref<16x290xf32, #tpu.memory_space<vmem>>, vector<8x256xf32>
    %c0_16 = arith.constant 0 : index
    %c0_17 = arith.constant 0 : index
    %16 = vector.load %arg1[%c0_16, %c0_17] : memref<3x256xf32, #tpu.memory_space<vmem>>, vector<1x256xf32>
    %17 = vector.broadcast %16 : vector<1x256xf32> to vector<8x256xf32>
    %18 = arith.mulf %15, %17 : vector<8x256xf32>
    %c0_18 = arith.constant 0 : index
    %c17_19 = arith.constant 17 : index
    %19 = vector.load %arg13[%c0_18, %c17_19] : memref<16x290xf32, #tpu.memory_space<vmem>>, vector<8x256xf32>
    %c0_20 = arith.constant 0 : index
    %c18 = arith.constant 18 : index
    %20 = vector.load %arg13[%c0_20, %c18] : memref<16x290xf32, #tpu.memory_space<vmem>>, vector<8x256xf32>
    %c2_21 = arith.constant 2 : index
    %c0_22 = arith.constant 0 : index
    %21 = vector.load %arg1[%c2_21, %c0_22] : memref<3x256xf32, #tpu.memory_space<vmem>>, vector<1x256xf32>
    %22 = vector.broadcast %21 : vector<1x256xf32> to vector<8x256xf32>
    %23 = arith.mulf %20, %22 : vector<8x256xf32>
    %c0_23 = arith.constant 0 : index
    %c32 = arith.constant 32 : index
    %24 = vector.load %arg13[%c0_23, %c32] : memref<16x290xf32, #tpu.memory_space<vmem>>, vector<8x256xf32>
    %c0_24 = arith.constant 0 : index
    %c0_25 = arith.constant 0 : index
    %25 = vector.load %arg1[%c0_24, %c0_25] : memref<3x256xf32, #tpu.memory_space<vmem>>, vector<1x256xf32>
    %26 = vector.broadcast %25 : vector<1x256xf32> to vector<8x256xf32>
    %27 = arith.mulf %24, %26 : vector<8x256xf32>
    %c0_26 = arith.constant 0 : index
    %c33 = arith.constant 33 : index
    %28 = vector.load %arg13[%c0_26, %c33] : memref<16x290xf32, #tpu.memory_space<vmem>>, vector<8x256xf32>
    %c0_27 = arith.constant 0 : index
    %c34 = arith.constant 34 : index
    %29 = vector.load %arg13[%c0_27, %c34] : memref<16x290xf32, #tpu.memory_space<vmem>>, vector<8x256xf32>
    %c2_28 = arith.constant 2 : index
    %c0_29 = arith.constant 0 : index
    %30 = vector.load %arg1[%c2_28, %c0_29] : memref<3x256xf32, #tpu.memory_space<vmem>>, vector<1x256xf32>
    %31 = vector.broadcast %30 : vector<1x256xf32> to vector<8x256xf32>
    %32 = arith.mulf %29, %31 : vector<8x256xf32>
    %33 = tpu.concatenate %9, %10, %14, %18, %19, %23, %27, %28, %32 in 0 : vector<8x256xf32>, vector<8x256xf32>, vector<8x256xf32>, vector<8x256xf32>, vector<8x256xf32>, vector<8x256xf32>, vector<8x256xf32>, vector<8x256xf32>, vector<8x256xf32> -> vector<72x256xf32>
    %34 = arith.truncf %33 : vector<72x256xf32> to vector<72x256xbf16>
    %cst_30 = arith.constant dense<0.000000e+00> : vector<16x256xf32>
    %35 = tpu.matmul %4, %34, %cst_30 {dimension_numbers = #tpu.dot_dimension_numbers<[1], [0], [0], [1], [0, 0, 1, 1], [], []>} : vector<16x72xbf16>, vector<72x256xbf16>, vector<16x256xf32> -> vector<16x256xf32>
    %c0_31 = arith.constant 0 : index
    %c0_32 = arith.constant 0 : index
    %36 = vector.load %arg5[%c0_31, %c0_32] : memref<16x1xf32, #tpu.memory_space<vmem>>, vector<16x1xf32>
    %37 = vector.broadcast %36 : vector<16x1xf32> to vector<16x256xf32>
    %38 = arith.addf %35, %37 : vector<16x256xf32>
    %cst_33 = arith.constant 6.250000e-02 : f32
    %39 = vector.broadcast %cst_33 : f32 to vector<1x16xf32>
    %c0_34 = arith.constant 0 : index
    %c0_35 = arith.constant 0 : index
    %c0_36 = arith.constant 0 : index
    %40 = vector.load %arg6[%c0_34, %c0_35, %c0_36] : memref<2x16x144xbf16, #tpu.memory_space<vmem>>, vector<1x16x144xbf16>
    %41 = vector.shape_cast %40 : vector<1x16x144xbf16> to vector<16x144xbf16>
    %c0_37 = arith.constant 0 : index
    %c17_38 = arith.constant 17 : index
    %42 = vector.load %arg13[%c0_37, %c17_38] : memref<16x290xf32, #tpu.memory_space<vmem>>, vector<16x256xf32>
    tpu.vector_store %arg13[%c0_37, %c17_38], %38 {strides = array<i32>} : memref<16x290xf32, #tpu.memory_space<vmem>>, vector<16x256xf32>,
    %c0_39 = arith.constant 0 : index
    %c0_40 = arith.constant 0 : index
    %43 = vector.load %arg13[%c0_39, %c0_40] : memref<16x290xf32, #tpu.memory_space<vmem>>, vector<16x256xf32>
    %c0_41 = arith.constant 0 : index
    %c0_42 = arith.constant 0 : index
    %44 = vector.load %arg1[%c0_41, %c0_42] : memref<3x256xf32, #tpu.memory_space<vmem>>, vector<1x256xf32>
    %45 = vector.broadcast %44 : vector<1x256xf32> to vector<16x256xf32>
    %46 = arith.mulf %43, %45 : vector<16x256xf32>
    %c0_43 = arith.constant 0 : index
    %c1_44 = arith.constant 1 : index
    %47 = vector.load %arg13[%c0_43, %c1_44] : memref<16x290xf32, #tpu.memory_space<vmem>>, vector<16x256xf32>
    %c0_45 = arith.constant 0 : index
    %c2_46 = arith.constant 2 : index
    %48 = vector.load %arg13[%c0_45, %c2_46] : memref<16x290xf32, #tpu.memory_space<vmem>>, vector<16x256xf32>
    %c2_47 = arith.constant 2 : index
    %c0_48 = arith.constant 0 : index
    %49 = vector.load %arg1[%c2_47, %c0_48] : memref<3x256xf32, #tpu.memory_space<vmem>>, vector<1x256xf32>
    %50 = vector.broadcast %49 : vector<1x256xf32> to vector<16x256xf32>
    %51 = arith.mulf %48, %50 : vector<16x256xf32>
    %c0_49 = arith.constant 0 : index
    %c16_50 = arith.constant 16 : index
    %52 = vector.load %arg13[%c0_49, %c16_50] : memref<16x290xf32, #tpu.memory_space<vmem>>, vector<16x256xf32>
    %c0_51 = arith.constant 0 : index
    %c0_52 = arith.constant 0 : index
    %53 = vector.load %arg1[%c0_51, %c0_52] : memref<3x256xf32, #tpu.memory_space<vmem>>, vector<1x256xf32>
    %54 = vector.broadcast %53 : vector<1x256xf32> to vector<16x256xf32>
    %55 = arith.mulf %52, %54 : vector<16x256xf32>
    %c0_53 = arith.constant 0 : index
    %c17_54 = arith.constant 17 : index
    %56 = vector.load %arg13[%c0_53, %c17_54] : memref<16x290xf32, #tpu.memory_space<vmem>>, vector<16x256xf32>
    %c0_55 = arith.constant 0 : index
    %c18_56 = arith.constant 18 : index
    %57 = vector.load %arg13[%c0_55, %c18_56] : memref<16x290xf32, #tpu.memory_space<vmem>>, vector<16x256xf32>
    %c2_57 = arith.constant 2 : index
    %c0_58 = arith.constant 0 : index
    %58 = vector.load %arg1[%c2_57, %c0_58] : memref<3x256xf32, #tpu.memory_space<vmem>>, vector<1x256xf32>
    %59 = vector.broadcast %58 : vector<1x256xf32> to vector<16x256xf32>
    %60 = arith.mulf %57, %59 : vector<16x256xf32>
    %c0_59 = arith.constant 0 : index
    %c32_60 = arith.constant 32 : index
    %61 = vector.load %arg13[%c0_59, %c32_60] : memref<16x290xf32, #tpu.memory_space<vmem>>, vector<16x256xf32>
    %c0_61 = arith.constant 0 : index
    %c0_62 = arith.constant 0 : index
    %62 = vector.load %arg1[%c0_61, %c0_62] : memref<3x256xf32, #tpu.memory_space<vmem>>, vector<1x256xf32>
    %63 = vector.broadcast %62 : vector<1x256xf32> to vector<16x256xf32>
    %64 = arith.mulf %61, %63 : vector<16x256xf32>
    %c0_63 = arith.constant 0 : index
    %c33_64 = arith.constant 33 : index
    %65 = vector.load %arg13[%c0_63, %c33_64] : memref<16x290xf32, #tpu.memory_space<vmem>>, vector<16x256xf32>
    %c0_65 = arith.constant 0 : index
    %c34_66 = arith.constant 34 : index
    %66 = vector.load %arg13[%c0_65, %c34_66] : memref<16x290xf32, #tpu.memory_space<vmem>>, vector<16x256xf32>
    %c2_67 = arith.constant 2 : index
    %c0_68 = arith.constant 0 : index
    %67 = vector.load %arg1[%c2_67, %c0_68] : memref<3x256xf32, #tpu.memory_space<vmem>>, vector<1x256xf32>
    %68 = vector.broadcast %67 : vector<1x256xf32> to vector<16x256xf32>
    %69 = arith.mulf %66, %68 : vector<16x256xf32>
    %70 = tpu.concatenate %46, %47, %51, %55, %56, %60, %64, %65, %69 in 0 : vector<16x256xf32>, vector<16x256xf32>, vector<16x256xf32>, vector<16x256xf32>, vector<16x256xf32>, vector<16x256xf32>, vector<16x256xf32>, vector<16x256xf32>, vector<16x256xf32> -> vector<144x256xf32>
    %71 = arith.truncf %70 : vector<144x256xf32> to vector<144x256xbf16>
    %cst_69 = arith.constant dense<0.000000e+00> : vector<16x256xf32>
    %72 = tpu.matmul %41, %71, %cst_69 {dimension_numbers = #tpu.dot_dimension_numbers<[1], [0], [0], [1], [0, 0, 1, 1], [], []>} : vector<16x144xbf16>, vector<144x256xbf16>, vector<16x256xf32> -> vector<16x256xf32>
    %c0_70 = arith.constant 0 : index
    %c0_71 = arith.constant 0 : index
    %c0_72 = arith.constant 0 : index
    %73 = vector.load %arg7[%c0_70, %c0_71, %c0_72] : memref<2x16x1xf32, #tpu.memory_space<vmem>>, vector<1x16x1xf32>
    %74 = vector.shape_cast %73 : vector<1x16x1xf32> to vector<16x1xf32>
    %75 = vector.broadcast %74 : vector<16x1xf32> to vector<16x256xf32>
    %76 = arith.addf %72, %75 : vector<16x256xf32>
    %cst_73 = arith.constant dense<0.000000e+00> : vector<1x256xf32>
    %77 = tpu.matmul %39, %76, %cst_73 {dimension_numbers = #tpu.dot_dimension_numbers<[1], [0], [0], [1], [0, 0, 1, 1], [], []>} : vector<1x16xf32>, vector<16x256xf32>, vector<1x256xf32> -> vector<1x256xf32>
    %78 = vector.broadcast %77 : vector<1x256xf32> to vector<16x256xf32>
    %79 = arith.subf %76, %78 : vector<16x256xf32>
    %80 = arith.mulf %79, %79 : vector<16x256xf32>
    %cst_74 = arith.constant dense<0.000000e+00> : vector<1x256xf32>
    %81 = tpu.matmul %39, %80, %cst_74 {dimension_numbers = #tpu.dot_dimension_numbers<[1], [0], [0], [1], [0, 0, 1, 1], [], []>} : vector<1x16xf32>, vector<16x256xf32>, vector<1x256xf32> -> vector<1x256xf32>
    %cst_75 = arith.constant 9.99999974E-6 : f32
    %82 = vector.broadcast %cst_75 : f32 to vector<1x256xf32>
    %83 = arith.addf %81, %82 : vector<1x256xf32>
    %84 = math.rsqrt %83 : vector<1x256xf32>
    %85 = vector.broadcast %84 : vector<1x256xf32> to vector<16x256xf32>
    %86 = arith.mulf %79, %85 : vector<16x256xf32>
    %c0_76 = arith.constant 0 : index
    %c0_77 = arith.constant 0 : index
    %c0_78 = arith.constant 0 : index
    %c0_79 = arith.constant 0 : index
    %87 = vector.load %arg8[%c0_76, %c0_77, %c0_78, %c0_79] : memref<2x1x16x1xf32, #tpu.memory_space<vmem>>, vector<1x1x16x1xf32>
    %88 = vector.shape_cast %87 : vector<1x1x16x1xf32> to vector<16x1xf32>
    %89 = vector.broadcast %88 : vector<16x1xf32> to vector<16x256xf32>
    %90 = arith.mulf %86, %89 : vector<16x256xf32>
    %c0_80 = arith.constant 0 : index
    %c0_81 = arith.constant 0 : index
    %c0_82 = arith.constant 0 : index
    %c0_83 = arith.constant 0 : index
    %91 = vector.load %arg9[%c0_80, %c0_81, %c0_82, %c0_83] : memref<2x1x16x1xf32, #tpu.memory_space<vmem>>, vector<1x1x16x1xf32>
    %92 = vector.shape_cast %91 : vector<1x1x16x1xf32> to vector<16x1xf32>
    %93 = vector.broadcast %92 : vector<16x1xf32> to vector<16x256xf32>
    %94 = arith.addf %90, %93 : vector<16x256xf32>
    %cst_84 = arith.constant 0.000000e+00 : f32
    %95 = vector.broadcast %cst_84 : f32 to vector<16x256xf32>
    %96 = arith.maximumf %94, %95 : vector<16x256xf32>
    %c1_85 = arith.constant 1 : index
    %c0_86 = arith.constant 0 : index
    %c0_87 = arith.constant 0 : index
    %97 = vector.load %arg6[%c1_85, %c0_86, %c0_87] : memref<2x16x144xbf16, #tpu.memory_space<vmem>>, vector<1x16x144xbf16>
    %98 = vector.shape_cast %97 : vector<1x16x144xbf16> to vector<16x144xbf16>
    %c0_88 = arith.constant 0 : index
    %c17_89 = arith.constant 17 : index
    %99 = vector.load %arg13[%c0_88, %c17_89] : memref<16x290xf32, #tpu.memory_space<vmem>>, vector<16x256xf32>
    tpu.vector_store %arg13[%c0_88, %c17_89], %96 {strides = array<i32>} : memref<16x290xf32, #tpu.memory_space<vmem>>, vector<16x256xf32>,
    %c0_90 = arith.constant 0 : index
    %c0_91 = arith.constant 0 : index
    %100 = vector.load %arg13[%c0_90, %c0_91] : memref<16x290xf32, #tpu.memory_space<vmem>>, vector<16x256xf32>
    %c0_92 = arith.constant 0 : index
    %c0_93 = arith.constant 0 : index
    %101 = vector.load %arg1[%c0_92, %c0_93] : memref<3x256xf32, #tpu.memory_space<vmem>>, vector<1x256xf32>
    %102 = vector.broadcast %101 : vector<1x256xf32> to vector<16x256xf32>
    %103 = arith.mulf %100, %102 : vector<16x256xf32>
    %c0_94 = arith.constant 0 : index
    %c1_95 = arith.constant 1 : index
    %104 = vector.load %arg13[%c0_94, %c1_95] : memref<16x290xf32, #tpu.memory_space<vmem>>, vector<16x256xf32>
    %c0_96 = arith.constant 0 : index
    %c2_97 = arith.constant 2 : index
    %105 = vector.load %arg13[%c0_96, %c2_97] : memref<16x290xf32, #tpu.memory_space<vmem>>, vector<16x256xf32>
    %c2_98 = arith.constant 2 : index
    %c0_99 = arith.constant 0 : index
    %106 = vector.load %arg1[%c2_98, %c0_99] : memref<3x256xf32, #tpu.memory_space<vmem>>, vector<1x256xf32>
    %107 = vector.broadcast %106 : vector<1x256xf32> to vector<16x256xf32>
    %108 = arith.mulf %105, %107 : vector<16x256xf32>
    %c0_100 = arith.constant 0 : index
    %c16_101 = arith.constant 16 : index
    %109 = vector.load %arg13[%c0_100, %c16_101] : memref<16x290xf32, #tpu.memory_space<vmem>>, vector<16x256xf32>
    %c0_102 = arith.constant 0 : index
    %c0_103 = arith.constant 0 : index
    %110 = vector.load %arg1[%c0_102, %c0_103] : memref<3x256xf32, #tpu.memory_space<vmem>>, vector<1x256xf32>
    %111 = vector.broadcast %110 : vector<1x256xf32> to vector<16x256xf32>
    %112 = arith.mulf %109, %111 : vector<16x256xf32>
    %c0_104 = arith.constant 0 : index
    %c17_105 = arith.constant 17 : index
    %113 = vector.load %arg13[%c0_104, %c17_105] : memref<16x290xf32, #tpu.memory_space<vmem>>, vector<16x256xf32>
    %c0_106 = arith.constant 0 : index
    %c18_107 = arith.constant 18 : index
    %114 = vector.load %arg13[%c0_106, %c18_107] : memref<16x290xf32, #tpu.memory_space<vmem>>, vector<16x256xf32>
    %c2_108 = arith.constant 2 : index
    %c0_109 = arith.constant 0 : index
    %115 = vector.load %arg1[%c2_108, %c0_109] : memref<3x256xf32, #tpu.memory_space<vmem>>, vector<1x256xf32>
    %116 = vector.broadcast %115 : vector<1x256xf32> to vector<16x256xf32>
    %117 = arith.mulf %114, %116 : vector<16x256xf32>
    %c0_110 = arith.constant 0 : index
    %c32_111 = arith.constant 32 : index
    %118 = vector.load %arg13[%c0_110, %c32_111] : memref<16x290xf32, #tpu.memory_space<vmem>>, vector<16x256xf32>
    %c0_112 = arith.constant 0 : index
    %c0_113 = arith.constant 0 : index
    %119 = vector.load %arg1[%c0_112, %c0_113] : memref<3x256xf32, #tpu.memory_space<vmem>>, vector<1x256xf32>
    %120 = vector.broadcast %119 : vector<1x256xf32> to vector<16x256xf32>
    %121 = arith.mulf %118, %120 : vector<16x256xf32>
    %c0_114 = arith.constant 0 : index
    %c33_115 = arith.constant 33 : index
    %122 = vector.load %arg13[%c0_114, %c33_115] : memref<16x290xf32, #tpu.memory_space<vmem>>, vector<16x256xf32>
    %c0_116 = arith.constant 0 : index
    %c34_117 = arith.constant 34 : index
    %123 = vector.load %arg13[%c0_116, %c34_117] : memref<16x290xf32, #tpu.memory_space<vmem>>, vector<16x256xf32>
    %c2_118 = arith.constant 2 : index
    %c0_119 = arith.constant 0 : index
    %124 = vector.load %arg1[%c2_118, %c0_119] : memref<3x256xf32, #tpu.memory_space<vmem>>, vector<1x256xf32>
    %125 = vector.broadcast %124 : vector<1x256xf32> to vector<16x256xf32>
    %126 = arith.mulf %123, %125 : vector<16x256xf32>
    %127 = tpu.concatenate %103, %104, %108, %112, %113, %117, %121, %122, %126 in 0 : vector<16x256xf32>, vector<16x256xf32>, vector<16x256xf32>, vector<16x256xf32>, vector<16x256xf32>, vector<16x256xf32>, vector<16x256xf32>, vector<16x256xf32>, vector<16x256xf32> -> vector<144x256xf32>
    %128 = arith.truncf %127 : vector<144x256xf32> to vector<144x256xbf16>
    %cst_120 = arith.constant dense<0.000000e+00> : vector<16x256xf32>
    %129 = tpu.matmul %98, %128, %cst_120 {dimension_numbers = #tpu.dot_dimension_numbers<[1], [0], [0], [1], [0, 0, 1, 1], [], []>} : vector<16x144xbf16>, vector<144x256xbf16>, vector<16x256xf32> -> vector<16x256xf32>
    %c1_121 = arith.constant 1 : index
    %c0_122 = arith.constant 0 : index
    %c0_123 = arith.constant 0 : index
    %130 = vector.load %arg7[%c1_121, %c0_122, %c0_123] : memref<2x16x1xf32, #tpu.memory_space<vmem>>, vector<1x16x1xf32>
    %131 = vector.shape_cast %130 : vector<1x16x1xf32> to vector<16x1xf32>
    %132 = vector.broadcast %131 : vector<16x1xf32> to vector<16x256xf32>
    %133 = arith.addf %129, %132 : vector<16x256xf32>
    %cst_124 = arith.constant dense<0.000000e+00> : vector<1x256xf32>
    %134 = tpu.matmul %39, %133, %cst_124 {dimension_numbers = #tpu.dot_dimension_numbers<[1], [0], [0], [1], [0, 0, 1, 1], [], []>} : vector<1x16xf32>, vector<16x256xf32>, vector<1x256xf32> -> vector<1x256xf32>
    %135 = vector.broadcast %134 : vector<1x256xf32> to vector<16x256xf32>
    %136 = arith.subf %133, %135 : vector<16x256xf32>
    %137 = arith.mulf %136, %136 : vector<16x256xf32>
    %cst_125 = arith.constant dense<0.000000e+00> : vector<1x256xf32>
    %138 = tpu.matmul %39, %137, %cst_125 {dimension_numbers = #tpu.dot_dimension_numbers<[1], [0], [0], [1], [0, 0, 1, 1], [], []>} : vector<1x16xf32>, vector<16x256xf32>, vector<1x256xf32> -> vector<1x256xf32>
    %cst_126 = arith.constant 9.99999974E-6 : f32
    %139 = vector.broadcast %cst_126 : f32 to vector<1x256xf32>
    %140 = arith.addf %138, %139 : vector<1x256xf32>
    %141 = math.rsqrt %140 : vector<1x256xf32>
    %142 = vector.broadcast %141 : vector<1x256xf32> to vector<16x256xf32>
    %143 = arith.mulf %136, %142 : vector<16x256xf32>
    %c1_127 = arith.constant 1 : index
    %c0_128 = arith.constant 0 : index
    %c0_129 = arith.constant 0 : index
    %c0_130 = arith.constant 0 : index
    %144 = vector.load %arg8[%c1_127, %c0_128, %c0_129, %c0_130] : memref<2x1x16x1xf32, #tpu.memory_space<vmem>>, vector<1x1x16x1xf32>
    %145 = vector.shape_cast %144 : vector<1x1x16x1xf32> to vector<16x1xf32>
    %146 = vector.broadcast %145 : vector<16x1xf32> to vector<16x256xf32>
    %147 = arith.mulf %143, %146 : vector<16x256xf32>
    %c1_131 = arith.constant 1 : index
    %c0_132 = arith.constant 0 : index
    %c0_133 = arith.constant 0 : index
    %c0_134 = arith.constant 0 : index
    %148 = vector.load %arg9[%c1_131, %c0_132, %c0_133, %c0_134] : memref<2x1x16x1xf32, #tpu.memory_space<vmem>>, vector<1x1x16x1xf32>
    %149 = vector.shape_cast %148 : vector<1x1x16x1xf32> to vector<16x1xf32>
    %150 = vector.broadcast %149 : vector<16x1xf32> to vector<16x256xf32>
    %151 = arith.addf %147, %150 : vector<16x256xf32>
    %cst_135 = arith.constant 0.000000e+00 : f32
    %152 = vector.broadcast %cst_135 : f32 to vector<16x256xf32>
    %153 = arith.maximumf %151, %152 : vector<16x256xf32>
    %c0_136 = arith.constant 0 : index
    %c0_137 = arith.constant 0 : index
    %154 = vector.load %arg10[%c0_136, %c0_137] : memref<8x16xbf16, #tpu.memory_space<vmem>>, vector<8x16xbf16>
    %155 = arith.truncf %153 : vector<16x256xf32> to vector<16x256xbf16>
    %cst_138 = arith.constant dense<0.000000e+00> : vector<8x256xf32>
    %156 = tpu.matmul %154, %155, %cst_138 {dimension_numbers = #tpu.dot_dimension_numbers<[1], [0], [0], [1], [0, 0, 1, 1], [], []>} : vector<8x16xbf16>, vector<16x256xbf16>, vector<8x256xf32> -> vector<8x256xf32>
    %c0_139 = arith.constant 0 : index
    %c0_140 = arith.constant 0 : index
    %157 = vector.load %arg11[%c0_139, %c0_140] : memref<8x1xf32, #tpu.memory_space<vmem>>, vector<8x1xf32>
    %158 = vector.broadcast %157 : vector<8x1xf32> to vector<8x256xf32>
    %159 = arith.addf %156, %158 : vector<8x256xf32>
    %160 = arith.negf %159 : vector<8x256xf32>
    %161 = math.exp %160 : vector<8x256xf32>
    %cst_141 = arith.constant 1.000000e+00 : f32
    %162 = vector.broadcast %cst_141 : f32 to vector<8x256xf32>
    %163 = arith.addf %162, %161 : vector<8x256xf32>
    %164 = arith.divf %162, %163 : vector<8x256xf32>
    %165 = arith.mulf %1, %164 : vector<8x256xf32>
    %c0_142 = arith.constant 0 : index
    %c0_143 = arith.constant 0 : index
    %c0_144 = arith.constant 0 : index
    %166 = vector.load %arg3[%c0_142, %c0_143, %c0_144] : memref<1x8x256xf32, #tpu.memory_space<vmem>>, vector<1x8x256xf32>
    %167 = vector.shape_cast %166 : vector<1x8x256xf32> to vector<8x256xf32>
    %168 = arith.mulf %165, %167 : vector<8x256xf32>
    %c0_145 = arith.constant 0 : index
    %c0_146 = arith.constant 0 : index
    %c0_147 = arith.constant 0 : index
    %169 = vector.load %arg12[%c0_145, %c0_146, %c0_147] : memref<1x8x256xf32, #tpu.memory_space<vmem>>, vector<1x8x256xf32>
    %170 = vector.shape_cast %169 : vector<1x8x256xf32> to vector<8x256xf32>
    %171 = vector.shape_cast %168 : vector<8x256xf32> to vector<1x8x256xf32>
    tpu.vector_store %arg12[%c0_145, %c0_146, %c0_147], %171 {strides = array<i32>} : memref<1x8x256xf32, #tpu.memory_space<vmem>>, vector<1x8x256xf32>,
    return
  }
  func.func @transform_0(%arg0: i32) -> (i32, i32) {
    %c0_i32 = arith.constant 0 : i32
    %c0_i32_0 = arith.constant 0 : i32
    %c0_i32_1 = arith.constant 0 : i32
    return %c0_i32, %c0_i32_0 : i32, i32
  }
  func.func @transform_1(%arg0: i32) -> (i32, i32, i32) {
    %c0_i32 = arith.constant 0 : i32
    %c0_i32_0 = arith.constant 0 : i32
    %c0_i32_1 = arith.constant 0 : i32
    return %arg0, %c0_i32, %c0_i32_0 : i32, i32, i32
  }
  func.func @transform_2(%arg0: i32) -> (i32, i32, i32) {
    %c0_i32 = arith.constant 0 : i32
    %c0_i32_0 = arith.constant 0 : i32
    %c0_i32_1 = arith.constant 0 : i32
    return %arg0, %c0_i32, %c0_i32_0 : i32, i32, i32
  }
  func.func @transform_3(%arg0: i32) -> (i32, i32) {
    %c0_i32 = arith.constant 0 : i32
    %c0_i32_0 = arith.constant 0 : i32
    %c0_i32_1 = arith.constant 0 : i32
    return %c0_i32, %c0_i32_0 : i32, i32
  }
  func.func @transform_4(%arg0: i32) -> (i32, i32) {
    %c0_i32 = arith.constant 0 : i32
    %c0_i32_0 = arith.constant 0 : i32
    %c0_i32_1 = arith.constant 0 : i32
    return %c0_i32, %c0_i32_0 : i32, i32
  }
  func.func @transform_5(%arg0: i32) -> (i32, i32, i32) {
    %c0_i32 = arith.constant 0 : i32
    %c0_i32_0 = arith.constant 0 : i32
    %c0_i32_1 = arith.constant 0 : i32
    %c0_i32_2 = arith.constant 0 : i32
    return %c0_i32, %c0_i32_0, %c0_i32_1 : i32, i32, i32
  }
  func.func @transform_6(%arg0: i32) -> (i32, i32, i32) {
    %c0_i32 = arith.constant 0 : i32
    %c0_i32_0 = arith.constant 0 : i32
    %c0_i32_1 = arith.constant 0 : i32
    %c0_i32_2 = arith.constant 0 : i32
    return %c0_i32, %c0_i32_0, %c0_i32_1 : i32, i32, i32
  }
  func.func @transform_7(%arg0: i32) -> (i32, i32, i32, i32) {
    %c0_i32 = arith.constant 0 : i32
    %c0_i32_0 = arith.constant 0 : i32
    %c0_i32_1 = arith.constant 0 : i32
    %c0_i32_2 = arith.constant 0 : i32
    return %c0_i32, %arg0, %c0_i32_0, %c0_i32_1 : i32, i32, i32, i32
  }
  func.func @transform_8(%arg0: i32) -> (i32, i32, i32, i32) {
    %c0_i32 = arith.constant 0 : i32
    %c0_i32_0 = arith.constant 0 : i32
    %c0_i32_1 = arith.constant 0 : i32
    %c0_i32_2 = arith.constant 0 : i32
    return %c0_i32, %arg0, %c0_i32_0, %c0_i32_1 : i32, i32, i32, i32
  }
  func.func @transform_9(%arg0: i32) -> (i32, i32) {
    %c0_i32 = arith.constant 0 : i32
    %c0_i32_0 = arith.constant 0 : i32
    %c0_i32_1 = arith.constant 0 : i32
    return %c0_i32, %c0_i32_0 : i32, i32
  }
  func.func @transform_10(%arg0: i32) -> (i32, i32) {
    %c0_i32 = arith.constant 0 : i32
    %c0_i32_0 = arith.constant 0 : i32
    %c0_i32_1 = arith.constant 0 : i32
    return %c0_i32, %c0_i32_0 : i32, i32
  }
  func.func @transform_11(%arg0: i32) -> (i32, i32, i32) {
    %c0_i32 = arith.constant 0 : i32
    %c0_i32_0 = arith.constant 0 : i32
    %c0_i32_1 = arith.constant 0 : i32
    return %arg0, %c0_i32, %c0_i32_0 : i32, i32, i32
  }
}

</mosaic_0001>

<llo_original>
// kernel: attfno_forward.3
$region0: #{attfno_forward.3}
  #allocation0 [shape = 'u32[]', space=smem, size = 0x4, offset = 0x4, fixed_abs, tag = 'smem constant byte address 0x4 - core index']
  #allocation1 [shape = 'u32[144,128]{1,0:T(1,128)}', space=vmem, size = 0x12000, scoped, tag = 'internal scratch']
  %s0 = inlined_call_operand.vmem [shape: f32[2,8,64], index: 0, kind: input, shape index: {}]
  %s1 = inlined_call_operand.vmem [shape: f32[2,8,64], index: 1, kind: input, shape index: {}]
  %s2 = inlined_call_operand.vmem [shape: bf16[8,8], index: 2, kind: input, shape index: {}]
  %s3 = inlined_call_operand.vmem [shape: bf16[8,8], index: 3, kind: input, shape index: {}]
  %s4 = inlined_call_operand.vmem [shape: bf16[8,8], index: 4, kind: input, shape index: {}]
  %s5 = inlined_call_operand.vmem [shape: bf16[8,8], index: 5, kind: input, shape index: {}]
  %s6 = inlined_call_operand.vmem [shape: f32[8,1], index: 6, kind: input, shape index: {}]
  %s7 = inlined_call_operand.vmem [shape: f32[2,8,64], index: 7, kind: output, shape index: {0}]
  %s8 = inlined_call_operand.vmem [shape: f32[2,8,64], index: 8, kind: output, shape index: {1}]
  %s9 = inlined_call_operand.vmem [shape: f32[2,8,64], index: 9, kind: output, shape index: {2}]
  %10 = xla_tuple %s7, %s8, %s9
  %s11 = sld [smem:[#allocation0]]
  $region77: #{attfno_forward.3} parent=0
    _
  %s13 = ssub.s32 1, %s11
  %s14 = scalar_select 0, %s13, %s11
  loop: start=0, step=1, limit=4
  $region2: #{attfno_forward.3} parent=0 // loop_pre_header
    _
  $region3: #{attfno_forward.3} parent=0 // loop_header
    %s16 = sphi 0, %s20
    %p17 = scmp.ge.s32.totalorder %s16, 4
    %s26 = sphi 0, %s28
    %s29 = sphi 0, %s26
    %s30 = sphi 0, %s29
    %s46 = sphi 0, %s30
    %s52 = sphi 0, %s54
    %s55 = sphi 0, %s52
    %s56 = sphi 0, %s55
    %s72 = sphi 0, %s56
    %s76 = sphi 0, %s76
    %s78 = sphi 0, %s76
    %s79 = sphi 0, %s78
    %s93 = sphi 0, %s79
    %s97 = sphi 0, %s97
    %s99 = sphi 0, %s97
    %s100 = sphi 0, %s99
    %s114 = sphi 0, %s100
    %s118 = sphi 0, %s118
    %s120 = sphi 0, %s118
    %s121 = sphi 0, %s120
    %s135 = sphi 0, %s121
    %s139 = sphi 0, %s139
    %s141 = sphi 0, %s139
    %s142 = sphi 0, %s141
    %s156 = sphi 0, %s142
    %s160 = sphi 0, %s160
    %s162 = sphi 0, %s160
    %s163 = sphi 0, %s162
    %s177 = sphi 0, %s163
    %s183 = sphi 0, %s185
    %s186 = sphi 0, %s183
    %s187 = sphi 0, %s186
    %s203 = sphi 0, %s187
    %s209 = sphi 0, %s211
    %s212 = sphi 0, %s209
    %s213 = sphi 0, %s212
    %s229 = sphi 0, %s213
    %s235 = sphi 0, %s237
    %s238 = sphi 0, %s235
    %s239 = sphi 0, %s238
    %s255 = sphi 0, %s239
  $region4: #{attfno_forward.3} parent=0 // loop_header_branch
    %19 = sbr.rel (%p17) target = $region8
  $region5: #{attfno_forward.3} parent=0 // loop_body
    %s21 = ssub.s32 %s16, 1
    %s22 = ssub.s32 %s16, 2
    %s23 = sadd.s32 %s16, 1
    %s24 = ssub.s32 %s16, %s23
    %p25 = scmp.eq.s32.totalorder %s24, 0
    %s27 = sadd.s32 %s26, 1
    %s28 = scalar_select %p25, %s26, %s27
    %p31 = pneg %p25
    %p32 = scmp.eq.s32.totalorder %s16, 1
    %p33 = por %p31, %p32
    %p34 = scmp.ne.s32.totalorder %s26, %s29
    %p35 = scmp.eq.s32.totalorder %s16, 0
    %p36 = por %p34, %p35
    %p37 = scmp.ne.s32.totalorder %s26, %s29
    %p38 = scmp.eq.s32.totalorder %s21, 1
    %p39 = por %p37, %p38
    %p40 = scmp.ne.s32.totalorder %s29, %s30
    %p41 = scmp.eq.s32.totalorder %s21, 0
    %p42 = por %p40, %p41
    %p43 = scmp.ne.s32.totalorder %s29, %s30
    %p44 = scmp.eq.s32.totalorder %s22, 1
    %p45 = por %p43, %p44
    %p47 = scmp.ne.s32.totalorder %s30, %s46
    %p48 = scmp.eq.s32.totalorder %s22, 0
    %p49 = por %p47, %p48
    %s50 = ssub.s32 %s16, %s23
    %p51 = scmp.eq.s32.totalorder %s50, 0
    %s53 = sadd.s32 %s52, 1
    %s54 = scalar_select %p51, %s52, %s53
    %p57 = pneg %p51
    %p58 = scmp.eq.s32.totalorder %s16, 1
    %p59 = por %p57, %p58
    %p60 = scmp.ne.s32.totalorder %s52, %s55
    %p61 = scmp.eq.s32.totalorder %s16, 0
    %p62 = por %p60, %p61
    %p63 = scmp.ne.s32.totalorder %s52, %s55
    %p64 = scmp.eq.s32.totalorder %s21, 1
    %p65 = por %p63, %p64
    %p66 = scmp.ne.s32.totalorder %s55, %s56
    %p67 = scmp.eq.s32.totalorder %s21, 0
    %p68 = por %p66, %p67
    %p69 = scmp.ne.s32.totalorder %s55, %s56
    %p70 = scmp.eq.s32.totalorder %s22, 1
    %p71 = por %p69, %p70
    %p73 = scmp.ne.s32.totalorder %s56, %s72
    %p74 = scmp.eq.s32.totalorder %s22, 0
    %p75 = por %p73, %p74
    %s77 = sadd.s32 %s76, 1
    %p80 = scmp.eq.s32.totalorder %s16, 1
    %p81 = scmp.ne.s32.totalorder %s76, %s78
    %p82 = scmp.eq.s32.totalorder %s16, 0
    %p83 = por %p81, %p82
    %p84 = scmp.ne.s32.totalorder %s76, %s78
    %p85 = scmp.eq.s32.totalorder %s21, 1
    %p86 = por %p84, %p85
    %p87 = scmp.ne.s32.totalorder %s78, %s79
    %p88 = scmp.eq.s32.totalorder %s21, 0
    %p89 = por %p87, %p88
    %p90 = scmp.ne.s32.totalorder %s78, %s79
    %p91 = scmp.eq.s32.totalorder %s22, 1
    %p92 = por %p90, %p91
    %p94 = scmp.ne.s32.totalorder %s79, %s93
    %p95 = scmp.eq.s32.totalorder %s22, 0
    %p96 = por %p94, %p95
    %s98 = sadd.s32 %s97, 1
    %p101 = scmp.eq.s32.totalorder %s16, 1
    %p102 = scmp.ne.s32.totalorder %s97, %s99
    %p103 = scmp.eq.s32.totalorder %s16, 0
    %p104 = por %p102, %p103
    %p105 = scmp.ne.s32.totalorder %s97, %s99
    %p106 = scmp.eq.s32.totalorder %s21, 1
    %p107 = por %p105, %p106
    %p108 = scmp.ne.s32.totalorder %s99, %s100
    %p109 = scmp.eq.s32.totalorder %s21, 0
    %p110 = por %p108, %p109
    %p111 = scmp.ne.s32.totalorder %s99, %s100
    %p112 = scmp.eq.s32.totalorder %s22, 1
    %p113 = por %p111, %p112
    %p115 = scmp.ne.s32.totalorder %s100, %s114
    %p116 = scmp.eq.s32.totalorder %s22, 0
    %p117 = por %p115, %p116
    %s119 = sadd.s32 %s118, 1
    %p122 = scmp.eq.s32.totalorder %s16, 1
    %p123 = scmp.ne.s32.totalorder %s118, %s120
    %p124 = scmp.eq.s32.totalorder %s16, 0
    %p125 = por %p123, %p124
    %p126 = scmp.ne.s32.totalorder %s118, %s120
    %p127 = scmp.eq.s32.totalorder %s21, 1
    %p128 = por %p126, %p127
    %p129 = scmp.ne.s32.totalorder %s120, %s121
    %p130 = scmp.eq.s32.totalorder %s21, 0
    %p131 = por %p129, %p130
    %p132 = scmp.ne.s32.totalorder %s120, %s121
    %p133 = scmp.eq.s32.totalorder %s22, 1
    %p134 = por %p132, %p133
    %p136 = scmp.ne.s32.totalorder %s121, %s135
    %p137 = scmp.eq.s32.totalorder %s22, 0
    %p138 = por %p136, %p137
    %s140 = sadd.s32 %s139, 1
    %p143 = scmp.eq.s32.totalorder %s16, 1
    %p144 = scmp.ne.s32.totalorder %s139, %s141
    %p145 = scmp.eq.s32.totalorder %s16, 0
    %p146 = por %p144, %p145
    %p147 = scmp.ne.s32.totalorder %s139, %s141
    %p148 = scmp.eq.s32.totalorder %s21, 1
    %p149 = por %p147, %p148
    %p150 = scmp.ne.s32.totalorder %s141, %s142
    %p151 = scmp.eq.s32.totalorder %s21, 0
    %p152 = por %p150, %p151
    %p153 = scmp.ne.s32.totalorder %s141, %s142
    %p154 = scmp.eq.s32.totalorder %s22, 1
    %p155 = por %p153, %p154
    %p157 = scmp.ne.s32.totalorder %s142, %s156
    %p158 = scmp.eq.s32.totalorder %s22, 0
    %p159 = por %p157, %p158
    %s161 = sadd.s32 %s160, 1
    %p164 = scmp.eq.s32.totalorder %s16, 1
    %p165 = scmp.ne.s32.totalorder %s160, %s162
    %p166 = scmp.eq.s32.totalorder %s16, 0
    %p167 = por %p165, %p166
    %p168 = scmp.ne.s32.totalorder %s160, %s162
    %p169 = scmp.eq.s32.totalorder %s21, 1
    %p170 = por %p168, %p169
    %p171 = scmp.ne.s32.totalorder %s162, %s163
    %p172 = scmp.eq.s32.totalorder %s21, 0
    %p173 = por %p171, %p172
    %p174 = scmp.ne.s32.totalorder %s162, %s163
    %p175 = scmp.eq.s32.totalorder %s22, 1
    %p176 = por %p174, %p175
    %p178 = scmp.ne.s32.totalorder %s163, %s177
    %p179 = scmp.eq.s32.totalorder %s22, 0
    %p180 = por %p178, %p179
    %s181 = ssub.s32 %s16, %s23
    %p182 = scmp.eq.s32.totalorder %s181, 0
    %s184 = sadd.s32 %s183, 1
    %s185 = scalar_select %p182, %s183, %s184
    %p188 = pneg %p182
    %p189 = scmp.eq.s32.totalorder %s16, 1
    %p190 = por %p188, %p189
    %p191 = scmp.ne.s32.totalorder %s183, %s186
    %p192 = scmp.eq.s32.totalorder %s16, 0
    %p193 = por %p191, %p192
    %p194 = scmp.ne.s32.totalorder %s183, %s186
    %p195 = scmp.eq.s32.totalorder %s21, 1
    %p196 = por %p194, %p195
    %p197 = scmp.ne.s32.totalorder %s186, %s187
    %p198 = scmp.eq.s32.totalorder %s21, 0
    %p199 = por %p197, %p198
    %p200 = scmp.ne.s32.totalorder %s186, %s187
    %p201 = scmp.eq.s32.totalorder %s22, 1
    %p202 = por %p200, %p201
    %p204 = scmp.ne.s32.totalorder %s187, %s203
    %p205 = scmp.eq.s32.totalorder %s22, 0
    %p206 = por %p204, %p205
    %s207 = ssub.s32 %s16, %s23
    %p208 = scmp.eq.s32.totalorder %s207, 0
    %s210 = sadd.s32 %s209, 1
    %s211 = scalar_select %p208, %s209, %s210
    %p214 = pneg %p208
    %p215 = scmp.eq.s32.totalorder %s16, 1
    %p216 = por %p214, %p215
    %p217 = scmp.ne.s32.totalorder %s209, %s212
    %p218 = scmp.eq.s32.totalorder %s16, 0
    %p219 = por %p217, %p218
    %p220 = scmp.ne.s32.totalorder %s209, %s212
    %p221 = scmp.eq.s32.totalorder %s21, 1
    %p222 = por %p220, %p221
    %p223 = scmp.ne.s32.totalorder %s212, %s213
    %p224 = scmp.eq.s32.totalorder %s21, 0
    %p225 = por %p223, %p224
    %p226 = scmp.ne.s32.totalorder %s212, %s213
    %p227 = scmp.eq.s32.totalorder %s22, 1
    %p228 = por %p226, %p227
    %p230 = scmp.ne.s32.totalorder %s213, %s229
    %p231 = scmp.eq.s32.totalorder %s22, 0
    %p232 = por %p230, %p231
    %s233 = ssub.s32 %s16, %s23
    %p234 = scmp.eq.s32.totalorder %s233, 0
    %s236 = sadd.s32 %s235, 1
    %s237 = scalar_select %p234, %s235, %s236
    %p240 = pneg %p234
    %p241 = scmp.eq.s32.totalorder %s16, 1
    %p242 = por %p240, %p241
    %p243 = scmp.ne.s32.totalorder %s235, %s238
    %p244 = scmp.eq.s32.totalorder %s16, 0
    %p245 = por %p243, %p244
    %p246 = scmp.ne.s32.totalorder %s235, %s238
    %p247 = scmp.eq.s32.totalorder %s21, 1
    %p248 = por %p246, %p247
    %p249 = scmp.ne.s32.totalorder %s238, %s239
    %p250 = scmp.eq.s32.totalorder %s21, 0
    %p251 = por %p249, %p250
    %p252 = scmp.ne.s32.totalorder %s238, %s239
    %p253 = scmp.eq.s32.totalorder %s22, 1
    %p254 = por %p252, %p253
    %p256 = scmp.ne.s32.totalorder %s239, %s255
    %p257 = scmp.eq.s32.totalorder %s22, 0
    %p258 = por %p256, %p257
    %p259 = scmp.le.s32.totalorder 1, %s16
    %p260 = scmp.lt.s32.totalorder %s16, 3
    %p261 = pnand %p259, %p260
    %p262 = pneg %p261
    // Predicated region
    $region9: #{attfno_forward.3} parent=5 // pred_check
      _
    $region10: #{attfno_forward.3} parent=5 // pred_check_branch
      %264 = sbr.rel (%p261) target = $region12
    $region11: #{attfno_forward.3} parent=5 // pred_region
      %s265 = ssub.s32 %s16, 1
      // Predicated region
      $region13: #{attfno_forward.3} parent=11 // pred_check
        %p266 = pneg %p89
      $region14: #{attfno_forward.3} parent=11 // pred_check_branch
        %268 = sbr.rel (%p266) target = $region16
      $region15: #{attfno_forward.3} parent=11 // pred_region
        _
      $region16: #{attfno_forward.3} parent=11 // pred_fallthru
        _
      // Predicated region
      $region17: #{attfno_forward.3} parent=11 // pred_check
        %p269 = pneg %p110
      $region18: #{attfno_forward.3} parent=11 // pred_check_branch
        %271 = sbr.rel (%p269) target = $region20
      $region19: #{attfno_forward.3} parent=11 // pred_region
        _
      $region20: #{attfno_forward.3} parent=11 // pred_fallthru
        _
      // Predicated region
      $region21: #{attfno_forward.3} parent=11 // pred_check
        %p272 = pneg %p131
      $region22: #{attfno_forward.3} parent=11 // pred_check_branch
        %274 = sbr.rel (%p272) target = $region24
      $region23: #{attfno_forward.3} parent=11 // pred_region
        _
      $region24: #{attfno_forward.3} parent=11 // pred_fallthru
        _
      // Predicated region
      $region25: #{attfno_forward.3} parent=11 // pred_check
        %p275 = pneg %p152
      $region26: #{attfno_forward.3} parent=11 // pred_check_branch
        %277 = sbr.rel (%p275) target = $region28
      $region27: #{attfno_forward.3} parent=11 // pred_region
        _
      $region28: #{attfno_forward.3} parent=11 // pred_fallthru
        _
      // Predicated region
      $region29: #{attfno_forward.3} parent=11 // pred_check
        %p278 = pneg %p173
      $region30: #{attfno_forward.3} parent=11 // pred_check_branch
        %280 = sbr.rel (%p278) target = $region32
      $region31: #{attfno_forward.3} parent=11 // pred_region
        _
      $region32: #{attfno_forward.3} parent=11 // pred_fallthru
        _
    $region12: #{attfno_forward.3} parent=5 // pred_fallthru
      _
    %p281 = scmp.lt.s32.totalorder %s16, 2
    // Predicated region
    $region33: #{attfno_forward.3} parent=5 // pred_check
      %p282 = pneg %p281
    $region34: #{attfno_forward.3} parent=5 // pred_check_branch
      %284 = sbr.rel (%p282) target = $region36
    $region35: #{attfno_forward.3} parent=5 // pred_region
      // Predicated region
      $region37: #{attfno_forward.3} parent=35 // pred_check
        %p285 = pneg %p36
      $region38: #{attfno_forward.3} parent=35 // pred_check_branch
        %287 = sbr.rel (%p285) target = $region40
      $region39: #{attfno_forward.3} parent=35 // pred_region
        %p288 = scmp.lt.s32.totalorder %s16, 1
        %s289 = scalar_select %p288, %s16, 1
        %s290 = smul.addr %s289, 8
        %s291 = scalar_lea.vmem %s0, %s290
      $region40: #{attfno_forward.3} parent=35 // pred_fallthru
        _
      // Predicated region
      $region41: #{attfno_forward.3} parent=35 // pred_check
        %p292 = pneg %p62
      $region42: #{attfno_forward.3} parent=35 // pred_check_branch
        %294 = sbr.rel (%p292) target = $region44
      $region43: #{attfno_forward.3} parent=35 // pred_region
        %p295 = scmp.lt.s32.totalorder %s16, 1
        %s296 = scalar_select %p295, %s16, 1
        %s297 = smul.addr %s296, 8
        %s298 = scalar_lea.vmem %s1, %s297
      $region44: #{attfno_forward.3} parent=35 // pred_fallthru
        _
    $region36: #{attfno_forward.3} parent=5 // pred_fallthru
      _
    %p299 = scmp.le.s32.totalorder 1, %s16
    %p300 = scmp.lt.s32.totalorder %s16, 3
    %p301 = pnand %p299, %p300
    %p302 = pneg %p301
    // Predicated region
    $region45: #{attfno_forward.3} parent=5 // pred_check
      _
    $region46: #{attfno_forward.3} parent=5 // pred_check_branch
      %304 = sbr.rel (%p301) target = $region48
    $region47: #{attfno_forward.3} parent=5 // pred_region
      %s305 = ssub.s32 %s16, 1
      %p306 = scmp.lt.s32.totalorder %s21, 1
      %s307 = scalar_select %p306, %s21, 1
      %s308 = smul.addr %s307, 8
      %s309 = scalar_lea.vmem %s0, %s308
      %p310 = pneg %p42
      %p311 = pneg %p39
      %p312 = scmp.lt.s32.totalorder %s21, 1
      %s313 = scalar_select %p312, %s21, 1
      %s314 = smul.addr %s313, 8
      %s315 = scalar_lea.vmem %s1, %s314
      %p316 = pneg %p68
      %p317 = pneg %p65
      %p318 = pneg %p89
      %p319 = pneg %p86
      %p320 = pneg %p110
      %p321 = pneg %p107
      %p322 = pneg %p131
      %p323 = pneg %p128
      %p324 = pneg %p152
      %p325 = pneg %p149
      %p326 = pneg %p173
      %p327 = pneg %p170
      %p328 = pneg %p199
      %p329 = pneg %p196
      %p330 = scmp.lt.s32.totalorder %s21, 1
      %s331 = scalar_select %p330, %s21, 1
      %s332 = smul.addr %s331, 8
      %s333 = scalar_lea.vmem %s7, %s332
      %p334 = pneg %p225
      %p335 = pneg %p222
      %p336 = scmp.lt.s32.totalorder %s21, 1
      %s337 = scalar_select %p336, %s21, 1
      %s338 = smul.addr %s337, 8
      %s339 = scalar_lea.vmem %s8, %s338
      %p340 = pneg %p251
      %p341 = pneg %p248
      %p342 = scmp.lt.s32.totalorder %s21, 1
      %s343 = scalar_select %p342, %s21, 1
      %s344 = smul.addr %s343, 8
      %s345 = scalar_lea.vmem %s9, %s344
      %p346 = scmp.lt.s32.totalorder %s21, 1
      %s347 = scalar_select %p346, %s21, 1
      %s348 = smul.addr %s347, 8
      %s349 = scalar_lea.vmem %s0, %s348
      %p350 = scmp.lt.s32.totalorder %s21, 1
      %s351 = scalar_select %p350, %s21, 1
      %s352 = smul.addr %s351, 8
      %s353 = scalar_lea.vmem %s1, %s352
      %p354 = scmp.lt.s32.totalorder %s21, 1
      %s355 = scalar_select %p354, %s21, 1
      %s356 = smul.addr %s355, 8
      %s357 = scalar_lea.vmem %s7, %s356
      %p358 = scmp.lt.s32.totalorder %s21, 1
      %s359 = scalar_select %p358, %s21, 1
      %s360 = smul.addr %s359, 8
      %s361 = scalar_lea.vmem %s8, %s360
      %p362 = scmp.lt.s32.totalorder %s21, 1
      %s363 = scalar_select %p362, %s21, 1
      %s364 = smul.addr %s363, 8
      %s365 = scalar_lea.vmem %s9, %s364
      %v367 = vld [vmem:[%s349] sm:$0xff]
      %v368 = vpack.c.bf16 %v367, %v367
      %v369 = vld [vmem:[%s353] sm:$0xff]
      %v370 = vpack.c.bf16 %v369, %v369
      %v371 = vld [vmem:[%s2] sm:$0xf]
      %vm372 = vcmask 64512
      %v374 = vsel %vm372, %v371, 0
      %vm376 = vcmask 1043456
      %v378 = vsel %vm376, %v368, 0
      %380 = vmatprep.subr.bf16.mxu0 0
      %381 = vmatpush1.bf16.msra.mxu0 0
      %382 = vmatprep.subr.bf16.mxu0 0
      %383 = vmatpush1.bf16.msra.mxu0 0
      %384 = vmatprep.subr.bf16.mxu0 0
      %385 = vmatpush1.bf16.msra.mxu0 0
      %386 = vmatprep.subr.bf16.mxu0 0
      %387 = vmatpush1.bf16.msra.mxu0 0
      %388 = vmatprep.subr.bf16.mxu0 0
      %389 = vmatpush1.bf16.msra.mxu0 0
      %390 = vmatprep.subr.bf16.mxu0 0
      %391 = vmatpush1.bf16.msra.mxu0 0
      %392 = vmatprep.subr.bf16.mxu0 0
      %393 = vmatpush1.bf16.msra.mxu0 0
      %394 = vmatprep.subr.bf16.mxu0 0
      %395 = vmatpush1.bf16.msra.mxu0 %v378
      %396 = vmatprep.subr.bf16.mxu0 0
      %397 = vmatpush2.bf16.msra.mxu0 0
      %398 = vmatprep.subr.bf16.mxu0 0
      %399 = vmatpush2.bf16.msra.mxu0 0
      %400 = vmatprep.subr.bf16.mxu0 0
      %401 = vmatpush2.bf16.msra.mxu0 0
      %402 = vmatprep.subr.bf16.mxu0 0
      %403 = vmatpush2.bf16.msra.mxu0 0
      %404 = vmatprep.subr.bf16.mxu0 0
      %405 = vmatpush2.bf16.msra.mxu0 0
      %406 = vmatprep.subr.bf16.mxu0 0
      %407 = vmatpush2.bf16.msra.mxu0 0
      %408 = vmatprep.subr.bf16.mxu0 0
      %409 = vmatpush2.bf16.msra.mxu0 0
      %410 = vmatprep.subr.bf16.mxu0 0
      %411 = vmatpush2.bf16.msra.mxu0 0
      %412 = vmatprep.mubr.bf16.mxu0 0
      %413 = vmatmul.mubr.bf16.gmra.mxu0 %v374
      %v414 = vpop.f32.mrf.mxu0
      %v415 = vadd.f32 0.0, %v414
      %v416 = vpop.f32.mrf.mxu0
      %v417 = vpop.f32.mrf.mxu0
      %v418 = vpop.f32.mrf.mxu0
      %419 = vdwg.mxu0
      %v420 = vld [vmem:[%s3] sm:$0xf]
      %v422 = vsel %vm372, %v420, 0
      %v425 = vsel %vm376, %v370, 0
      %427 = vmatprep.subr.bf16.mxu0 0
      %428 = vmatpush1.bf16.msra.mxu0 0
      %429 = vmatprep.subr.bf16.mxu0 0
      %430 = vmatpush1.bf16.msra.mxu0 0
      %431 = vmatprep.subr.bf16.mxu0 0
      %432 = vmatpush1.bf16.msra.mxu0 0
      %433 = vmatprep.subr.bf16.mxu0 0
      %434 = vmatpush1.bf16.msra.mxu0 0
      %435 = vmatprep.subr.bf16.mxu0 0
      %436 = vmatpush1.bf16.msra.mxu0 0
      %437 = vmatprep.subr.bf16.mxu0 0
      %438 = vmatpush1.bf16.msra.mxu0 0
      %439 = vmatprep.subr.bf16.mxu0 0
      %440 = vmatpush1.bf16.msra.mxu0 0
      %441 = vmatprep.subr.bf16.mxu0 0
      %442 = vmatpush1.bf16.msra.mxu0 %v425
      %443 = vmatprep.subr.bf16.mxu0 0
      %444 = vmatpush2.bf16.msra.mxu0 0
      %445 = vmatprep.subr.bf16.mxu0 0
      %446 = vmatpush2.bf16.msra.mxu0 0
      %447 = vmatprep.subr.bf16.mxu0 0
      %448 = vmatpush2.bf16.msra.mxu0 0
      %449 = vmatprep.subr.bf16.mxu0 0
      %450 = vmatpush2.bf16.msra.mxu0 0
      %451 = vmatprep.subr.bf16.mxu0 0
      %452 = vmatpush2.bf16.msra.mxu0 0
      %453 = vmatprep.subr.bf16.mxu0 0
      %454 = vmatpush2.bf16.msra.mxu0 0
      %455 = vmatprep.subr.bf16.mxu0 0
      %456 = vmatpush2.bf16.msra.mxu0 0
      %457 = vmatprep.subr.bf16.mxu0 0
      %458 = vmatpush2.bf16.msra.mxu0 0
      %459 = vmatprep.mubr.bf16.mxu0 0
      %460 = vmatmul.mubr.bf16.gmra.mxu0 %v422
      %v461 = vpop.f32.mrf.mxu0
      %v462 = vadd.f32 0.0, %v461
      %v463 = vpop.f32.mrf.mxu0
      %v464 = vpop.f32.mrf.mxu0
      %v465 = vpop.f32.mrf.mxu0
      %466 = vdwg.mxu0
      %v467 = vld [vmem:[%s4] sm:$0xf]
      %v469 = vsel %vm372, %v467, 0
      %471 = vmatprep.subr.bf16.mxu0 0
      %472 = vmatpush1.bf16.msra.mxu0 0
      %473 = vmatprep.subr.bf16.mxu0 0
      %474 = vmatpush1.bf16.msra.mxu0 0
      %475 = vmatprep.subr.bf16.mxu0 0
      %476 = vmatpush1.bf16.msra.mxu0 0
      %477 = vmatprep.subr.bf16.mxu0 0
      %478 = vmatpush1.bf16.msra.mxu0 0
      %479 = vmatprep.subr.bf16.mxu0 0
      %480 = vmatpush1.bf16.msra.mxu0 0
      %481 = vmatprep.subr.bf16.mxu0 0
      %482 = vmatpush1.bf16.msra.mxu0 0
      %483 = vmatprep.subr.bf16.mxu0 0
      %484 = vmatpush1.bf16.msra.mxu0 0
      %485 = vmatprep.subr.bf16.mxu0 0
      %486 = vmatpush1.bf16.msra.mxu0 %v425
      %487 = vmatprep.subr.bf16.mxu0 0
      %488 = vmatpush2.bf16.msra.mxu0 0
      %489 = vmatprep.subr.bf16.mxu0 0
      %490 = vmatpush2.bf16.msra.mxu0 0
      %491 = vmatprep.subr.bf16.mxu0 0
      %492 = vmatpush2.bf16.msra.mxu0 0
      %493 = vmatprep.subr.bf16.mxu0 0
      %494 = vmatpush2.bf16.msra.mxu0 0
      %495 = vmatprep.subr.bf16.mxu0 0
      %496 = vmatpush2.bf16.msra.mxu0 0
      %497 = vmatprep.subr.bf16.mxu0 0
      %498 = vmatpush2.bf16.msra.mxu0 0
      %499 = vmatprep.subr.bf16.mxu0 0
      %500 = vmatpush2.bf16.msra.mxu0 0
      %501 = vmatprep.subr.bf16.mxu0 0
      %502 = vmatpush2.bf16.msra.mxu0 0
      %503 = vmatprep.mubr.bf16.mxu0 0
      %504 = vmatmul.mubr.bf16.gmra.mxu0 %v469
      %v505 = vpop.f32.mrf.mxu0
      %v506 = vadd.f32 0.0, %v505
      %v507 = vpop.f32.mrf.mxu0
      %v508 = vpop.f32.mrf.mxu0
      %v509 = vpop.f32.mrf.mxu0
      %510 = vdwg.mxu0
      %v511 = vpack.c.bf16 %v415, %v415
      %v512 = vpack.c.bf16 %v462, %v462
      %513 = vxpose.xlu0.c.b16.start [1/8] %v511, 128
      %514 = vxpose.xlu0.c.b16.cont [2/8] 0, 128
      %515 = vxpose.xlu0.c.b16.cont [3/8] 0, 128
      %516 = vxpose.xlu0.c.b16.cont [4/8] 0, 128
      %517 = vxpose.xlu0.c.b16.cont [5/8] 0, 128
      %518 = vxpose.xlu0.c.b16.cont [6/8] 0, 128
      %519 = vxpose.xlu0.c.b16.cont [7/8] 0, 128
      %520 = vxpose.xlu0.c.b16.end [8/8] 0, 128
      %v521 = vpop.trf.xlu0
      %v522 = vpop.trf.xlu0
      %v523 = vpop.trf.xlu0
      %v524 = vpop.trf.xlu0
      %v525 = vpop.trf.xlu0
      %v526 = vpop.trf.xlu0
      %v527 = vpop.trf.xlu0
      %v528 = vpop.trf.xlu0
      %v530 = vsel %vm372, %v521, 0
      %v533 = vsel %vm372, %v522, 0
      %v536 = vsel %vm372, %v523, 0
      %v539 = vsel %vm372, %v524, 0
      %v542 = vsel %vm376, %v512, 0
      %544 = vmatprep.subr.bf16.mxu0 0
      %545 = vmatpush1.bf16.msra.mxu0 0
      %546 = vmatprep.subr.bf16.mxu0 0
      %547 = vmatpush1.bf16.msra.mxu0 0
      %548 = vmatprep.subr.bf16.mxu0 0
      %549 = vmatpush1.bf16.msra.mxu0 0
      %550 = vmatprep.subr.bf16.mxu0 0
      %551 = vmatpush1.bf16.msra.mxu0 0
      %552 = vmatprep.subr.bf16.mxu0 0
      %553 = vmatpush1.bf16.msra.mxu0 0
      %554 = vmatprep.subr.bf16.mxu0 0
      %555 = vmatpush1.bf16.msra.mxu0 0
      %556 = vmatprep.subr.bf16.mxu0 0
      %557 = vmatpush1.bf16.msra.mxu0 0
      %558 = vmatprep.subr.bf16.mxu0 0
      %559 = vmatpush1.bf16.msra.mxu0 %v542
      %560 = vmatprep.subr.bf16.mxu0 0
      %561 = vmatpush2.bf16.msra.mxu0 0
      %562 = vmatprep.subr.bf16.mxu0 0
      %563 = vmatpush2.bf16.msra.mxu0 0
      %564 = vmatprep.subr.bf16.mxu0 0
      %565 = vmatpush2.bf16.msra.mxu0 0
      %566 = vmatprep.subr.bf16.mxu0 0
      %567 = vmatpush2.bf16.msra.mxu0 0
      %568 = vmatprep.subr.bf16.mxu0 0
      %569 = vmatpush2.bf16.msra.mxu0 0
      %570 = vmatprep.subr.bf16.mxu0 0
      %571 = vmatpush2.bf16.msra.mxu0 0
      %572 = vmatprep.subr.bf16.mxu0 0
      %573 = vmatpush2.bf16.msra.mxu0 0
      %574 = vmatprep.subr.bf16.mxu0 0
      %575 = vmatpush2.bf16.msra.mxu0 0
      %576 = vmatprep.mubr.bf16.mxu0 0
      %577 = vmatmul.mubr.bf16.gmra.mxu0 %v530
      %v578 = vpop.f32.mrf.mxu0
      %v579 = vadd.f32 0.0, %v578
      %v580 = vpop.f32.mrf.mxu0
      %v581 = vpop.f32.mrf.mxu0
      %v582 = vadd.f32 0.0, %v581
      %v583 = vpop.f32.mrf.mxu0
      %584 = vmatprep.mubr.bf16.mxu0 0
      %585 = vmatmul.mubr.bf16.gmra.mxu0 %v533
      %v586 = vpop.f32.mrf.mxu0
      %v587 = vadd.f32 0.0, %v586
      %v588 = vpop.f32.mrf.mxu0
      %v589 = vpop.f32.mrf.mxu0
      %v590 = vadd.f32 0.0, %v589
      %v591 = vpop.f32.mrf.mxu0
      %592 = vmatprep.mubr.bf16.mxu0 0
      %593 = vmatmul.mubr.bf16.gmra.mxu0 %v536
      %v594 = vpop.f32.mrf.mxu0
      %v595 = vadd.f32 0.0, %v594
      %v596 = vpop.f32.mrf.mxu0
      %v597 = vpop.f32.mrf.mxu0
      %v598 = vadd.f32 0.0, %v597
      %v599 = vpop.f32.mrf.mxu0
      %600 = vmatprep.mubr.bf16.mxu0 0
      %601 = vmatmul.mubr.bf16.gmra.mxu0 %v539
      %v602 = vpop.f32.mrf.mxu0
      %v603 = vadd.f32 0.0, %v602
      %v604 = vpop.f32.mrf.mxu0
      %v605 = vpop.f32.mrf.mxu0
      %v606 = vadd.f32 0.0, %v605
      %v607 = vpop.f32.mrf.mxu0
      %608 = vdwg.mxu0
      %v609 = vmul.f32 %v579, 0.35355338
      %v610 = vmul.f32 %v582, 0.35355338
      %v611 = vmul.f32 %v587, 0.35355338
      %v612 = vmul.f32 %v590, 0.35355338
      %v613 = vmul.f32 %v595, 0.35355338
      %v614 = vmul.f32 %v598, 0.35355338
      %v615 = vmul.f32 %v603, 0.35355338
      %v616 = vmul.f32 %v606, 0.35355338
      %vm617 = vcmask 523264
      %v618 = vsel %vm617, %v609, -inf
      %619 = vmax.xlane.f32.xlu0 %v618
      %v620 = vpop.xlane.xlu0 %619
      %v621 = vsel %vm617, %v610, -inf
      %622 = vmax.xlane.f32.xlu0 %v621
      %v623 = vpop.xlane.xlu0 %622
      %v624 = vsel %vm617, %v611, -inf
      %625 = vmax.xlane.f32.xlu0 %v624
      %v626 = vpop.xlane.xlu0 %625
      %v627 = vsel %vm617, %v612, -inf
      %628 = vmax.xlane.f32.xlu0 %v627
      %v629 = vpop.xlane.xlu0 %628
      %v630 = vsel %vm617, %v613, -inf
      %631 = vmax.xlane.f32.xlu0 %v630
      %v632 = vpop.xlane.xlu0 %631
      %v633 = vsel %vm617, %v614, -inf
      %634 = vmax.xlane.f32.xlu0 %v633
      %v635 = vpop.xlane.xlu0 %634
      %v636 = vsel %vm617, %v615, -inf
      %637 = vmax.xlane.f32.xlu0 %v636
      %v638 = vpop.xlane.xlu0 %637
      %v639 = vsel %vm617, %v616, -inf
      %640 = vmax.xlane.f32.xlu0 %v639
      %v641 = vpop.xlane.xlu0 %640
      %v642 = vsub.f32 %v609, %v620
      %v643 = vsub.f32 %v610, %v623
      %v644 = vsub.f32 %v611, %v626
      %v645 = vsub.f32 %v612, %v629
      %v646 = vsub.f32 %v613, %v632
      %v647 = vsub.f32 %v614, %v635
      %v648 = vsub.f32 %v615, %v638
      %v649 = vsub.f32 %v616, %v641
      %v650 = vmul.f32 %v642, 1.442695
      %v651 = vpow.pop %v650
      %v652 = vmul.f32 %v643, 1.442695
      %v653 = vpow.pop %v652
      %v654 = vmul.f32 %v644, 1.442695
      %v655 = vpow.pop %v654
      %v656 = vmul.f32 %v645, 1.442695
      %v657 = vpow.pop %v656
      %v658 = vmul.f32 %v646, 1.442695
      %v659 = vpow.pop %v658
      %v660 = vmul.f32 %v647, 1.442695
      %v661 = vpow.pop %v660
      %v662 = vmul.f32 %v648, 1.442695
      %v663 = vpow.pop %v662
      %v664 = vmul.f32 %v649, 1.442695
      %v665 = vpow.pop %v664
      %v666 = vsel %vm617, %v651, 0.0
      %667 = vadd.xlane.f32.xlu0 %v666
      %v668 = vpop.xlane.xlu0 %667
      %v669 = vsel %vm617, %v653, 0.0
      %670 = vadd.xlane.f32.xlu0 %v669
      %v671 = vpop.xlane.xlu0 %670
      %v672 = vsel %vm617, %v655, 0.0
      %673 = vadd.xlane.f32.xlu0 %v672
      %v674 = vpop.xlane.xlu0 %673
      %v675 = vsel %vm617, %v657, 0.0
      %676 = vadd.xlane.f32.xlu0 %v675
      %v677 = vpop.xlane.xlu0 %676
      %v678 = vsel %vm617, %v659, 0.0
      %679 = vadd.xlane.f32.xlu0 %v678
      %v680 = vpop.xlane.xlu0 %679
      %v681 = vsel %vm617, %v661, 0.0
      %682 = vadd.xlane.f32.xlu0 %v681
      %v683 = vpop.xlane.xlu0 %682
      %v684 = vsel %vm617, %v663, 0.0
      %685 = vadd.xlane.f32.xlu0 %v684
      %v686 = vpop.xlane.xlu0 %685
      %v687 = vsel %vm617, %v665, 0.0
      %688 = vadd.xlane.f32.xlu0 %v687
      %v689 = vpop.xlane.xlu0 %688
      %v690 = vrcp.pop %v668
      %v691 = vrcp.pop %v671
      %v692 = vrcp.pop %v674
      %v693 = vrcp.pop %v677
      %v694 = vrcp.pop %v680
      %v695 = vrcp.pop %v683
      %v696 = vrcp.pop %v686
      %v697 = vrcp.pop %v689
      %v698 = vmul.f32 %v651, %v690
      %v699 = vmul.f32 %v653, %v691
      %v700 = vmul.f32 %v655, %v692
      %v701 = vmul.f32 %v657, %v693
      %v702 = vmul.f32 %v659, %v694
      %v703 = vmul.f32 %v661, %v695
      %v704 = vmul.f32 %v663, %v696
      %v705 = vmul.f32 %v665, %v697
      %v706 = vpack.c.bf16 %v506, %v506
      %v707 = vpack.c.bf16 %v699, %v698
      %v708 = vpack.c.bf16 %v701, %v700
      %v709 = vpack.c.bf16 %v703, %v702
      %v710 = vpack.c.bf16 %v705, %v704
      %v712 = vsel %vm617, %v706, 0
      %v715 = vsel %vm617, %v707, 0
      %v718 = vsel %vm617, %v708, 0
      %v721 = vsel %vm617, %v709, 0
      %v724 = vsel %vm617, %v710, 0
      %726 = vmatprep.subr.bf16.mxu0 0
      %727 = vmatpush1.bf16.xpose.msra.mxu0 0
      %728 = vmatprep.subr.bf16.mxu0 0
      %729 = vmatpush1.bf16.xpose.msra.mxu0 0
      %730 = vmatprep.subr.bf16.mxu0 0
      %731 = vmatpush1.bf16.xpose.msra.mxu0 0
      %732 = vmatprep.subr.bf16.mxu0 0
      %733 = vmatpush1.bf16.xpose.msra.mxu0 0
      %734 = vmatprep.subr.bf16.mxu0 0
      %735 = vmatpush1.bf16.xpose.msra.mxu0 %v724
      %736 = vmatprep.subr.bf16.mxu0 0
      %737 = vmatpush1.bf16.xpose.msra.mxu0 %v721
      %738 = vmatprep.subr.bf16.mxu0 0
      %739 = vmatpush1.bf16.xpose.msra.mxu0 %v718
      %740 = vmatprep.subr.bf16.mxu0 0
      %741 = vmatpush1.bf16.xpose.msra.mxu0 %v715
      %742 = vmatprep.subr.bf16.mxu0 0
      %743 = vmatpush2.bf16.xpose.msra.mxu0 0
      %744 = vmatprep.subr.bf16.mxu0 0
      %745 = vmatpush2.bf16.xpose.msra.mxu0 0
      %746 = vmatprep.subr.bf16.mxu0 0
      %747 = vmatpush2.bf16.xpose.msra.mxu0 0
      %748 = vmatprep.subr.bf16.mxu0 0
      %749 = vmatpush2.bf16.xpose.msra.mxu0 0
      %750 = vmatprep.subr.bf16.mxu0 0
      %751 = vmatpush2.bf16.xpose.msra.mxu0 0
      %752 = vmatprep.subr.bf16.mxu0 0
      %753 = vmatpush2.bf16.xpose.msra.mxu0 0
      %754 = vmatprep.subr.bf16.mxu0 0
      %755 = vmatpush2.bf16.xpose.msra.mxu0 0
      %756 = vmatprep.subr.bf16.mxu0 0
      %757 = vmatpush2.bf16.xpose.msra.mxu0 0
      %758 = vmatprep.mubr.bf16.mxu0 0
      %759 = vmatmul.mubr.bf16.gmra.mxu0 %v712
      %v760 = vpop.f32.mrf.mxu0
      %v761 = vadd.f32 0.0, %v760
      %v762 = vpop.f32.mrf.mxu0
      %v763 = vpop.f32.mrf.mxu0
      %v764 = vpop.f32.mrf.mxu0
      %765 = vdwg.mxu0
      %v766 = vld [vmem:[%s5] sm:$0xf]
      %v767 = vpack.c.bf16 %v761, %v761
      %v768 = vld [vmem:[%s6] sm:$0xff]
      %770 = vset.pattern.permute.xlu0 0
      %771 = vperm.xlu0 %770, %v768
      %v772 = vpop.permute.xlu0 %771
      %v775 = vsel %vm372, %v766, 0
      %v778 = vsel %vm376, %v767, 0
      %780 = vmatprep.subr.bf16.mxu0 0
      %781 = vmatpush1.bf16.msra.mxu0 0
      %782 = vmatprep.subr.bf16.mxu0 0
      %783 = vmatpush1.bf16.msra.mxu0 0
      %784 = vmatprep.subr.bf16.mxu0 0
      %785 = vmatpush1.bf16.msra.mxu0 0
      %786 = vmatprep.subr.bf16.mxu0 0
      %787 = vmatpush1.bf16.msra.mxu0 0
      %788 = vmatprep.subr.bf16.mxu0 0
      %789 = vmatpush1.bf16.msra.mxu0 0
      %790 = vmatprep.subr.bf16.mxu0 0
      %791 = vmatpush1.bf16.msra.mxu0 0
      %792 = vmatprep.subr.bf16.mxu0 0
      %793 = vmatpush1.bf16.msra.mxu0 0
      %794 = vmatprep.subr.bf16.mxu0 0
      %795 = vmatpush1.bf16.msra.mxu0 %v778
      %796 = vmatprep.subr.bf16.mxu0 0
      %797 = vmatpush2.bf16.msra.mxu0 0
      %798 = vmatprep.subr.bf16.mxu0 0
      %799 = vmatpush2.bf16.msra.mxu0 0
      %800 = vmatprep.subr.bf16.mxu0 0
      %801 = vmatpush2.bf16.msra.mxu0 0
      %802 = vmatprep.subr.bf16.mxu0 0
      %803 = vmatpush2.bf16.msra.mxu0 0
      %804 = vmatprep.subr.bf16.mxu0 0
      %805 = vmatpush2.bf16.msra.mxu0 0
      %806 = vmatprep.subr.bf16.mxu0 0
      %807 = vmatpush2.bf16.msra.mxu0 0
      %808 = vmatprep.subr.bf16.mxu0 0
      %809 = vmatpush2.bf16.msra.mxu0 0
      %810 = vmatprep.subr.bf16.mxu0 0
      %811 = vmatpush2.bf16.msra.mxu0 0
      %812 = vmatprep.mubr.bf16.mxu0 0
      %813 = vmatmul.mubr.bf16.gmra.mxu0 %v775
      %v814 = vpop.f32.mrf.mxu0
      %v815 = vadd.f32 %v772, %v814
      %v816 = vpop.f32.mrf.mxu0
      %v817 = vpop.f32.mrf.mxu0
      %v818 = vpop.f32.mrf.mxu0
      %819 = vdwg.mxu0
      %820 = vst.msk [vmem:[%s357] sm:$0xff] %vm617, %v415
      %821 = vst.msk [vmem:[%s361] sm:$0xff] %vm617, %v462
      %822 = vst.msk [vmem:[%s365] sm:$0xff] %vm617, %v815
      %p823 = scmp.lt.s32.totalorder %s21, 1
      %s824 = scalar_select %p823, %s21, 1
      %s825 = smul.addr %s824, 8
      %s826 = scalar_lea.vmem %s7, %s825
      %p827 = scmp.lt.s32.totalorder %s21, 1
      %s828 = scalar_select %p827, %s21, 1
      %s829 = smul.addr %s828, 8
      %s830 = scalar_lea.vmem %s8, %s829
      %p831 = scmp.lt.s32.totalorder %s21, 1
      %s832 = scalar_select %p831, %s21, 1
      %s833 = smul.addr %s832, 8
      %s834 = scalar_lea.vmem %s9, %s833
      // Predicated region
      $region49: #{attfno_forward.3} parent=47 // pred_check
        %p835 = pneg %p196
      $region50: #{attfno_forward.3} parent=47 // pred_check_branch
        %837 = sbr.rel (%p835) target = $region52
      $region51: #{attfno_forward.3} parent=47 // pred_region
        _
      $region52: #{attfno_forward.3} parent=47 // pred_fallthru
        _
      // Predicated region
      $region53: #{attfno_forward.3} parent=47 // pred_check
        %p838 = pneg %p222
      $region54: #{attfno_forward.3} parent=47 // pred_check_branch
        %840 = sbr.rel (%p838) target = $region56
      $region55: #{attfno_forward.3} parent=47 // pred_region
        _
      $region56: #{attfno_forward.3} parent=47 // pred_fallthru
        _
      // Predicated region
      $region57: #{attfno_forward.3} parent=47 // pred_check
        %p841 = pneg %p248
      $region58: #{attfno_forward.3} parent=47 // pred_check_branch
        %843 = sbr.rel (%p841) target = $region60
      $region59: #{attfno_forward.3} parent=47 // pred_region
        _
      $region60: #{attfno_forward.3} parent=47 // pred_fallthru
        _
    $region48: #{attfno_forward.3} parent=5 // pred_fallthru
      _
    %p844 = scmp.le.s32.totalorder 2, %s16
    // Predicated region
    $region61: #{attfno_forward.3} parent=5 // pred_check
      %p845 = pneg %p844
    $region62: #{attfno_forward.3} parent=5 // pred_check_branch
      %847 = sbr.rel (%p845) target = $region64
    $region63: #{attfno_forward.3} parent=5 // pred_region
      %s848 = ssub.s32 %s16, 2
      // Predicated region
      $region65: #{attfno_forward.3} parent=63 // pred_check
        %p849 = pneg %p202
      $region66: #{attfno_forward.3} parent=63 // pred_check_branch
        %851 = sbr.rel (%p849) target = $region68
      $region67: #{attfno_forward.3} parent=63 // pred_region
        %p852 = scmp.lt.s32.totalorder %s22, 1
        %s853 = scalar_select %p852, %s22, 1
        %s854 = smul.addr %s853, 8
        %s855 = scalar_lea.vmem %s7, %s854
      $region68: #{attfno_forward.3} parent=63 // pred_fallthru
        _
      // Predicated region
      $region69: #{attfno_forward.3} parent=63 // pred_check
        %p856 = pneg %p228
      $region70: #{attfno_forward.3} parent=63 // pred_check_branch
        %858 = sbr.rel (%p856) target = $region72
      $region71: #{attfno_forward.3} parent=63 // pred_region
        %p859 = scmp.lt.s32.totalorder %s22, 1
        %s860 = scalar_select %p859, %s22, 1
        %s861 = smul.addr %s860, 8
        %s862 = scalar_lea.vmem %s8, %s861
      $region72: #{attfno_forward.3} parent=63 // pred_fallthru
        _
      // Predicated region
      $region73: #{attfno_forward.3} parent=63 // pred_check
        %p863 = pneg %p254
      $region74: #{attfno_forward.3} parent=63 // pred_check_branch
        %865 = sbr.rel (%p863) target = $region76
      $region75: #{attfno_forward.3} parent=63 // pred_region
        %p866 = scmp.lt.s32.totalorder %s22, 1
        %s867 = scalar_select %p866, %s22, 1
        %s868 = smul.addr %s867, 8
        %s869 = scalar_lea.vmem %s9, %s868
      $region76: #{attfno_forward.3} parent=63 // pred_fallthru
        _
    $region64: #{attfno_forward.3} parent=5 // pred_fallthru
      _
  $region6: #{attfno_forward.3} parent=0 // loop_footer
    %s20 = sadd.s32 1, %s16
  $region7: #{attfno_forward.3} parent=0 // loop_footer_branch
    %15 = sbr.rel target = $region3
  $region8: #{attfno_forward.3} parent=0 // loop_exit
    _

// kernel: attfno_forward.4
$region0: #{attfno_forward.4}
  #allocation0 [shape = 'u32[]', space=smem, size = 0x4, offset = 0x4, fixed_abs, tag = 'smem constant byte address 0x4 - core index']
  #allocation1 [shape = 'u32[144,128]{1,0:T(1,128)}', space=vmem, size = 0x12000, scoped, tag = 'internal scratch']
  %s0 = inlined_call_operand.vmem [shape: f32[2,2,128], index: 0, kind: input, shape index: {}]
  %s1 = inlined_call_operand.vmem [shape: f32[2,2,128], index: 1, kind: input, shape index: {}]
  %s2 = inlined_call_operand.vmem [shape: bf16[128,128], index: 2, kind: input, shape index: {}]
  %s3 = inlined_call_operand.vmem [shape: bf16[128,128], index: 3, kind: input, shape index: {}]
  %s4 = inlined_call_operand.vmem [shape: f32[2,2,128], index: 4, kind: output, shape index: {0}]
  %s5 = inlined_call_operand.vmem [shape: f32[2,2,128], index: 5, kind: output, shape index: {1}]
  %6 = xla_tuple %s4, %s5
  %s7 = sld [smem:[#allocation0]]
  $region57: #{attfno_forward.4} parent=0
    _
  %s9 = ssub.s32 1, %s7
  %s10 = scalar_select 0, %s9, %s7
  loop: start=0, step=1, limit=4
  $region2: #{attfno_forward.4} parent=0 // loop_pre_header
    _
  $region3: #{attfno_forward.4} parent=0 // loop_header
    %s12 = sphi 0, %s16
    %p13 = scmp.ge.s32.totalorder %s12, 4
    %s22 = sphi 0, %s24
    %s25 = sphi 0, %s22
    %s26 = sphi 0, %s25
    %s42 = sphi 0, %s26
    %s48 = sphi 0, %s50
    %s51 = sphi 0, %s48
    %s52 = sphi 0, %s51
    %s68 = sphi 0, %s52
    %s72 = sphi 0, %s72
    %s74 = sphi 0, %s72
    %s75 = sphi 0, %s74
    %s89 = sphi 0, %s75
    %s93 = sphi 0, %s93
    %s95 = sphi 0, %s93
    %s96 = sphi 0, %s95
    %s110 = sphi 0, %s96
    %s116 = sphi 0, %s118
    %s119 = sphi 0, %s116
    %s120 = sphi 0, %s119
    %s136 = sphi 0, %s120
    %s142 = sphi 0, %s144
    %s145 = sphi 0, %s142
    %s146 = sphi 0, %s145
    %s162 = sphi 0, %s146
  $region4: #{attfno_forward.4} parent=0 // loop_header_branch
    %15 = sbr.rel (%p13) target = $region8
  $region5: #{attfno_forward.4} parent=0 // loop_body
    %s17 = ssub.s32 %s12, 1
    %s18 = ssub.s32 %s12, 2
    %s19 = sadd.s32 %s12, 1
    %s20 = ssub.s32 %s12, %s19
    %p21 = scmp.eq.s32.totalorder %s20, 0
    %s23 = sadd.s32 %s22, 1
    %s24 = scalar_select %p21, %s22, %s23
    %p27 = pneg %p21
    %p28 = scmp.eq.s32.totalorder %s12, 1
    %p29 = por %p27, %p28
    %p30 = scmp.ne.s32.totalorder %s22, %s25
    %p31 = scmp.eq.s32.totalorder %s12, 0
    %p32 = por %p30, %p31
    %p33 = scmp.ne.s32.totalorder %s22, %s25
    %p34 = scmp.eq.s32.totalorder %s17, 1
    %p35 = por %p33, %p34
    %p36 = scmp.ne.s32.totalorder %s25, %s26
    %p37 = scmp.eq.s32.totalorder %s17, 0
    %p38 = por %p36, %p37
    %p39 = scmp.ne.s32.totalorder %s25, %s26
    %p40 = scmp.eq.s32.totalorder %s18, 1
    %p41 = por %p39, %p40
    %p43 = scmp.ne.s32.totalorder %s26, %s42
    %p44 = scmp.eq.s32.totalorder %s18, 0
    %p45 = por %p43, %p44
    %s46 = ssub.s32 %s12, %s19
    %p47 = scmp.eq.s32.totalorder %s46, 0
    %s49 = sadd.s32 %s48, 1
    %s50 = scalar_select %p47, %s48, %s49
    %p53 = pneg %p47
    %p54 = scmp.eq.s32.totalorder %s12, 1
    %p55 = por %p53, %p54
    %p56 = scmp.ne.s32.totalorder %s48, %s51
    %p57 = scmp.eq.s32.totalorder %s12, 0
    %p58 = por %p56, %p57
    %p59 = scmp.ne.s32.totalorder %s48, %s51
    %p60 = scmp.eq.s32.totalorder %s17, 1
    %p61 = por %p59, %p60
    %p62 = scmp.ne.s32.totalorder %s51, %s52
    %p63 = scmp.eq.s32.totalorder %s17, 0
    %p64 = por %p62, %p63
    %p65 = scmp.ne.s32.totalorder %s51, %s52
    %p66 = scmp.eq.s32.totalorder %s18, 1
    %p67 = por %p65, %p66
    %p69 = scmp.ne.s32.totalorder %s52, %s68
    %p70 = scmp.eq.s32.totalorder %s18, 0
    %p71 = por %p69, %p70
    %s73 = sadd.s32 %s72, 1
    %p76 = scmp.eq.s32.totalorder %s12, 1
    %p77 = scmp.ne.s32.totalorder %s72, %s74
    %p78 = scmp.eq.s32.totalorder %s12, 0
    %p79 = por %p77, %p78
    %p80 = scmp.ne.s32.totalorder %s72, %s74
    %p81 = scmp.eq.s32.totalorder %s17, 1
    %p82 = por %p80, %p81
    %p83 = scmp.ne.s32.totalorder %s74, %s75
    %p84 = scmp.eq.s32.totalorder %s17, 0
    %p85 = por %p83, %p84
    %p86 = scmp.ne.s32.totalorder %s74, %s75
    %p87 = scmp.eq.s32.totalorder %s18, 1
    %p88 = por %p86, %p87
    %p90 = scmp.ne.s32.totalorder %s75, %s89
    %p91 = scmp.eq.s32.totalorder %s18, 0
    %p92 = por %p90, %p91
    %s94 = sadd.s32 %s93, 1
    %p97 = scmp.eq.s32.totalorder %s12, 1
    %p98 = scmp.ne.s32.totalorder %s93, %s95
    %p99 = scmp.eq.s32.totalorder %s12, 0
    %p100 = por %p98, %p99
    %p101 = scmp.ne.s32.totalorder %s93, %s95
    %p102 = scmp.eq.s32.totalorder %s17, 1
    %p103 = por %p101, %p102
    %p104 = scmp.ne.s32.totalorder %s95, %s96
    %p105 = scmp.eq.s32.totalorder %s17, 0
    %p106 = por %p104, %p105
    %p107 = scmp.ne.s32.totalorder %s95, %s96
    %p108 = scmp.eq.s32.totalorder %s18, 1
    %p109 = por %p107, %p108
    %p111 = scmp.ne.s32.totalorder %s96, %s110
    %p112 = scmp.eq.s32.totalorder %s18, 0
    %p113 = por %p111, %p112
    %s114 = ssub.s32 %s12, %s19
    %p115 = scmp.eq.s32.totalorder %s114, 0
    %s117 = sadd.s32 %s116, 1
    %s118 = scalar_select %p115, %s116, %s117
    %p121 = pneg %p115
    %p122 = scmp.eq.s32.totalorder %s12, 1
    %p123 = por %p121, %p122
    %p124 = scmp.ne.s32.totalorder %s116, %s119
    %p125 = scmp.eq.s32.totalorder %s12, 0
    %p126 = por %p124, %p125
    %p127 = scmp.ne.s32.totalorder %s116, %s119
    %p128 = scmp.eq.s32.totalorder %s17, 1
    %p129 = por %p127, %p128
    %p130 = scmp.ne.s32.totalorder %s119, %s120
    %p131 = scmp.eq.s32.totalorder %s17, 0
    %p132 = por %p130, %p131
    %p133 = scmp.ne.s32.totalorder %s119, %s120
    %p134 = scmp.eq.s32.totalorder %s18, 1
    %p135 = por %p133, %p134
    %p137 = scmp.ne.s32.totalorder %s120, %s136
    %p138 = scmp.eq.s32.totalorder %s18, 0
    %p139 = por %p137, %p138
    %s140 = ssub.s32 %s12, %s19
    %p141 = scmp.eq.s32.totalorder %s140, 0
    %s143 = sadd.s32 %s142, 1
    %s144 = scalar_select %p141, %s142, %s143
    %p147 = pneg %p141
    %p148 = scmp.eq.s32.totalorder %s12, 1
    %p149 = por %p147, %p148
    %p150 = scmp.ne.s32.totalorder %s142, %s145
    %p151 = scmp.eq.s32.totalorder %s12, 0
    %p152 = por %p150, %p151
    %p153 = scmp.ne.s32.totalorder %s142, %s145
    %p154 = scmp.eq.s32.totalorder %s17, 1
    %p155 = por %p153, %p154
    %p156 = scmp.ne.s32.totalorder %s145, %s146
    %p157 = scmp.eq.s32.totalorder %s17, 0
    %p158 = por %p156, %p157
    %p159 = scmp.ne.s32.totalorder %s145, %s146
    %p160 = scmp.eq.s32.totalorder %s18, 1
    %p161 = por %p159, %p160
    %p163 = scmp.ne.s32.totalorder %s146, %s162
    %p164 = scmp.eq.s32.totalorder %s18, 0
    %p165 = por %p163, %p164
    %p166 = scmp.le.s32.totalorder 1, %s12
    %p167 = scmp.lt.s32.totalorder %s12, 3
    %p168 = pnand %p166, %p167
    %p169 = pneg %p168
    // Predicated region
    $region9: #{attfno_forward.4} parent=5 // pred_check
      _
    $region10: #{attfno_forward.4} parent=5 // pred_check_branch
      %171 = sbr.rel (%p168) target = $region12
    $region11: #{attfno_forward.4} parent=5 // pred_region
      %s172 = ssub.s32 %s12, 1
      // Predicated region
      $region13: #{attfno_forward.4} parent=11 // pred_check
        %p173 = pneg %p85
      $region14: #{attfno_forward.4} parent=11 // pred_check_branch
        %175 = sbr.rel (%p173) target = $region16
      $region15: #{attfno_forward.4} parent=11 // pred_region
        _
      $region16: #{attfno_forward.4} parent=11 // pred_fallthru
        _
      // Predicated region
      $region17: #{attfno_forward.4} parent=11 // pred_check
        %p176 = pneg %p106
      $region18: #{attfno_forward.4} parent=11 // pred_check_branch
        %178 = sbr.rel (%p176) target = $region20
      $region19: #{attfno_forward.4} parent=11 // pred_region
        _
      $region20: #{attfno_forward.4} parent=11 // pred_fallthru
        _
    $region12: #{attfno_forward.4} parent=5 // pred_fallthru
      _
    %p179 = scmp.lt.s32.totalorder %s12, 2
    // Predicated region
    $region21: #{attfno_forward.4} parent=5 // pred_check
      %p180 = pneg %p179
    $region22: #{attfno_forward.4} parent=5 // pred_check_branch
      %182 = sbr.rel (%p180) target = $region24
    $region23: #{attfno_forward.4} parent=5 // pred_region
      // Predicated region
      $region25: #{attfno_forward.4} parent=23 // pred_check
        %p183 = pneg %p32
      $region26: #{attfno_forward.4} parent=23 // pred_check_branch
        %185 = sbr.rel (%p183) target = $region28
      $region27: #{attfno_forward.4} parent=23 // pred_region
        %p186 = scmp.lt.s32.totalorder %s12, 1
        %s187 = scalar_select %p186, %s12, 1
        %s188 = smul.addr %s187, 2
        %s189 = scalar_lea.vmem %s0, %s188
      $region28: #{attfno_forward.4} parent=23 // pred_fallthru
        _
      // Predicated region
      $region29: #{attfno_forward.4} parent=23 // pred_check
        %p190 = pneg %p58
      $region30: #{attfno_forward.4} parent=23 // pred_check_branch
        %192 = sbr.rel (%p190) target = $region32
      $region31: #{attfno_forward.4} parent=23 // pred_region
        %p193 = scmp.lt.s32.totalorder %s12, 1
        %s194 = scalar_select %p193, %s12, 1
        %s195 = smul.addr %s194, 2
        %s196 = scalar_lea.vmem %s1, %s195
      $region32: #{attfno_forward.4} parent=23 // pred_fallthru
        _
    $region24: #{attfno_forward.4} parent=5 // pred_fallthru
      _
    %p197 = scmp.le.s32.totalorder 1, %s12
    %p198 = scmp.lt.s32.totalorder %s12, 3
    %p199 = pnand %p197, %p198
    %p200 = pneg %p199
    // Predicated region
    $region33: #{attfno_forward.4} parent=5 // pred_check
      _
    $region34: #{attfno_forward.4} parent=5 // pred_check_branch
      %202 = sbr.rel (%p199) target = $region36
    $region35: #{attfno_forward.4} parent=5 // pred_region
      %s203 = ssub.s32 %s12, 1
      %p204 = scmp.lt.s32.totalorder %s17, 1
      %s205 = scalar_select %p204, %s17, 1
      %s206 = smul.addr %s205, 2
      %s207 = scalar_lea.vmem %s0, %s206
      %p208 = pneg %p38
      %p209 = pneg %p35
      %p210 = scmp.lt.s32.totalorder %s17, 1
      %s211 = scalar_select %p210, %s17, 1
      %s212 = smul.addr %s211, 2
      %s213 = scalar_lea.vmem %s1, %s212
      %p214 = pneg %p64
      %p215 = pneg %p61
      %p216 = pneg %p85
      %p217 = pneg %p82
      %p218 = pneg %p106
      %p219 = pneg %p103
      %p220 = pneg %p132
      %p221 = pneg %p129
      %p222 = scmp.lt.s32.totalorder %s17, 1
      %s223 = scalar_select %p222, %s17, 1
      %s224 = smul.addr %s223, 2
      %s225 = scalar_lea.vmem %s4, %s224
      %p226 = pneg %p158
      %p227 = pneg %p155
      %p228 = scmp.lt.s32.totalorder %s17, 1
      %s229 = scalar_select %p228, %s17, 1
      %s230 = smul.addr %s229, 2
      %s231 = scalar_lea.vmem %s5, %s230
      %p232 = scmp.lt.s32.totalorder %s17, 1
      %s233 = scalar_select %p232, %s17, 1
      %s234 = smul.addr %s233, 2
      %s235 = scalar_lea.vmem %s0, %s234
      %p236 = scmp.lt.s32.totalorder %s17, 1
      %s237 = scalar_select %p236, %s17, 1
      %s238 = smul.addr %s237, 2
      %s239 = scalar_lea.vmem %s1, %s238
      %p240 = scmp.lt.s32.totalorder %s17, 1
      %s241 = scalar_select %p240, %s17, 1
      %s242 = smul.addr %s241, 2
      %s243 = scalar_lea.vmem %s4, %s242
      %p244 = scmp.lt.s32.totalorder %s17, 1
      %s245 = scalar_select %p244, %s17, 1
      %s246 = smul.addr %s245, 2
      %s247 = scalar_lea.vmem %s5, %s246
      %v249 = vld [vmem:[%s235] sm:$0x3]
      %v250 = vpack.c.bf16 %v249, %v249
      %v251 = vld [vmem:[%s239] sm:$0x3]
      %v252 = vpack.c.bf16 %v251, %v251
      %v253 = vld [vmem:[%s2] sm:$0xf]
      %v254 = vld [vmem:[%s2 + $0x4] sm:$0xf]
      %v255 = vld [vmem:[%s2 + $0x8] sm:$0xf]
      %v256 = vld [vmem:[%s2 + $0xc] sm:$0xf]
      %v257 = vld [vmem:[%s2 + $0x10] sm:$0xf]
      %v258 = vld [vmem:[%s2 + $0x14] sm:$0xf]
      %v259 = vld [vmem:[%s2 + $0x18] sm:$0xf]
      %v260 = vld [vmem:[%s2 + $0x1c] sm:$0xf]
      %v261 = vld [vmem:[%s2 + $0x20] sm:$0xf]
      %v262 = vld [vmem:[%s2 + $0x24] sm:$0xf]
      %v263 = vld [vmem:[%s2 + $0x28] sm:$0xf]
      %v264 = vld [vmem:[%s2 + $0x2c] sm:$0xf]
      %v265 = vld [vmem:[%s2 + $0x30] sm:$0xf]
      %v266 = vld [vmem:[%s2 + $0x34] sm:$0xf]
      %v267 = vld [vmem:[%s2 + $0x38] sm:$0xf]
      %v268 = vld [vmem:[%s2 + $0x3c] sm:$0xf]
      %v269 = vld [vmem:[%s3] sm:$0xf]
      %v270 = vld [vmem:[%s3 + $0x4] sm:$0xf]
      %v271 = vld [vmem:[%s3 + $0x8] sm:$0xf]
      %v272 = vld [vmem:[%s3 + $0xc] sm:$0xf]
      %v273 = vld [vmem:[%s3 + $0x10] sm:$0xf]
      %v274 = vld [vmem:[%s3 + $0x14] sm:$0xf]
      %v275 = vld [vmem:[%s3 + $0x18] sm:$0xf]
      %v276 = vld [vmem:[%s3 + $0x1c] sm:$0xf]
      %v277 = vld [vmem:[%s3 + $0x20] sm:$0xf]
      %v278 = vld [vmem:[%s3 + $0x24] sm:$0xf]
      %v279 = vld [vmem:[%s3 + $0x28] sm:$0xf]
      %v280 = vld [vmem:[%s3 + $0x2c] sm:$0xf]
      %v281 = vld [vmem:[%s3 + $0x30] sm:$0xf]
      %v282 = vld [vmem:[%s3 + $0x34] sm:$0xf]
      %v283 = vld [vmem:[%s3 + $0x38] sm:$0xf]
      %v284 = vld [vmem:[%s3 + $0x3c] sm:$0xf]
      %v301 = vunpack.c.l.b16 %v253
      %v302 = vunpack.c.l.b16 %v254
      %v303 = vunpack.c.l.b16 %v255
      %v304 = vunpack.c.l.b16 %v256
      %v305 = vunpack.c.l.b16 %v257
      %v306 = vunpack.c.l.b16 %v258
      %v307 = vunpack.c.l.b16 %v259
      %v308 = vunpack.c.l.b16 %v260
      %v309 = vunpack.c.l.b16 %v261
      %v310 = vunpack.c.l.b16 %v262
      %v311 = vunpack.c.l.b16 %v263
      %v312 = vunpack.c.l.b16 %v264
      %v313 = vunpack.c.l.b16 %v265
      %v314 = vunpack.c.l.b16 %v266
      %v315 = vunpack.c.l.b16 %v267
      %v316 = vunpack.c.l.b16 %v268
      %v317 = vpack.c.b16 %v302, %v301
      %v318 = vpack.c.b16 %v304, %v303
      %v319 = vpack.c.b16 %v306, %v305
      %v320 = vpack.c.b16 %v308, %v307
      %v321 = vpack.c.b16 %v310, %v309
      %v322 = vpack.c.b16 %v312, %v311
      %v323 = vpack.c.b16 %v314, %v313
      %v324 = vpack.c.b16 %v316, %v315
      %333 = vmatprep.subr.bf16.mxu0 0
      %334 = vmatpush1.bf16.msra.mxu0 %v324
      %335 = vmatprep.subr.bf16.mxu0 0
      %336 = vmatpush1.bf16.msra.mxu0 %v323
      %337 = vmatprep.subr.bf16.mxu0 0
      %338 = vmatpush1.bf16.msra.mxu0 %v322
      %339 = vmatprep.subr.bf16.mxu0 0
      %340 = vmatpush1.bf16.msra.mxu0 %v321
      %341 = vmatprep.subr.bf16.mxu0 0
      %342 = vmatpush1.bf16.msra.mxu0 %v320
      %343 = vmatprep.subr.bf16.mxu0 0
      %344 = vmatpush1.bf16.msra.mxu0 %v319
      %345 = vmatprep.subr.bf16.mxu0 0
      %346 = vmatpush1.bf16.msra.mxu0 %v318
      %347 = vmatprep.subr.bf16.mxu0 0
      %348 = vmatpush1.bf16.msra.mxu0 %v317
      %349 = vmatprep.subr.bf16.mxu0 0
      %350 = vmatpush2.bf16.msra.mxu0 0
      %351 = vmatprep.subr.bf16.mxu0 0
      %352 = vmatpush2.bf16.msra.mxu0 0
      %353 = vmatprep.subr.bf16.mxu0 0
      %354 = vmatpush2.bf16.msra.mxu0 0
      %355 = vmatprep.subr.bf16.mxu0 0
      %356 = vmatpush2.bf16.msra.mxu0 0
      %357 = vmatprep.subr.bf16.mxu0 0
      %358 = vmatpush2.bf16.msra.mxu0 0
      %359 = vmatprep.subr.bf16.mxu0 0
      %360 = vmatpush2.bf16.msra.mxu0 0
      %361 = vmatprep.subr.bf16.mxu0 0
      %362 = vmatpush2.bf16.msra.mxu0 0
      %363 = vmatprep.subr.bf16.mxu0 0
      %364 = vmatpush2.bf16.msra.mxu0 0
      %365 = vmatprep.mubr.bf16.mxu0 0
      %366 = vmatmul.mubr.bf16.gmra.mxu0 %v250
      %v367 = vpop.f32.mrf.mxu0
      %v368 = vadd.f32 0.0, %v367
      %v369 = vpop.f32.mrf.mxu0
      %v370 = vpop.f32.mrf.mxu0
      %v371 = vpop.f32.mrf.mxu0
      %372 = vdwg.mxu0
      %v389 = vunpack.c.l.b16 %v269
      %v390 = vunpack.c.l.b16 %v270
      %v391 = vunpack.c.l.b16 %v271
      %v392 = vunpack.c.l.b16 %v272
      %v393 = vunpack.c.l.b16 %v273
      %v394 = vunpack.c.l.b16 %v274
      %v395 = vunpack.c.l.b16 %v275
      %v396 = vunpack.c.l.b16 %v276
      %v397 = vunpack.c.l.b16 %v277
      %v398 = vunpack.c.l.b16 %v278
      %v399 = vunpack.c.l.b16 %v279
      %v400 = vunpack.c.l.b16 %v280
      %v401 = vunpack.c.l.b16 %v281
      %v402 = vunpack.c.l.b16 %v282
      %v403 = vunpack.c.l.b16 %v283
      %v404 = vunpack.c.l.b16 %v284
      %v405 = vpack.c.b16 %v390, %v389
      %v406 = vpack.c.b16 %v392, %v391
      %v407 = vpack.c.b16 %v394, %v393
      %v408 = vpack.c.b16 %v396, %v395
      %v409 = vpack.c.b16 %v398, %v397
      %v410 = vpack.c.b16 %v400, %v399
      %v411 = vpack.c.b16 %v402, %v401
      %v412 = vpack.c.b16 %v404, %v403
      %421 = vmatprep.subr.bf16.mxu0 0
      %422 = vmatpush1.bf16.msra.mxu0 %v412
      %423 = vmatprep.subr.bf16.mxu0 0
      %424 = vmatpush1.bf16.msra.mxu0 %v411
      %425 = vmatprep.subr.bf16.mxu0 0
      %426 = vmatpush1.bf16.msra.mxu0 %v410
      %427 = vmatprep.subr.bf16.mxu0 0
      %428 = vmatpush1.bf16.msra.mxu0 %v409
      %429 = vmatprep.subr.bf16.mxu0 0
      %430 = vmatpush1.bf16.msra.mxu0 %v408
      %431 = vmatprep.subr.bf16.mxu0 0
      %432 = vmatpush1.bf16.msra.mxu0 %v407
      %433 = vmatprep.subr.bf16.mxu0 0
      %434 = vmatpush1.bf16.msra.mxu0 %v406
      %435 = vmatprep.subr.bf16.mxu0 0
      %436 = vmatpush1.bf16.msra.mxu0 %v405
      %437 = vmatprep.subr.bf16.mxu0 0
      %438 = vmatpush2.bf16.msra.mxu0 0
      %439 = vmatprep.subr.bf16.mxu0 0
      %440 = vmatpush2.bf16.msra.mxu0 0
      %441 = vmatprep.subr.bf16.mxu0 0
      %442 = vmatpush2.bf16.msra.mxu0 0
      %443 = vmatprep.subr.bf16.mxu0 0
      %444 = vmatpush2.bf16.msra.mxu0 0
      %445 = vmatprep.subr.bf16.mxu0 0
      %446 = vmatpush2.bf16.msra.mxu0 0
      %447 = vmatprep.subr.bf16.mxu0 0
      %448 = vmatpush2.bf16.msra.mxu0 0
      %449 = vmatprep.subr.bf16.mxu0 0
      %450 = vmatpush2.bf16.msra.mxu0 0
      %451 = vmatprep.subr.bf16.mxu0 0
      %452 = vmatpush2.bf16.msra.mxu0 0
      %453 = vmatprep.mubr.bf16.mxu0 0
      %454 = vmatmul.mubr.bf16.gmra.mxu0 %v252
      %v455 = vpop.f32.mrf.mxu0
      %v456 = vadd.f32 0.0, %v455
      %v457 = vpop.f32.mrf.mxu0
      %v458 = vpop.f32.mrf.mxu0
      %v459 = vpop.f32.mrf.mxu0
      %460 = vdwg.mxu0
      %v461 = vsub.f32 %v368, %v456
      %462 = vst [vmem:[%s243] sm:$0x3] %v461
      %463 = vmatprep.subr.bf16.mxu0 0
      %464 = vmatpush1.bf16.msra.mxu0 %v324
      %465 = vmatprep.subr.bf16.mxu0 0
      %466 = vmatpush1.bf16.msra.mxu0 %v323
      %467 = vmatprep.subr.bf16.mxu0 0
      %468 = vmatpush1.bf16.msra.mxu0 %v322
      %469 = vmatprep.subr.bf16.mxu0 0
      %470 = vmatpush1.bf16.msra.mxu0 %v321
      %471 = vmatprep.subr.bf16.mxu0 0
      %472 = vmatpush1.bf16.msra.mxu0 %v320
      %473 = vmatprep.subr.bf16.mxu0 0
      %474 = vmatpush1.bf16.msra.mxu0 %v319
      %475 = vmatprep.subr.bf16.mxu0 0
      %476 = vmatpush1.bf16.msra.mxu0 %v318
      %477 = vmatprep.subr.bf16.mxu0 0
      %478 = vmatpush1.bf16.msra.mxu0 %v317
      %479 = vmatprep.subr.bf16.mxu0 0
      %480 = vmatpush2.bf16.msra.mxu0 0
      %481 = vmatprep.subr.bf16.mxu0 0
      %482 = vmatpush2.bf16.msra.mxu0 0
      %483 = vmatprep.subr.bf16.mxu0 0
      %484 = vmatpush2.bf16.msra.mxu0 0
      %485 = vmatprep.subr.bf16.mxu0 0
      %486 = vmatpush2.bf16.msra.mxu0 0
      %487 = vmatprep.subr.bf16.mxu0 0
      %488 = vmatpush2.bf16.msra.mxu0 0
      %489 = vmatprep.subr.bf16.mxu0 0
      %490 = vmatpush2.bf16.msra.mxu0 0
      %491 = vmatprep.subr.bf16.mxu0 0
      %492 = vmatpush2.bf16.msra.mxu0 0
      %493 = vmatprep.subr.bf16.mxu0 0
      %494 = vmatpush2.bf16.msra.mxu0 0
      %495 = vmatprep.mubr.bf16.mxu0 0
      %496 = vmatmul.mubr.bf16.gmra.mxu0 %v252
      %v497 = vpop.f32.mrf.mxu0
      %v498 = vadd.f32 0.0, %v497
      %v499 = vpop.f32.mrf.mxu0
      %v500 = vpop.f32.mrf.mxu0
      %v501 = vpop.f32.mrf.mxu0
      %502 = vdwg.mxu0
      %503 = vmatprep.subr.bf16.mxu0 0
      %504 = vmatpush1.bf16.msra.mxu0 %v412
      %505 = vmatprep.subr.bf16.mxu0 0
      %506 = vmatpush1.bf16.msra.mxu0 %v411
      %507 = vmatprep.subr.bf16.mxu0 0
      %508 = vmatpush1.bf16.msra.mxu0 %v410
      %509 = vmatprep.subr.bf16.mxu0 0
      %510 = vmatpush1.bf16.msra.mxu0 %v409
      %511 = vmatprep.subr.bf16.mxu0 0
      %512 = vmatpush1.bf16.msra.mxu0 %v408
      %513 = vmatprep.subr.bf16.mxu0 0
      %514 = vmatpush1.bf16.msra.mxu0 %v407
      %515 = vmatprep.subr.bf16.mxu0 0
      %516 = vmatpush1.bf16.msra.mxu0 %v406
      %517 = vmatprep.subr.bf16.mxu0 0
      %518 = vmatpush1.bf16.msra.mxu0 %v405
      %519 = vmatprep.subr.bf16.mxu0 0
      %520 = vmatpush2.bf16.msra.mxu0 0
      %521 = vmatprep.subr.bf16.mxu0 0
      %522 = vmatpush2.bf16.msra.mxu0 0
      %523 = vmatprep.subr.bf16.mxu0 0
      %524 = vmatpush2.bf16.msra.mxu0 0
      %525 = vmatprep.subr.bf16.mxu0 0
      %526 = vmatpush2.bf16.msra.mxu0 0
      %527 = vmatprep.subr.bf16.mxu0 0
      %528 = vmatpush2.bf16.msra.mxu0 0
      %529 = vmatprep.subr.bf16.mxu0 0
      %530 = vmatpush2.bf16.msra.mxu0 0
      %531 = vmatprep.subr.bf16.mxu0 0
      %532 = vmatpush2.bf16.msra.mxu0 0
      %533 = vmatprep.subr.bf16.mxu0 0
      %534 = vmatpush2.bf16.msra.mxu0 0
      %535 = vmatprep.mubr.bf16.mxu0 0
      %536 = vmatmul.mubr.bf16.gmra.mxu0 %v250
      %v537 = vpop.f32.mrf.mxu0
      %v538 = vadd.f32 %v498, %v537
      %v539 = vpop.f32.mrf.mxu0
      %v540 = vpop.f32.mrf.mxu0
      %v541 = vpop.f32.mrf.mxu0
      %542 = vdwg.mxu0
      %543 = vst [vmem:[%s247] sm:$0x3] %v538
      %p544 = scmp.lt.s32.totalorder %s17, 1
      %s545 = scalar_select %p544, %s17, 1
      %s546 = smul.addr %s545, 2
      %s547 = scalar_lea.vmem %s4, %s546
      %p548 = scmp.lt.s32.totalorder %s17, 1
      %s549 = scalar_select %p548, %s17, 1
      %s550 = smul.addr %s549, 2
      %s551 = scalar_lea.vmem %s5, %s550
      // Predicated region
      $region37: #{attfno_forward.4} parent=35 // pred_check
        %p552 = pneg %p129
      $region38: #{attfno_forward.4} parent=35 // pred_check_branch
        %554 = sbr.rel (%p552) target = $region40
      $region39: #{attfno_forward.4} parent=35 // pred_region
        _
      $region40: #{attfno_forward.4} parent=35 // pred_fallthru
        _
      // Predicated region
      $region41: #{attfno_forward.4} parent=35 // pred_check
        %p555 = pneg %p155
      $region42: #{attfno_forward.4} parent=35 // pred_check_branch
        %557 = sbr.rel (%p555) target = $region44
      $region43: #{attfno_forward.4} parent=35 // pred_region
        _
      $region44: #{attfno_forward.4} parent=35 // pred_fallthru
        _
    $region36: #{attfno_forward.4} parent=5 // pred_fallthru
      _
    %p558 = scmp.le.s32.totalorder 2, %s12
    // Predicated region
    $region45: #{attfno_forward.4} parent=5 // pred_check
      %p559 = pneg %p558
    $region46: #{attfno_forward.4} parent=5 // pred_check_branch
      %561 = sbr.rel (%p559) target = $region48
    $region47: #{attfno_forward.4} parent=5 // pred_region
      %s562 = ssub.s32 %s12, 2
      // Predicated region
      $region49: #{attfno_forward.4} parent=47 // pred_check
        %p563 = pneg %p135
      $region50: #{attfno_forward.4} parent=47 // pred_check_branch
        %565 = sbr.rel (%p563) target = $region52
      $region51: #{attfno_forward.4} parent=47 // pred_region
        %p566 = scmp.lt.s32.totalorder %s18, 1
        %s567 = scalar_select %p566, %s18, 1
        %s568 = smul.addr %s567, 2
        %s569 = scalar_lea.vmem %s4, %s568
      $region52: #{attfno_forward.4} parent=47 // pred_fallthru
        _
      // Predicated region
      $region53: #{attfno_forward.4} parent=47 // pred_check
        %p570 = pneg %p161
      $region54: #{attfno_forward.4} parent=47 // pred_check_branch
        %572 = sbr.rel (%p570) target = $region56
      $region55: #{attfno_forward.4} parent=47 // pred_region
        %p573 = scmp.lt.s32.totalorder %s18, 1
        %s574 = scalar_select %p573, %s18, 1
        %s575 = smul.addr %s574, 2
        %s576 = scalar_lea.vmem %s5, %s575
      $region56: #{attfno_forward.4} parent=47 // pred_fallthru
        _
    $region48: #{attfno_forward.4} parent=5 // pred_fallthru
      _
  $region6: #{attfno_forward.4} parent=0 // loop_footer
    %s16 = sadd.s32 1, %s12
  $region7: #{attfno_forward.4} parent=0 // loop_footer_branch
    %11 = sbr.rel target = $region3
  $region8: #{attfno_forward.4} parent=0 // loop_exit
    _

// kernel: reverse.7
$region0: #{reverse.7}
  %s0 = inlined_call_operand.vmem [shape: f32[2,8,16,7], index: 0, kind: input, shape index: {}]
  %s1 = inlined_call_operand.vmem [shape: f32[2,8,16,7], index: 1, kind: output, shape index: {}]
  $region1: #{reverse.7} parent=0
    #allocation0 [shape = 'u8[131072]{0}', space=vmem, size = 0x20000, scoped, tag = 'operand span for operand 0']
    #allocation1 [shape = 'u8[65536]{0}', space=vmem, size = 0x10000, scoped, tag = 'operand span for operand 1']
    %s2 = scalar_lea.vmem [#allocation0], 8
    // Predicated region
    $region2: #{reverse.7} parent=1 // pred_check
      _
    $region3: #{reverse.7} parent=1 // pred_check_branch
      %4 = sbr.rel (0) target = $region5
    $region4: #{reverse.7} parent=1 // pred_region
      // Predicated region
      $region6: #{reverse.7} parent=4 // pred_check
        _
      $region7: #{reverse.7} parent=4 // pred_check_branch
        %6 = sbr.rel (0) target = $region9
      $region8: #{reverse.7} parent=4 // pred_region
        // Predicated region
        $region21: #{reverse.7} parent=8 // pred_check
          _
        $region22: #{reverse.7} parent=8 // pred_check_branch
          %52 = sbr.rel (0) target = $region24
        $region23: #{reverse.7} parent=8 // pred_region
          loop: start=0, step=1, limit=1
          $region25: #{reverse.7} parent=23 // loop_pre_header
            _
          $region26: #{reverse.7} parent=23 // loop_header
            %s54 = sphi 0, %s58
            %p55 = scmp.ge.s32.totalorder %s54, 1
            %s59 = sphi %s0, %s0
            %s60 = sphi %s2, %s2
          $region27: #{reverse.7} parent=23 // loop_header_branch
            %57 = sbr.rel (%p55) target = $region31
          $region28: #{reverse.7} parent=23 // loop_body
            %v61 = vld [vmem:[%s59] sm:$0xff]
            %62 = vst [vmem:[%s60] sm:$0xff] %v61
            %v63 = vld [vmem:[%s59 + $0x8] sm:$0xff]
            %64 = vst [vmem:[%s60 + $0x10] sm:$0xff] %v63
            %v65 = vld [vmem:[%s59 + $0x10] sm:$0xff]
            %66 = vst [vmem:[%s60 + $0x20] sm:$0xff] %v65
            %v67 = vld [vmem:[%s59 + $0x18] sm:$0xff]
            %68 = vst [vmem:[%s60 + $0x30] sm:$0xff] %v67
            %v69 = vld [vmem:[%s59 + $0x20] sm:$0xff]
            %70 = vst [vmem:[%s60 + $0x40] sm:$0xff] %v69
            %v71 = vld [vmem:[%s59 + $0x28] sm:$0xff]
            %72 = vst [vmem:[%s60 + $0x50] sm:$0xff] %v71
            %v73 = vld [vmem:[%s59 + $0x30] sm:$0xff]
            %74 = vst [vmem:[%s60 + $0x60] sm:$0xff] %v73
            %v75 = vld [vmem:[%s59 + $0x38] sm:$0xff]
            %76 = vst [vmem:[%s60 + $0x70] sm:$0xff] %v75
            %v77 = vld [vmem:[%s59 + $0x40] sm:$0xff]
            %78 = vst [vmem:[%s60 + $0x80] sm:$0xff] %v77
            %v79 = vld [vmem:[%s59 + $0x48] sm:$0xff]
            %80 = vst [vmem:[%s60 + $0x90] sm:$0xff] %v79
            %v81 = vld [vmem:[%s59 + $0x50] sm:$0xff]
            %82 = vst [vmem:[%s60 + $0xa0] sm:$0xff] %v81
            %v83 = vld [vmem:[%s59 + $0x58] sm:$0xff]
            %84 = vst [vmem:[%s60 + $0xb0] sm:$0xff] %v83
            %v85 = vld [vmem:[%s59 + $0x60] sm:$0xff]
            %86 = vst [vmem:[%s60 + $0xc0] sm:$0xff] %v85
            %v87 = vld [vmem:[%s59 + $0x68] sm:$0xff]
            %88 = vst [vmem:[%s60 + $0xd0] sm:$0xff] %v87
            %v89 = vld [vmem:[%s59 + $0x70] sm:$0xff]
            %90 = vst [vmem:[%s60 + $0xe0] sm:$0xff] %v89
            %v91 = vld [vmem:[%s59 + $0x78] sm:$0xff]
            %92 = vst [vmem:[%s60 + $0xf0] sm:$0xff] %v91
          $region29: #{reverse.7} parent=23 // loop_footer
            %s58 = sadd.s32 1, %s54
          $region30: #{reverse.7} parent=23 // loop_footer_branch
            %53 = sbr.rel target = $region26
          $region31: #{reverse.7} parent=23 // loop_exit
            _
        $region24: #{reverse.7} parent=8 // pred_fallthru
          _
        // Predicated region
        $region32: #{reverse.7} parent=8 // pred_check
          _
        $region33: #{reverse.7} parent=8 // pred_check_branch
          %94 = sbr.rel target = $region35
        $region34: #{reverse.7} parent=8 // pred_region
          _
        $region35: #{reverse.7} parent=8 // pred_fallthru
          _
      $region9: #{reverse.7} parent=4 // pred_fallthru
        _
      // Predicated region
      $region10: #{reverse.7} parent=4 // pred_check
        _
      $region11: #{reverse.7} parent=4 // pred_check_branch
        %8 = sbr.rel target = $region13
      $region12: #{reverse.7} parent=4 // pred_region
        %s10 = ssub.s32 256, 1
        loop: start=0, step=1, limit=1
        $region14: #{reverse.7} parent=12 // loop_pre_header
          _
        $region15: #{reverse.7} parent=12 // loop_header
          %s12 = sphi 0, %s16
          %p13 = scmp.ge.s32.totalorder %s12, 1
          %s17 = sphi %s0, %s0
          %s18 = sphi %s2, %s2
        $region16: #{reverse.7} parent=12 // loop_header_branch
          %15 = sbr.rel (%p13) target = $region20
        $region17: #{reverse.7} parent=12 // loop_body
          %v19 = vld [vmem:[%s17] sm:%s10]
          %20 = vst [vmem:[%s18] sm:%s10] %v19
          %v21 = vld [vmem:[%s17 + $0x8] sm:%s10]
          %22 = vst [vmem:[%s18 + $0x10] sm:%s10] %v21
          %v23 = vld [vmem:[%s17 + $0x10] sm:%s10]
          %24 = vst [vmem:[%s18 + $0x20] sm:%s10] %v23
          %v25 = vld [vmem:[%s17 + $0x18] sm:%s10]
          %26 = vst [vmem:[%s18 + $0x30] sm:%s10] %v25
          %v27 = vld [vmem:[%s17 + $0x20] sm:%s10]
          %28 = vst [vmem:[%s18 + $0x40] sm:%s10] %v27
          %v29 = vld [vmem:[%s17 + $0x28] sm:%s10]
          %30 = vst [vmem:[%s18 + $0x50] sm:%s10] %v29
          %v31 = vld [vmem:[%s17 + $0x30] sm:%s10]
          %32 = vst [vmem:[%s18 + $0x60] sm:%s10] %v31
          %v33 = vld [vmem:[%s17 + $0x38] sm:%s10]
          %34 = vst [vmem:[%s18 + $0x70] sm:%s10] %v33
          %v35 = vld [vmem:[%s17 + $0x40] sm:%s10]
          %36 = vst [vmem:[%s18 + $0x80] sm:%s10] %v35
          %v37 = vld [vmem:[%s17 + $0x48] sm:%s10]
          %38 = vst [vmem:[%s18 + $0x90] sm:%s10] %v37
          %v39 = vld [vmem:[%s17 + $0x50] sm:%s10]
          %40 = vst [vmem:[%s18 + $0xa0] sm:%s10] %v39
          %v41 = vld [vmem:[%s17 + $0x58] sm:%s10]
          %42 = vst [vmem:[%s18 + $0xb0] sm:%s10] %v41
          %v43 = vld [vmem:[%s17 + $0x60] sm:%s10]
          %44 = vst [vmem:[%s18 + $0xc0] sm:%s10] %v43
          %v45 = vld [vmem:[%s17 + $0x68] sm:%s10]
          %46 = vst [vmem:[%s18 + $0xd0] sm:%s10] %v45
          %v47 = vld [vmem:[%s17 + $0x70] sm:%s10]
          %48 = vst [vmem:[%s18 + $0xe0] sm:%s10] %v47
          %v49 = vld [vmem:[%s17 + $0x78] sm:%s10]
          %50 = vst [vmem:[%s18 + $0xf0] sm:%s10] %v49
        $region18: #{reverse.7} parent=12 // loop_footer
          %s16 = sadd.s32 1, %s12
        $region19: #{reverse.7} parent=12 // loop_footer_branch
          %11 = sbr.rel target = $region15
        $region20: #{reverse.7} parent=12 // loop_exit
          _
      $region13: #{reverse.7} parent=4 // pred_fallthru
        _
    $region5: #{reverse.7} parent=1 // pred_fallthru
      _
    %95 = vnop
    %s96 = scalar_lea.vmem [#allocation0], 7
    %v97 = vld [vmem:[%s96] ss:$-1 sm:$0xff]
    %v98 = vrot.slane %v97, 1
    %99 = vst [vmem:[#allocation1] sm:$0xff] %v98
    %s100 = scalar_lea.vmem [#allocation0], 8
    %s101 = scalar_lea.vmem %s100, 7 [#allocation0]
    %v102 = vld [vmem:[%s101] ss:$-1 sm:$0xff]
    %v103 = vrot.slane %v102, 1
    %v104 = vlaneseq
    %v105 = vshrl.u32 %v104, 7
    %vm106 = vcmp.lt.s32.totalorder %v105, 7
    %107 = vst.msk [vmem:[#allocation1] sm:$0xff] %vm106, %v103
    %s108 = scalar_lea.vmem [#allocation1], 8
    %s109 = scalar_lea.vmem [#allocation0], 16
    %s110 = scalar_lea.vmem %s109, 7 [#allocation0]
    %v111 = vld [vmem:[%s110] ss:$-1 sm:$0xff]
    %v112 = vrot.slane %v111, 1
    %113 = vst [vmem:[%s108] sm:$0xff] %v112
    %s114 = scalar_lea.vmem %s109, 8 [#allocation0]
    %s115 = scalar_lea.vmem %s114, 7 [#allocation0]
    %v116 = vld [vmem:[%s115] ss:$-1 sm:$0xff]
    %v117 = vrot.slane %v116, 1
    %v118 = vlaneseq
    %v119 = vshrl.u32 %v118, 7
    %vm120 = vcmp.lt.s32.totalorder %v119, 7
    %121 = vst.msk [vmem:[%s108] sm:$0xff] %vm120, %v117
    %s122 = scalar_lea.vmem [#allocation1], 16
    %s123 = scalar_lea.vmem [#allocation0], 32
    %s124 = scalar_lea.vmem %s123, 7 [#allocation0]
    %v125 = vld [vmem:[%s124] ss:$-1 sm:$0xff]
    %v126 = vrot.slane %v125, 1
    %127 = vst [vmem:[%s122] sm:$0xff] %v126
    %s128 = scalar_lea.vmem %s123, 8 [#allocation0]
    %s129 = scalar_lea.vmem %s128, 7 [#allocation0]
    %v130 = vld [vmem:[%s129] ss:$-1 sm:$0xff]
    %v131 = vrot.slane %v130, 1
    %v132 = vlaneseq
    %v133 = vshrl.u32 %v132, 7
    %vm134 = vcmp.lt.s32.totalorder %v133, 7
    %135 = vst.msk [vmem:[%s122] sm:$0xff] %vm134, %v131
    %s136 = scalar_lea.vmem [#allocation1], 24
    %s137 = scalar_lea.vmem [#allocation0], 48
    %s138 = scalar_lea.vmem %s137, 7 [#allocation0]
    %v139 = vld [vmem:[%s138] ss:$-1 sm:$0xff]
    %v140 = vrot.slane %v139, 1
    %141 = vst [vmem:[%s136] sm:$0xff] %v140
    %s142 = scalar_lea.vmem %s137, 8 [#allocation0]
    %s143 = scalar_lea.vmem %s142, 7 [#allocation0]
    %v144 = vld [vmem:[%s143] ss:$-1 sm:$0xff]
    %v145 = vrot.slane %v144, 1
    %v146 = vlaneseq
    %v147 = vshrl.u32 %v146, 7
    %vm148 = vcmp.lt.s32.totalorder %v147, 7
    %149 = vst.msk [vmem:[%s136] sm:$0xff] %vm148, %v145
    %s150 = scalar_lea.vmem [#allocation1], 32
    %s151 = scalar_lea.vmem [#allocation0], 64
    %s152 = scalar_lea.vmem %s151, 7 [#allocation0]
    %v153 = vld [vmem:[%s152] ss:$-1 sm:$0xff]
    %v154 = vrot.slane %v153, 1
    %155 = vst [vmem:[%s150] sm:$0xff] %v154
    %s156 = scalar_lea.vmem %s151, 8 [#allocation0]
    %s157 = scalar_lea.vmem %s156, 7 [#allocation0]
    %v158 = vld [vmem:[%s157] ss:$-1 sm:$0xff]
    %v159 = vrot.slane %v158, 1
    %v160 = vlaneseq
    %v161 = vshrl.u32 %v160, 7
    %vm162 = vcmp.lt.s32.totalorder %v161, 7
    %163 = vst.msk [vmem:[%s150] sm:$0xff] %vm162, %v159
    %s164 = scalar_lea.vmem [#allocation1], 40
    %s165 = scalar_lea.vmem [#allocation0], 80
    %s166 = scalar_lea.vmem %s165, 7 [#allocation0]
    %v167 = vld [vmem:[%s166] ss:$-1 sm:$0xff]
    %v168 = vrot.slane %v167, 1
    %169 = vst [vmem:[%s164] sm:$0xff] %v168
    %s170 = scalar_lea.vmem %s165, 8 [#allocation0]
    %s171 = scalar_lea.vmem %s170, 7 [#allocation0]
    %v172 = vld [vmem:[%s171] ss:$-1 sm:$0xff]
    %v173 = vrot.slane %v172, 1
    %v174 = vlaneseq
    %v175 = vshrl.u32 %v174, 7
    %vm176 = vcmp.lt.s32.totalorder %v175, 7
    %177 = vst.msk [vmem:[%s164] sm:$0xff] %vm176, %v173
    %s178 = scalar_lea.vmem [#allocation1], 48
    %s179 = scalar_lea.vmem [#allocation0], 96
    %s180 = scalar_lea.vmem %s179, 7 [#allocation0]
    %v181 = vld [vmem:[%s180] ss:$-1 sm:$0xff]
    %v182 = vrot.slane %v181, 1
    %183 = vst [vmem:[%s178] sm:$0xff] %v182
    %s184 = scalar_lea.vmem %s179, 8 [#allocation0]
    %s185 = scalar_lea.vmem %s184, 7 [#allocation0]
    %v186 = vld [vmem:[%s185] ss:$-1 sm:$0xff]
    %v187 = vrot.slane %v186, 1
    %v188 = vlaneseq
    %v189 = vshrl.u32 %v188, 7
    %vm190 = vcmp.lt.s32.totalorder %v189, 7
    %191 = vst.msk [vmem:[%s178] sm:$0xff] %vm190, %v187
    %s192 = scalar_lea.vmem [#allocation1], 56
    %s193 = scalar_lea.vmem [#allocation0], 112
    %s194 = scalar_lea.vmem %s193, 7 [#allocation0]
    %v195 = vld [vmem:[%s194] ss:$-1 sm:$0xff]
    %v196 = vrot.slane %v195, 1
    %197 = vst [vmem:[%s192] sm:$0xff] %v196
    %s198 = scalar_lea.vmem %s193, 8 [#allocation0]
    %s199 = scalar_lea.vmem %s198, 7 [#allocation0]
    %v200 = vld [vmem:[%s199] ss:$-1 sm:$0xff]
    %v201 = vrot.slane %v200, 1
    %v202 = vlaneseq
    %v203 = vshrl.u32 %v202, 7
    %vm204 = vcmp.lt.s32.totalorder %v203, 7
    %205 = vst.msk [vmem:[%s192] sm:$0xff] %vm204, %v201
    %s206 = scalar_lea.vmem [#allocation1], 64
    %s207 = scalar_lea.vmem [#allocation0], 128
    %s208 = scalar_lea.vmem %s207, 7 [#allocation0]
    %v209 = vld [vmem:[%s208] ss:$-1 sm:$0xff]
    %v210 = vrot.slane %v209, 1
    %211 = vst [vmem:[%s206] sm:$0xff] %v210
    %s212 = scalar_lea.vmem %s207, 8 [#allocation0]
    %s213 = scalar_lea.vmem %s212, 7 [#allocation0]
    %v214 = vld [vmem:[%s213] ss:$-1 sm:$0xff]
    %v215 = vrot.slane %v214, 1
    %v216 = vlaneseq
    %v217 = vshrl.u32 %v216, 7
    %vm218 = vcmp.lt.s32.totalorder %v217, 7
    %219 = vst.msk [vmem:[%s206] sm:$0xff] %vm218, %v215
    %s220 = scalar_lea.vmem [#allocation1], 72
    %s221 = scalar_lea.vmem [#allocation0], 144
    %s222 = scalar_lea.vmem %s221, 7 [#allocation0]
    %v223 = vld [vmem:[%s222] ss:$-1 sm:$0xff]
    %v224 = vrot.slane %v223, 1
    %225 = vst [vmem:[%s220] sm:$0xff] %v224
    %s226 = scalar_lea.vmem %s221, 8 [#allocation0]
    %s227 = scalar_lea.vmem %s226, 7 [#allocation0]
    %v228 = vld [vmem:[%s227] ss:$-1 sm:$0xff]
    %v229 = vrot.slane %v228, 1
    %v230 = vlaneseq
    %v231 = vshrl.u32 %v230, 7
    %vm232 = vcmp.lt.s32.totalorder %v231, 7
    %233 = vst.msk [vmem:[%s220] sm:$0xff] %vm232, %v229
    %s234 = scalar_lea.vmem [#allocation1], 80
    %s235 = scalar_lea.vmem [#allocation0], 160
    %s236 = scalar_lea.vmem %s235, 7 [#allocation0]
    %v237 = vld [vmem:[%s236] ss:$-1 sm:$0xff]
    %v238 = vrot.slane %v237, 1
    %239 = vst [vmem:[%s234] sm:$0xff] %v238
    %s240 = scalar_lea.vmem %s235, 8 [#allocation0]
    %s241 = scalar_lea.vmem %s240, 7 [#allocation0]
    %v242 = vld [vmem:[%s241] ss:$-1 sm:$0xff]
    %v243 = vrot.slane %v242, 1
    %v244 = vlaneseq
    %v245 = vshrl.u32 %v244, 7
    %vm246 = vcmp.lt.s32.totalorder %v245, 7
    %247 = vst.msk [vmem:[%s234] sm:$0xff] %vm246, %v243
    %s248 = scalar_lea.vmem [#allocation1], 88
    %s249 = scalar_lea.vmem [#allocation0], 176
    %s250 = scalar_lea.vmem %s249, 7 [#allocation0]
    %v251 = vld [vmem:[%s250] ss:$-1 sm:$0xff]
    %v252 = vrot.slane %v251, 1
    %253 = vst [vmem:[%s248] sm:$0xff] %v252
    %s254 = scalar_lea.vmem %s249, 8 [#allocation0]
    %s255 = scalar_lea.vmem %s254, 7 [#allocation0]
    %v256 = vld [vmem:[%s255] ss:$-1 sm:$0xff]
    %v257 = vrot.slane %v256, 1
    %v258 = vlaneseq
    %v259 = vshrl.u32 %v258, 7
    %vm260 = vcmp.lt.s32.totalorder %v259, 7
    %261 = vst.msk [vmem:[%s248] sm:$0xff] %vm260, %v257
    %s262 = scalar_lea.vmem [#allocation1], 96
    %s263 = scalar_lea.vmem [#allocation0], 192
    %s264 = scalar_lea.vmem %s263, 7 [#allocation0]
    %v265 = vld [vmem:[%s264] ss:$-1 sm:$0xff]
    %v266 = vrot.slane %v265, 1
    %267 = vst [vmem:[%s262] sm:$0xff] %v266
    %s268 = scalar_lea.vmem %s263, 8 [#allocation0]
    %s269 = scalar_lea.vmem %s268, 7 [#allocation0]
    %v270 = vld [vmem:[%s269] ss:$-1 sm:$0xff]
    %v271 = vrot.slane %v270, 1
    %v272 = vlaneseq
    %v273 = vshrl.u32 %v272, 7
    %vm274 = vcmp.lt.s32.totalorder %v273, 7
    %275 = vst.msk [vmem:[%s262] sm:$0xff] %vm274, %v271
    %s276 = scalar_lea.vmem [#allocation1], 104
    %s277 = scalar_lea.vmem [#allocation0], 208
    %s278 = scalar_lea.vmem %s277, 7 [#allocation0]
    %v279 = vld [vmem:[%s278] ss:$-1 sm:$0xff]
    %v280 = vrot.slane %v279, 1
    %281 = vst [vmem:[%s276] sm:$0xff] %v280
    %s282 = scalar_lea.vmem %s277, 8 [#allocation0]
    %s283 = scalar_lea.vmem %s282, 7 [#allocation0]
    %v284 = vld [vmem:[%s283] ss:$-1 sm:$0xff]
    %v285 = vrot.slane %v284, 1
    %v286 = vlaneseq
    %v287 = vshrl.u32 %v286, 7
    %vm288 = vcmp.lt.s32.totalorder %v287, 7
    %289 = vst.msk [vmem:[%s276] sm:$0xff] %vm288, %v285
    %s290 = scalar_lea.vmem [#allocation1], 112
    %s291 = scalar_lea.vmem [#allocation0], 224
    %s292 = scalar_lea.vmem %s291, 7 [#allocation0]
    %v293 = vld [vmem:[%s292] ss:$-1 sm:$0xff]
    %v294 = vrot.slane %v293, 1
    %295 = vst [vmem:[%s290] sm:$0xff] %v294
    %s296 = scalar_lea.vmem %s291, 8 [#allocation0]
    %s297 = scalar_lea.vmem %s296, 7 [#allocation0]
    %v298 = vld [vmem:[%s297] ss:$-1 sm:$0xff]
    %v299 = vrot.slane %v298, 1
    %v300 = vlaneseq
    %v301 = vshrl.u32 %v300, 7
    %vm302 = vcmp.lt.s32.totalorder %v301, 7
    %303 = vst.msk [vmem:[%s290] sm:$0xff] %vm302, %v299
    %s304 = scalar_lea.vmem [#allocation1], 120
    %s305 = scalar_lea.vmem [#allocation0], 240
    %s306 = scalar_lea.vmem %s305, 7 [#allocation0]
    %v307 = vld [vmem:[%s306] ss:$-1 sm:$0xff]
    %v308 = vrot.slane %v307, 1
    %309 = vst [vmem:[%s304] sm:$0xff] %v308
    %s310 = scalar_lea.vmem %s305, 8 [#allocation0]
    %s311 = scalar_lea.vmem %s310, 7 [#allocation0]
    %v312 = vld [vmem:[%s311] ss:$-1 sm:$0xff]
    %v313 = vrot.slane %v312, 1
    %v314 = vlaneseq
    %v315 = vshrl.u32 %v314, 7
    %vm316 = vcmp.lt.s32.totalorder %v315, 7
    %317 = vst.msk [vmem:[%s304] sm:$0xff] %vm316, %v313
    // Predicated region
    $region36: #{reverse.7} parent=1 // pred_check
      _
    $region37: #{reverse.7} parent=1 // pred_check_branch
      %319 = sbr.rel (0) target = $region39
    $region38: #{reverse.7} parent=1 // pred_region
      // Predicated region
      $region40: #{reverse.7} parent=38 // pred_check
        _
      $region41: #{reverse.7} parent=38 // pred_check_branch
        %321 = sbr.rel (0) target = $region43
      $region42: #{reverse.7} parent=38 // pred_region
        // Predicated region
        $region55: #{reverse.7} parent=42 // pred_check
          _
        $region56: #{reverse.7} parent=42 // pred_check_branch
          %367 = sbr.rel (0) target = $region58
        $region57: #{reverse.7} parent=42 // pred_region
          loop: start=0, step=1, limit=1
          $region59: #{reverse.7} parent=57 // loop_pre_header
            _
          $region60: #{reverse.7} parent=57 // loop_header
            %s369 = sphi 0, %s373
            %p370 = scmp.ge.s32.totalorder %s369, 1
            %s374 = sphi [#allocation1], [#allocation1]
            %s375 = sphi %s1, %s1
          $region61: #{reverse.7} parent=57 // loop_header_branch
            %372 = sbr.rel (%p370) target = $region65
          $region62: #{reverse.7} parent=57 // loop_body
            %v376 = vld [vmem:[%s374] sm:$0xff]
            %377 = vst [vmem:[%s375] sm:$0xff] %v376
            %v378 = vld [vmem:[%s374 + $0x8] sm:$0xff]
            %379 = vst [vmem:[%s375 + $0x8] sm:$0xff] %v378
            %v380 = vld [vmem:[%s374 + $0x10] sm:$0xff]
            %381 = vst [vmem:[%s375 + $0x10] sm:$0xff] %v380
            %v382 = vld [vmem:[%s374 + $0x18] sm:$0xff]
            %383 = vst [vmem:[%s375 + $0x18] sm:$0xff] %v382
            %v384 = vld [vmem:[%s374 + $0x20] sm:$0xff]
            %385 = vst [vmem:[%s375 + $0x20] sm:$0xff] %v384
            %v386 = vld [vmem:[%s374 + $0x28] sm:$0xff]
            %387 = vst [vmem:[%s375 + $0x28] sm:$0xff] %v386
            %v388 = vld [vmem:[%s374 + $0x30] sm:$0xff]
            %389 = vst [vmem:[%s375 + $0x30] sm:$0xff] %v388
            %v390 = vld [vmem:[%s374 + $0x38] sm:$0xff]
            %391 = vst [vmem:[%s375 + $0x38] sm:$0xff] %v390
            %v392 = vld [vmem:[%s374 + $0x40] sm:$0xff]
            %393 = vst [vmem:[%s375 + $0x40] sm:$0xff] %v392
            %v394 = vld [vmem:[%s374 + $0x48] sm:$0xff]
            %395 = vst [vmem:[%s375 + $0x48] sm:$0xff] %v394
            %v396 = vld [vmem:[%s374 + $0x50] sm:$0xff]
            %397 = vst [vmem:[%s375 + $0x50] sm:$0xff] %v396
            %v398 = vld [vmem:[%s374 + $0x58] sm:$0xff]
            %399 = vst [vmem:[%s375 + $0x58] sm:$0xff] %v398
            %v400 = vld [vmem:[%s374 + $0x60] sm:$0xff]
            %401 = vst [vmem:[%s375 + $0x60] sm:$0xff] %v400
            %v402 = vld [vmem:[%s374 + $0x68] sm:$0xff]
            %403 = vst [vmem:[%s375 + $0x68] sm:$0xff] %v402
            %v404 = vld [vmem:[%s374 + $0x70] sm:$0xff]
            %405 = vst [vmem:[%s375 + $0x70] sm:$0xff] %v404
            %v406 = vld [vmem:[%s374 + $0x78] sm:$0xff]
            %407 = vst [vmem:[%s375 + $0x78] sm:$0xff] %v406
          $region63: #{reverse.7} parent=57 // loop_footer
            %s373 = sadd.s32 1, %s369
          $region64: #{reverse.7} parent=57 // loop_footer_branch
            %368 = sbr.rel target = $region60
          $region65: #{reverse.7} parent=57 // loop_exit
            _
        $region58: #{reverse.7} parent=42 // pred_fallthru
          _
        // Predicated region
        $region66: #{reverse.7} parent=42 // pred_check
          _
        $region67: #{reverse.7} parent=42 // pred_check_branch
          %409 = sbr.rel target = $region69
        $region68: #{reverse.7} parent=42 // pred_region
          _
        $region69: #{reverse.7} parent=42 // pred_fallthru
          _
      $region43: #{reverse.7} parent=38 // pred_fallthru
        _
      // Predicated region
      $region44: #{reverse.7} parent=38 // pred_check
        _
      $region45: #{reverse.7} parent=38 // pred_check_branch
        %323 = sbr.rel target = $region47
      $region46: #{reverse.7} parent=38 // pred_region
        %s325 = ssub.s32 256, 1
        loop: start=0, step=1, limit=1
        $region48: #{reverse.7} parent=46 // loop_pre_header
          _
        $region49: #{reverse.7} parent=46 // loop_header
          %s327 = sphi 0, %s331
          %p328 = scmp.ge.s32.totalorder %s327, 1
          %s332 = sphi [#allocation1], [#allocation1]
          %s333 = sphi %s1, %s1
        $region50: #{reverse.7} parent=46 // loop_header_branch
          %330 = sbr.rel (%p328) target = $region54
        $region51: #{reverse.7} parent=46 // loop_body
          %v334 = vld [vmem:[%s332] sm:%s325]
          %335 = vst [vmem:[%s333] sm:%s325] %v334
          %v336 = vld [vmem:[%s332 + $0x8] sm:%s325]
          %337 = vst [vmem:[%s333 + $0x8] sm:%s325] %v336
          %v338 = vld [vmem:[%s332 + $0x10] sm:%s325]
          %339 = vst [vmem:[%s333 + $0x10] sm:%s325] %v338
          %v340 = vld [vmem:[%s332 + $0x18] sm:%s325]
          %341 = vst [vmem:[%s333 + $0x18] sm:%s325] %v340
          %v342 = vld [vmem:[%s332 + $0x20] sm:%s325]
          %343 = vst [vmem:[%s333 + $0x20] sm:%s325] %v342
          %v344 = vld [vmem:[%s332 + $0x28] sm:%s325]
          %345 = vst [vmem:[%s333 + $0x28] sm:%s325] %v344
          %v346 = vld [vmem:[%s332 + $0x30] sm:%s325]
          %347 = vst [vmem:[%s333 + $0x30] sm:%s325] %v346
          %v348 = vld [vmem:[%s332 + $0x38] sm:%s325]
          %349 = vst [vmem:[%s333 + $0x38] sm:%s325] %v348
          %v350 = vld [vmem:[%s332 + $0x40] sm:%s325]
          %351 = vst [vmem:[%s333 + $0x40] sm:%s325] %v350
          %v352 = vld [vmem:[%s332 + $0x48] sm:%s325]
          %353 = vst [vmem:[%s333 + $0x48] sm:%s325] %v352
          %v354 = vld [vmem:[%s332 + $0x50] sm:%s325]
          %355 = vst [vmem:[%s333 + $0x50] sm:%s325] %v354
          %v356 = vld [vmem:[%s332 + $0x58] sm:%s325]
          %357 = vst [vmem:[%s333 + $0x58] sm:%s325] %v356
          %v358 = vld [vmem:[%s332 + $0x60] sm:%s325]
          %359 = vst [vmem:[%s333 + $0x60] sm:%s325] %v358
          %v360 = vld [vmem:[%s332 + $0x68] sm:%s325]
          %361 = vst [vmem:[%s333 + $0x68] sm:%s325] %v360
          %v362 = vld [vmem:[%s332 + $0x70] sm:%s325]
          %363 = vst [vmem:[%s333 + $0x70] sm:%s325] %v362
          %v364 = vld [vmem:[%s332 + $0x78] sm:%s325]
          %365 = vst [vmem:[%s333 + $0x78] sm:%s325] %v364
        $region52: #{reverse.7} parent=46 // loop_footer
          %s331 = sadd.s32 1, %s327
        $region53: #{reverse.7} parent=46 // loop_footer_branch
          %326 = sbr.rel target = $region49
        $region54: #{reverse.7} parent=46 // loop_exit
          _
      $region47: #{reverse.7} parent=38 // pred_fallthru
        _
    $region39: #{reverse.7} parent=1 // pred_fallthru
      _
    %410 = vnop

// kernel: attfno_forward.5
$region0: #{attfno_forward.5}
  #allocation0 [shape = 'u32[]', space=smem, size = 0x4, offset = 0x4, fixed_abs, tag = 'smem constant byte address 0x4 - core index']
  #allocation1 [shape = 'u32[144,128]{1,0:T(1,128)}', space=vmem, size = 0x12000, scoped, tag = 'internal scratch']
  #allocation2 [shape = 'f32[16,290]{1,0:T(8,128)}', space=vmem, size = 0x6000, scoped, tag = 'scratch operand']
  %s0 = inlined_call_operand.vmem [shape: f32[3,256], index: 0, kind: input, shape index: {}]
  %s1 = inlined_call_operand.vmem [shape: f32[2,8,256], index: 1, kind: input, shape index: {}]
  %s2 = inlined_call_operand.vmem [shape: f32[2,8,256], index: 2, kind: input, shape index: {}]
  %s3 = inlined_call_operand.vmem [shape: bf16[16,72], index: 3, kind: input, shape index: {}]
  %s4 = inlined_call_operand.vmem [shape: f32[16,1], index: 4, kind: input, shape index: {}]
  %s5 = inlined_call_operand.vmem [shape: bf16[2,16,144], index: 5, kind: input, shape index: {}]
  %s6 = inlined_call_operand.vmem [shape: f32[2,16,1], index: 6, kind: input, shape index: {}]
  %s7 = inlined_call_operand.vmem [shape: f32[2,2,16,1], index: 7, kind: input, shape index: {}]
  %s8 = inlined_call_operand.vmem [shape: f32[2,2,16,1], index: 8, kind: input, shape index: {}]
  %s9 = inlined_call_operand.vmem [shape: bf16[8,16], index: 9, kind: input, shape index: {}]
  %s10 = inlined_call_operand.vmem [shape: f32[8,1], index: 10, kind: input, shape index: {}]
  %s11 = inlined_call_operand.vmem [shape: f32[2,8,256], index: 11, kind: output, shape index: {}]
  %s12 = sld [smem:[#allocation0]]
  $region153: #{attfno_forward.5} parent=0
    _
  %s14 = ssub.s32 1, %s12
  %s15 = scalar_select 0, %s14, %s12
  $region1: #{attfno_forward.5} parent=0
    #allocation3 [shape = 'u8[32768]{0}', space=vmem, size = 0x8000, scoped, tag = 'input window, operand 7']
    #allocation4 [shape = 'u8[32768]{0}', space=vmem, size = 0x8000, scoped, tag = 'input window, operand 8']
    loop: start=0, step=1, limit=4
    $region2: #{attfno_forward.5} parent=1 // loop_pre_header
      _
    $region3: #{attfno_forward.5} parent=1 // loop_header
      %s17 = sphi 0, %s21
      %p18 = scmp.ge.s32.totalorder %s17, 4
      %s25 = sphi 0, %s25
      %s27 = sphi 0, %s25
      %s28 = sphi 0, %s27
      %s42 = sphi 0, %s28
      %s48 = sphi 0, %s50
      %s51 = sphi 0, %s48
      %s52 = sphi 0, %s51
      %s68 = sphi 0, %s52
      %s74 = sphi 0, %s76
      %s77 = sphi 0, %s74
      %s78 = sphi 0, %s77
      %s94 = sphi 0, %s78
      %s98 = sphi 0, %s98
      %s100 = sphi 0, %s98
      %s101 = sphi 0, %s100
      %s115 = sphi 0, %s101
      %s119 = sphi 0, %s119
      %s121 = sphi 0, %s119
      %s122 = sphi 0, %s121
      %s136 = sphi 0, %s122
      %s140 = sphi 0, %s140
      %s142 = sphi 0, %s140
      %s143 = sphi 0, %s142
      %s157 = sphi 0, %s143
      %s161 = sphi 0, %s161
      %s163 = sphi 0, %s161
      %s164 = sphi 0, %s163
      %s178 = sphi 0, %s164
      %s184 = sphi 0, %s186
      %s187 = sphi 0, %s184
      %s188 = sphi 0, %s187
      %s204 = sphi 0, %s188
      %s210 = sphi 0, %s212
      %s213 = sphi 0, %s210
      %s214 = sphi 0, %s213
      %s230 = sphi 0, %s214
      %s234 = sphi 0, %s234
      %s236 = sphi 0, %s234
      %s237 = sphi 0, %s236
      %s251 = sphi 0, %s237
      %s255 = sphi 0, %s255
      %s257 = sphi 0, %s255
      %s258 = sphi 0, %s257
      %s272 = sphi 0, %s258
      %s278 = sphi 0, %s280
      %s281 = sphi 0, %s278
      %s282 = sphi 0, %s281
      %s298 = sphi 0, %s282
    $region4: #{attfno_forward.5} parent=1 // loop_header_branch
      %20 = sbr.rel (%p18) target = $region8
    $region5: #{attfno_forward.5} parent=1 // loop_body
      %s22 = ssub.s32 %s17, 1
      %s23 = ssub.s32 %s17, 2
      %s24 = sadd.s32 %s17, 1
      %s26 = sadd.s32 %s25, 1
      %p29 = scmp.eq.s32.totalorder %s17, 1
      %p30 = scmp.ne.s32.totalorder %s25, %s27
      %p31 = scmp.eq.s32.totalorder %s17, 0
      %p32 = por %p30, %p31
      %p33 = scmp.ne.s32.totalorder %s25, %s27
      %p34 = scmp.eq.s32.totalorder %s22, 1
      %p35 = por %p33, %p34
      %p36 = scmp.ne.s32.totalorder %s27, %s28
      %p37 = scmp.eq.s32.totalorder %s22, 0
      %p38 = por %p36, %p37
      %p39 = scmp.ne.s32.totalorder %s27, %s28
      %p40 = scmp.eq.s32.totalorder %s23, 1
      %p41 = por %p39, %p40
      %p43 = scmp.ne.s32.totalorder %s28, %s42
      %p44 = scmp.eq.s32.totalorder %s23, 0
      %p45 = por %p43, %p44
      %s46 = ssub.s32 %s17, %s24
      %p47 = scmp.eq.s32.totalorder %s46, 0
      %s49 = sadd.s32 %s48, 1
      %s50 = scalar_select %p47, %s48, %s49
      %p53 = pneg %p47
      %p54 = scmp.eq.s32.totalorder %s17, 1
      %p55 = por %p53, %p54
      %p56 = scmp.ne.s32.totalorder %s48, %s51
      %p57 = scmp.eq.s32.totalorder %s17, 0
      %p58 = por %p56, %p57
      %p59 = scmp.ne.s32.totalorder %s48, %s51
      %p60 = scmp.eq.s32.totalorder %s22, 1
      %p61 = por %p59, %p60
      %p62 = scmp.ne.s32.totalorder %s51, %s52
      %p63 = scmp.eq.s32.totalorder %s22, 0
      %p64 = por %p62, %p63
      %p65 = scmp.ne.s32.totalorder %s51, %s52
      %p66 = scmp.eq.s32.totalorder %s23, 1
      %p67 = por %p65, %p66
      %p69 = scmp.ne.s32.totalorder %s52, %s68
      %p70 = scmp.eq.s32.totalorder %s23, 0
      %p71 = por %p69, %p70
      %s72 = ssub.s32 %s17, %s24
      %p73 = scmp.eq.s32.totalorder %s72, 0
      %s75 = sadd.s32 %s74, 1
      %s76 = scalar_select %p73, %s74, %s75
      %p79 = pneg %p73
      %p80 = scmp.eq.s32.totalorder %s17, 1
      %p81 = por %p79, %p80
      %p82 = scmp.ne.s32.totalorder %s74, %s77
      %p83 = scmp.eq.s32.totalorder %s17, 0
      %p84 = por %p82, %p83
      %p85 = scmp.ne.s32.totalorder %s74, %s77
      %p86 = scmp.eq.s32.totalorder %s22, 1
      %p87 = por %p85, %p86
      %p88 = scmp.ne.s32.totalorder %s77, %s78
      %p89 = scmp.eq.s32.totalorder %s22, 0
      %p90 = por %p88, %p89
      %p91 = scmp.ne.s32.totalorder %s77, %s78
      %p92 = scmp.eq.s32.totalorder %s23, 1
      %p93 = por %p91, %p92
      %p95 = scmp.ne.s32.totalorder %s78, %s94
      %p96 = scmp.eq.s32.totalorder %s23, 0
      %p97 = por %p95, %p96
      %s99 = sadd.s32 %s98, 1
      %p102 = scmp.eq.s32.totalorder %s17, 1
      %p103 = scmp.ne.s32.totalorder %s98, %s100
      %p104 = scmp.eq.s32.totalorder %s17, 0
      %p105 = por %p103, %p104
      %p106 = scmp.ne.s32.totalorder %s98, %s100
      %p107 = scmp.eq.s32.totalorder %s22, 1
      %p108 = por %p106, %p107
      %p109 = scmp.ne.s32.totalorder %s100, %s101
      %p110 = scmp.eq.s32.totalorder %s22, 0
      %p111 = por %p109, %p110
      %p112 = scmp.ne.s32.totalorder %s100, %s101
      %p113 = scmp.eq.s32.totalorder %s23, 1
      %p114 = por %p112, %p113
      %p116 = scmp.ne.s32.totalorder %s101, %s115
      %p117 = scmp.eq.s32.totalorder %s23, 0
      %p118 = por %p116, %p117
      %s120 = sadd.s32 %s119, 1
      %p123 = scmp.eq.s32.totalorder %s17, 1
      %p124 = scmp.ne.s32.totalorder %s119, %s121
      %p125 = scmp.eq.s32.totalorder %s17, 0
      %p126 = por %p124, %p125
      %p127 = scmp.ne.s32.totalorder %s119, %s121
      %p128 = scmp.eq.s32.totalorder %s22, 1
      %p129 = por %p127, %p128
      %p130 = scmp.ne.s32.totalorder %s121, %s122
      %p131 = scmp.eq.s32.totalorder %s22, 0
      %p132 = por %p130, %p131
      %p133 = scmp.ne.s32.totalorder %s121, %s122
      %p134 = scmp.eq.s32.totalorder %s23, 1
      %p135 = por %p133, %p134
      %p137 = scmp.ne.s32.totalorder %s122, %s136
      %p138 = scmp.eq.s32.totalorder %s23, 0
      %p139 = por %p137, %p138
      %s141 = sadd.s32 %s140, 1
      %p144 = scmp.eq.s32.totalorder %s17, 1
      %p145 = scmp.ne.s32.totalorder %s140, %s142
      %p146 = scmp.eq.s32.totalorder %s17, 0
      %p147 = por %p145, %p146
      %p148 = scmp.ne.s32.totalorder %s140, %s142
      %p149 = scmp.eq.s32.totalorder %s22, 1
      %p150 = por %p148, %p149
      %p151 = scmp.ne.s32.totalorder %s142, %s143
      %p152 = scmp.eq.s32.totalorder %s22, 0
      %p153 = por %p151, %p152
      %p154 = scmp.ne.s32.totalorder %s142, %s143
      %p155 = scmp.eq.s32.totalorder %s23, 1
      %p156 = por %p154, %p155
      %p158 = scmp.ne.s32.totalorder %s143, %s157
      %p159 = scmp.eq.s32.totalorder %s23, 0
      %p160 = por %p158, %p159
      %s162 = sadd.s32 %s161, 1
      %p165 = scmp.eq.s32.totalorder %s17, 1
      %p166 = scmp.ne.s32.totalorder %s161, %s163
      %p167 = scmp.eq.s32.totalorder %s17, 0
      %p168 = por %p166, %p167
      %p169 = scmp.ne.s32.totalorder %s161, %s163
      %p170 = scmp.eq.s32.totalorder %s22, 1
      %p171 = por %p169, %p170
      %p172 = scmp.ne.s32.totalorder %s163, %s164
      %p173 = scmp.eq.s32.totalorder %s22, 0
      %p174 = por %p172, %p173
      %p175 = scmp.ne.s32.totalorder %s163, %s164
      %p176 = scmp.eq.s32.totalorder %s23, 1
      %p177 = por %p175, %p176
      %p179 = scmp.ne.s32.totalorder %s164, %s178
      %p180 = scmp.eq.s32.totalorder %s23, 0
      %p181 = por %p179, %p180
      %s182 = ssub.s32 %s17, %s24
      %p183 = scmp.eq.s32.totalorder %s182, 0
      %s185 = sadd.s32 %s184, 1
      %s186 = scalar_select %p183, %s184, %s185
      %p189 = pneg %p183
      %p190 = scmp.eq.s32.totalorder %s17, 1
      %p191 = por %p189, %p190
      %p192 = scmp.ne.s32.totalorder %s184, %s187
      %p193 = scmp.eq.s32.totalorder %s17, 0
      %p194 = por %p192, %p193
      %p195 = scmp.ne.s32.totalorder %s184, %s187
      %p196 = scmp.eq.s32.totalorder %s22, 1
      %p197 = por %p195, %p196
      %p198 = scmp.ne.s32.totalorder %s187, %s188
      %p199 = scmp.eq.s32.totalorder %s22, 0
      %p200 = por %p198, %p199
      %p201 = scmp.ne.s32.totalorder %s187, %s188
      %p202 = scmp.eq.s32.totalorder %s23, 1
      %p203 = por %p201, %p202
      %p205 = scmp.ne.s32.totalorder %s188, %s204
      %p206 = scmp.eq.s32.totalorder %s23, 0
      %p207 = por %p205, %p206
      %s208 = ssub.s32 %s17, %s24
      %p209 = scmp.eq.s32.totalorder %s208, 0
      %s211 = sadd.s32 %s210, 1
      %s212 = scalar_select %p209, %s210, %s211
      %p215 = pneg %p209
      %p216 = scmp.eq.s32.totalorder %s17, 1
      %p217 = por %p215, %p216
      %p218 = scmp.ne.s32.totalorder %s210, %s213
      %p219 = scmp.eq.s32.totalorder %s17, 0
      %p220 = por %p218, %p219
      %p221 = scmp.ne.s32.totalorder %s210, %s213
      %p222 = scmp.eq.s32.totalorder %s22, 1
      %p223 = por %p221, %p222
      %p224 = scmp.ne.s32.totalorder %s213, %s214
      %p225 = scmp.eq.s32.totalorder %s22, 0
      %p226 = por %p224, %p225
      %p227 = scmp.ne.s32.totalorder %s213, %s214
      %p228 = scmp.eq.s32.totalorder %s23, 1
      %p229 = por %p227, %p228
      %p231 = scmp.ne.s32.totalorder %s214, %s230
      %p232 = scmp.eq.s32.totalorder %s23, 0
      %p233 = por %p231, %p232
      %s235 = sadd.s32 %s234, 1
      %p238 = scmp.eq.s32.totalorder %s17, 1
      %p239 = scmp.ne.s32.totalorder %s234, %s236
      %p240 = scmp.eq.s32.totalorder %s17, 0
      %p241 = por %p239, %p240
      %p242 = scmp.ne.s32.totalorder %s234, %s236
      %p243 = scmp.eq.s32.totalorder %s22, 1
      %p244 = por %p242, %p243
      %p245 = scmp.ne.s32.totalorder %s236, %s237
      %p246 = scmp.eq.s32.totalorder %s22, 0
      %p247 = por %p245, %p246
      %p248 = scmp.ne.s32.totalorder %s236, %s237
      %p249 = scmp.eq.s32.totalorder %s23, 1
      %p250 = por %p248, %p249
      %p252 = scmp.ne.s32.totalorder %s237, %s251
      %p253 = scmp.eq.s32.totalorder %s23, 0
      %p254 = por %p252, %p253
      %s256 = sadd.s32 %s255, 1
      %p259 = scmp.eq.s32.totalorder %s17, 1
      %p260 = scmp.ne.s32.totalorder %s255, %s257
      %p261 = scmp.eq.s32.totalorder %s17, 0
      %p262 = por %p260, %p261
      %p263 = scmp.ne.s32.totalorder %s255, %s257
      %p264 = scmp.eq.s32.totalorder %s22, 1
      %p265 = por %p263, %p264
      %p266 = scmp.ne.s32.totalorder %s257, %s258
      %p267 = scmp.eq.s32.totalorder %s22, 0
      %p268 = por %p266, %p267
      %p269 = scmp.ne.s32.totalorder %s257, %s258
      %p270 = scmp.eq.s32.totalorder %s23, 1
      %p271 = por %p269, %p270
      %p273 = scmp.ne.s32.totalorder %s258, %s272
      %p274 = scmp.eq.s32.totalorder %s23, 0
      %p275 = por %p273, %p274
      %s276 = ssub.s32 %s17, %s24
      %p277 = scmp.eq.s32.totalorder %s276, 0
      %s279 = sadd.s32 %s278, 1
      %s280 = scalar_select %p277, %s278, %s279
      %p283 = pneg %p277
      %p284 = scmp.eq.s32.totalorder %s17, 1
      %p285 = por %p283, %p284
      %p286 = scmp.ne.s32.totalorder %s278, %s281
      %p287 = scmp.eq.s32.totalorder %s17, 0
      %p288 = por %p286, %p287
      %p289 = scmp.ne.s32.totalorder %s278, %s281
      %p290 = scmp.eq.s32.totalorder %s22, 1
      %p291 = por %p289, %p290
      %p292 = scmp.ne.s32.totalorder %s281, %s282
      %p293 = scmp.eq.s32.totalorder %s22, 0
      %p294 = por %p292, %p293
      %p295 = scmp.ne.s32.totalorder %s281, %s282
      %p296 = scmp.eq.s32.totalorder %s23, 1
      %p297 = por %p295, %p296
      %p299 = scmp.ne.s32.totalorder %s282, %s298
      %p300 = scmp.eq.s32.totalorder %s23, 0
      %p301 = por %p299, %p300
      %p302 = scmp.le.s32.totalorder 1, %s17
      %p303 = scmp.lt.s32.totalorder %s17, 3
      %p304 = pnand %p302, %p303
      %p305 = pneg %p304
      // Predicated region
      $region9: #{attfno_forward.5} parent=5 // pred_check
        _
      $region10: #{attfno_forward.5} parent=5 // pred_check_branch
        %307 = sbr.rel (%p304) target = $region12
      $region11: #{attfno_forward.5} parent=5 // pred_region
        %s308 = ssub.s32 %s17, 1
        // Predicated region
        $region13: #{attfno_forward.5} parent=11 // pred_check
          %p309 = pneg %p38
        $region14: #{attfno_forward.5} parent=11 // pred_check_branch
          %311 = sbr.rel (%p309) target = $region16
        $region15: #{attfno_forward.5} parent=11 // pred_region
          _
        $region16: #{attfno_forward.5} parent=11 // pred_fallthru
          _
        // Predicated region
        $region17: #{attfno_forward.5} parent=11 // pred_check
          %p312 = pneg %p111
        $region18: #{attfno_forward.5} parent=11 // pred_check_branch
          %314 = sbr.rel (%p312) target = $region20
        $region19: #{attfno_forward.5} parent=11 // pred_region
          _
        $region20: #{attfno_forward.5} parent=11 // pred_fallthru
          _
        // Predicated region
        $region21: #{attfno_forward.5} parent=11 // pred_check
          %p315 = pneg %p132
        $region22: #{attfno_forward.5} parent=11 // pred_check_branch
          %317 = sbr.rel (%p315) target = $region24
        $region23: #{attfno_forward.5} parent=11 // pred_region
          _
        $region24: #{attfno_forward.5} parent=11 // pred_fallthru
          _
        // Predicated region
        $region25: #{attfno_forward.5} parent=11 // pred_check
          %p318 = pneg %p153
        $region26: #{attfno_forward.5} parent=11 // pred_check_branch
          %320 = sbr.rel (%p318) target = $region28
        $region27: #{attfno_forward.5} parent=11 // pred_region
          _
        $region28: #{attfno_forward.5} parent=11 // pred_fallthru
          _
        // Predicated region
        $region29: #{attfno_forward.5} parent=11 // pred_check
          %p321 = pneg %p174
        $region30: #{attfno_forward.5} parent=11 // pred_check_branch
          %323 = sbr.rel (%p321) target = $region32
        $region31: #{attfno_forward.5} parent=11 // pred_region
          _
        $region32: #{attfno_forward.5} parent=11 // pred_fallthru
          _
        // Predicated region
        $region33: #{attfno_forward.5} parent=11 // pred_check
          %p324 = pneg %p247
        $region34: #{attfno_forward.5} parent=11 // pred_check_branch
          %326 = sbr.rel (%p324) target = $region36
        $region35: #{attfno_forward.5} parent=11 // pred_region
          _
        $region36: #{attfno_forward.5} parent=11 // pred_fallthru
          _
        // Predicated region
        $region37: #{attfno_forward.5} parent=11 // pred_check
          %p327 = pneg %p268
        $region38: #{attfno_forward.5} parent=11 // pred_check_branch
          %329 = sbr.rel (%p327) target = $region40
        $region39: #{attfno_forward.5} parent=11 // pred_region
          _
        $region40: #{attfno_forward.5} parent=11 // pred_fallthru
          _
      $region12: #{attfno_forward.5} parent=5 // pred_fallthru
        _
      %p330 = scmp.lt.s32.totalorder %s17, 2
      // Predicated region
      $region41: #{attfno_forward.5} parent=5 // pred_check
        %p331 = pneg %p330
      $region42: #{attfno_forward.5} parent=5 // pred_check_branch
        %333 = sbr.rel (%p331) target = $region44
      $region43: #{attfno_forward.5} parent=5 // pred_region
        // Predicated region
        $region45: #{attfno_forward.5} parent=43 // pred_check
          %p334 = pneg %p58
        $region46: #{attfno_forward.5} parent=43 // pred_check_branch
          %336 = sbr.rel (%p334) target = $region48
        $region47: #{attfno_forward.5} parent=43 // pred_region
          %p337 = scmp.lt.s32.totalorder %s17, 1
          %s338 = scalar_select %p337, %s17, 1
          %s339 = smul.addr %s338, 2
          %s340 = smul.addr %s339, 8
          %s341 = scalar_lea.vmem %s1, %s340
        $region48: #{attfno_forward.5} parent=43 // pred_fallthru
          _
        // Predicated region
        $region49: #{attfno_forward.5} parent=43 // pred_check
          %p342 = pneg %p84
        $region50: #{attfno_forward.5} parent=43 // pred_check_branch
          %344 = sbr.rel (%p342) target = $region52
        $region51: #{attfno_forward.5} parent=43 // pred_region
          %p345 = scmp.lt.s32.totalorder %s17, 1
          %s346 = scalar_select %p345, %s17, 1
          %s347 = smul.addr %s346, 2
          %s348 = smul.addr %s347, 8
          %s349 = scalar_lea.vmem %s2, %s348
        $region52: #{attfno_forward.5} parent=43 // pred_fallthru
          _
        // Predicated region
        $region53: #{attfno_forward.5} parent=43 // pred_check
          %p350 = pneg %p194
        $region54: #{attfno_forward.5} parent=43 // pred_check_branch
          %352 = sbr.rel (%p350) target = $region56
        $region55: #{attfno_forward.5} parent=43 // pred_region
          %s353 = sand.u32 %s184, 1
          %s354 = sand.u32 %s184, 1
          %s355 = smul.addr %s354, 32
          %s356 = scalar_lea.vmem [#allocation3], %s355
          %s357 = smul.addr %s17, 2
          %s358 = smul.addr %s357, 8
          %s359 = scalar_lea.vmem %s7, %s358
          // Predicated region
          $region57: #{attfno_forward.5} parent=55 // pred_check
            _
          $region58: #{attfno_forward.5} parent=55 // pred_check_branch
            %361 = sbr.rel (0) target = $region60
          $region59: #{attfno_forward.5} parent=55 // pred_region
            // Predicated region
            $region61: #{attfno_forward.5} parent=59 // pred_check
              _
            $region62: #{attfno_forward.5} parent=59 // pred_check_branch
              %363 = sbr.rel (0) target = $region64
            $region63: #{attfno_forward.5} parent=59 // pred_region
              // Predicated region
              $region76: #{attfno_forward.5} parent=63 // pred_check
                _
              $region77: #{attfno_forward.5} parent=63 // pred_check_branch
                %385 = sbr.rel (0) target = $region79
              $region78: #{attfno_forward.5} parent=63 // pred_region
                loop: start=0, step=1, limit=1
                $region80: #{attfno_forward.5} parent=78 // loop_pre_header
                  _
                $region81: #{attfno_forward.5} parent=78 // loop_header
                  %s387 = sphi 0, %s391
                  %p388 = scmp.ge.s32.totalorder %s387, 1
                  %s392 = sphi %s359, %s359
                  %s393 = sphi %s356, %s356
                $region82: #{attfno_forward.5} parent=78 // loop_header_branch
                  %390 = sbr.rel (%p388) target = $region86
                $region83: #{attfno_forward.5} parent=78 // loop_body
                  %v394 = vld [vmem:[%s392] sm:$0xff]
                  %395 = vst [vmem:[%s393] sm:$0xff] %v394
                  %v396 = vld [vmem:[%s392 + $0x8] sm:$0xff]
                  %397 = vst [vmem:[%s393 + $0x8] sm:$0xff] %v396
                  %v398 = vld [vmem:[%s392 + $0x20] sm:$0xff]
                  %399 = vst [vmem:[%s393 + $0x10] sm:$0xff] %v398
                  %v400 = vld [vmem:[%s392 + $0x28] sm:$0xff]
                  %401 = vst [vmem:[%s393 + $0x18] sm:$0xff] %v400
                $region84: #{attfno_forward.5} parent=78 // loop_footer
                  %s391 = sadd.s32 1, %s387
                $region85: #{attfno_forward.5} parent=78 // loop_footer_branch
                  %386 = sbr.rel target = $region81
                $region86: #{attfno_forward.5} parent=78 // loop_exit
                  _
              $region79: #{attfno_forward.5} parent=63 // pred_fallthru
                _
              // Predicated region
              $region87: #{attfno_forward.5} parent=63 // pred_check
                _
              $region88: #{attfno_forward.5} parent=63 // pred_check_branch
                %403 = sbr.rel target = $region90
              $region89: #{attfno_forward.5} parent=63 // pred_region
                _
              $region90: #{attfno_forward.5} parent=63 // pred_fallthru
                _
            $region64: #{attfno_forward.5} parent=59 // pred_fallthru
              _
            // Predicated region
            $region65: #{attfno_forward.5} parent=59 // pred_check
              _
            $region66: #{attfno_forward.5} parent=59 // pred_check_branch
              %365 = sbr.rel target = $region68
            $region67: #{attfno_forward.5} parent=59 // pred_region
              %s367 = ssub.s32 256, 1
              loop: start=0, step=1, limit=1
              $region69: #{attfno_forward.5} parent=67 // loop_pre_header
                _
              $region70: #{attfno_forward.5} parent=67 // loop_header
                %s369 = sphi 0, %s373
                %p370 = scmp.ge.s32.totalorder %s369, 1
                %s374 = sphi %s359, %s359
                %s375 = sphi %s356, %s356
              $region71: #{attfno_forward.5} parent=67 // loop_header_branch
                %372 = sbr.rel (%p370) target = $region75
              $region72: #{attfno_forward.5} parent=67 // loop_body
                %v376 = vld [vmem:[%s374] sm:%s367]
                %377 = vst [vmem:[%s375] sm:%s367] %v376
                %v378 = vld [vmem:[%s374 + $0x8] sm:%s367]
                %379 = vst [vmem:[%s375 + $0x8] sm:%s367] %v378
                %v380 = vld [vmem:[%s374 + $0x20] sm:%s367]
                %381 = vst [vmem:[%s375 + $0x10] sm:%s367] %v380
                %v382 = vld [vmem:[%s374 + $0x28] sm:%s367]
                %383 = vst [vmem:[%s375 + $0x18] sm:%s367] %v382
              $region73: #{attfno_forward.5} parent=67 // loop_footer
                %s373 = sadd.s32 1, %s369
              $region74: #{attfno_forward.5} parent=67 // loop_footer_branch
                %368 = sbr.rel target = $region70
              $region75: #{attfno_forward.5} parent=67 // loop_exit
                _
            $region68: #{attfno_forward.5} parent=59 // pred_fallthru
              _
          $region60: #{attfno_forward.5} parent=55 // pred_fallthru
            _
          %404 = vnop
        $region56: #{attfno_forward.5} parent=43 // pred_fallthru
          _
        // Predicated region
        $region91: #{attfno_forward.5} parent=43 // pred_check
          %p405 = pneg %p220
        $region92: #{attfno_forward.5} parent=43 // pred_check_branch
          %407 = sbr.rel (%p405) target = $region94
        $region93: #{attfno_forward.5} parent=43 // pred_region
          %s408 = sand.u32 %s210, 1
          %s409 = sand.u32 %s210, 1
          %s410 = smul.addr %s409, 32
          %s411 = scalar_lea.vmem [#allocation4], %s410
          %s412 = smul.addr %s17, 2
          %s413 = smul.addr %s412, 8
          %s414 = scalar_lea.vmem %s8, %s413
          // Predicated region
          $region95: #{attfno_forward.5} parent=93 // pred_check
            _
          $region96: #{attfno_forward.5} parent=93 // pred_check_branch
            %416 = sbr.rel (0) target = $region98
          $region97: #{attfno_forward.5} parent=93 // pred_region
            // Predicated region
            $region99: #{attfno_forward.5} parent=97 // pred_check
              _
            $region100: #{attfno_forward.5} parent=97 // pred_check_branch
              %418 = sbr.rel (0) target = $region102
            $region101: #{attfno_forward.5} parent=97 // pred_region
              // Predicated region
              $region114: #{attfno_forward.5} parent=101 // pred_check
                _
              $region115: #{attfno_forward.5} parent=101 // pred_check_branch
                %440 = sbr.rel (0) target = $region117
              $region116: #{attfno_forward.5} parent=101 // pred_region
                loop: start=0, step=1, limit=1
                $region118: #{attfno_forward.5} parent=116 // loop_pre_header
                  _
                $region119: #{attfno_forward.5} parent=116 // loop_header
                  %s442 = sphi 0, %s446
                  %p443 = scmp.ge.s32.totalorder %s442, 1
                  %s447 = sphi %s414, %s414
                  %s448 = sphi %s411, %s411
                $region120: #{attfno_forward.5} parent=116 // loop_header_branch
                  %445 = sbr.rel (%p443) target = $region124
                $region121: #{attfno_forward.5} parent=116 // loop_body
                  %v449 = vld [vmem:[%s447] sm:$0xff]
                  %450 = vst [vmem:[%s448] sm:$0xff] %v449
                  %v451 = vld [vmem:[%s447 + $0x8] sm:$0xff]
                  %452 = vst [vmem:[%s448 + $0x8] sm:$0xff] %v451
                  %v453 = vld [vmem:[%s447 + $0x20] sm:$0xff]
                  %454 = vst [vmem:[%s448 + $0x10] sm:$0xff] %v453
                  %v455 = vld [vmem:[%s447 + $0x28] sm:$0xff]
                  %456 = vst [vmem:[%s448 + $0x18] sm:$0xff] %v455
                $region122: #{attfno_forward.5} parent=116 // loop_footer
                  %s446 = sadd.s32 1, %s442
                $region123: #{attfno_forward.5} parent=116 // loop_footer_branch
                  %441 = sbr.rel target = $region119
                $region124: #{attfno_forward.5} parent=116 // loop_exit
                  _
              $region117: #{attfno_forward.5} parent=101 // pred_fallthru
                _
              // Predicated region
              $region125: #{attfno_forward.5} parent=101 // pred_check
                _
              $region126: #{attfno_forward.5} parent=101 // pred_check_branch
                %458 = sbr.rel target = $region128
              $region127: #{attfno_forward.5} parent=101 // pred_region
                _
              $region128: #{attfno_forward.5} parent=101 // pred_fallthru
                _
            $region102: #{attfno_forward.5} parent=97 // pred_fallthru
              _
            // Predicated region
            $region103: #{attfno_forward.5} parent=97 // pred_check
              _
            $region104: #{attfno_forward.5} parent=97 // pred_check_branch
              %420 = sbr.rel target = $region106
            $region105: #{attfno_forward.5} parent=97 // pred_region
              %s422 = ssub.s32 256, 1
              loop: start=0, step=1, limit=1
              $region107: #{attfno_forward.5} parent=105 // loop_pre_header
                _
              $region108: #{attfno_forward.5} parent=105 // loop_header
                %s424 = sphi 0, %s428
                %p425 = scmp.ge.s32.totalorder %s424, 1
                %s429 = sphi %s414, %s414
                %s430 = sphi %s411, %s411
              $region109: #{attfno_forward.5} parent=105 // loop_header_branch
                %427 = sbr.rel (%p425) target = $region113
              $region110: #{attfno_forward.5} parent=105 // loop_body
                %v431 = vld [vmem:[%s429] sm:%s422]
                %432 = vst [vmem:[%s430] sm:%s422] %v431
                %v433 = vld [vmem:[%s429 + $0x8] sm:%s422]
                %434 = vst [vmem:[%s430 + $0x8] sm:%s422] %v433
                %v435 = vld [vmem:[%s429 + $0x20] sm:%s422]
                %436 = vst [vmem:[%s430 + $0x10] sm:%s422] %v435
                %v437 = vld [vmem:[%s429 + $0x28] sm:%s422]
                %438 = vst [vmem:[%s430 + $0x18] sm:%s422] %v437
              $region111: #{attfno_forward.5} parent=105 // loop_footer
                %s428 = sadd.s32 1, %s424
              $region112: #{attfno_forward.5} parent=105 // loop_footer_branch
                %423 = sbr.rel target = $region108
              $region113: #{attfno_forward.5} parent=105 // loop_exit
                _
            $region106: #{attfno_forward.5} parent=97 // pred_fallthru
              _
          $region98: #{attfno_forward.5} parent=93 // pred_fallthru
            _
          %459 = vnop
        $region94: #{attfno_forward.5} parent=43 // pred_fallthru
          _
      $region44: #{attfno_forward.5} parent=5 // pred_fallthru
        _
      %p460 = scmp.le.s32.totalorder 1, %s17
      %p461 = scmp.lt.s32.totalorder %s17, 3
      %p462 = pnand %p460, %p461
      %p463 = pneg %p462
      // Predicated region
      $region129: #{attfno_forward.5} parent=5 // pred_check
        _
      $region130: #{attfno_forward.5} parent=5 // pred_check_branch
        %465 = sbr.rel (%p462) target = $region132
      $region131: #{attfno_forward.5} parent=5 // pred_region
        %s466 = ssub.s32 %s17, 1
        %s467 = sand.u32 %s187, 1
        %s468 = sand.u32 %s187, 1
        %s469 = smul.addr %s468, 32
        %s470 = scalar_lea.vmem [#allocation3], %s469
        // Predicated region
        $region133: #{attfno_forward.5} parent=131 // pred_check
          %p471 = pneg %p200
        $region134: #{attfno_forward.5} parent=131 // pred_check_branch
          %473 = sbr.rel (%p471) target = $region136
        $region135: #{attfno_forward.5} parent=131 // pred_region
          _
        $region136: #{attfno_forward.5} parent=131 // pred_fallthru
          _
        %s474 = sand.u32 %s213, 1
        %s475 = sand.u32 %s213, 1
        %s476 = smul.addr %s475, 32
        %s477 = scalar_lea.vmem [#allocation4], %s476
        // Predicated region
        $region137: #{attfno_forward.5} parent=131 // pred_check
          %p478 = pneg %p226
        $region138: #{attfno_forward.5} parent=131 // pred_check_branch
          %480 = sbr.rel (%p478) target = $region140
        $region139: #{attfno_forward.5} parent=131 // pred_region
          _
        $region140: #{attfno_forward.5} parent=131 // pred_fallthru
          _
        %p481 = pneg %p38
        %p482 = pneg %p35
        %p483 = scmp.lt.s32.totalorder %s22, 1
        %s484 = scalar_select %p483, %s22, 1
        %s485 = smul.addr %s484, 2
        %s486 = smul.addr %s485, 8
        %s487 = scalar_lea.vmem %s1, %s486
        %p488 = pneg %p64
        %p489 = pneg %p61
        %p490 = scmp.lt.s32.totalorder %s22, 1
        %s491 = scalar_select %p490, %s22, 1
        %s492 = smul.addr %s491, 2
        %s493 = smul.addr %s492, 8
        %s494 = scalar_lea.vmem %s2, %s493
        %p495 = pneg %p90
        %p496 = pneg %p87
        %p497 = pneg %p111
        %p498 = pneg %p108
        %p499 = pneg %p132
        %p500 = pneg %p129
        %p501 = pneg %p153
        %p502 = pneg %p150
        %p503 = pneg %p174
        %p504 = pneg %p171
        %s505 = sand.u32 %s187, 1
        %s506 = sand.u32 %s187, 1
        %s507 = smul.addr %s506, 32
        %s508 = scalar_lea.vmem [#allocation3], %s507
        %p509 = pneg %p200
        %p510 = pneg %p197
        %s511 = sand.u32 %s213, 1
        %s512 = sand.u32 %s213, 1
        %s513 = smul.addr %s512, 32
        %s514 = scalar_lea.vmem [#allocation4], %s513
        %p515 = pneg %p226
        %p516 = pneg %p223
        %p517 = pneg %p247
        %p518 = pneg %p244
        %p519 = pneg %p268
        %p520 = pneg %p265
        %p521 = pneg %p294
        %p522 = pneg %p291
        %p523 = scmp.lt.s32.totalorder %s22, 1
        %s524 = scalar_select %p523, %s22, 1
        %s525 = smul.addr %s524, 2
        %s526 = smul.addr %s525, 8
        %s527 = scalar_lea.vmem %s11, %s526
        %p528 = scmp.lt.s32.totalorder %s22, 1
        %s529 = scalar_select %p528, %s22, 1
        %s530 = smul.addr %s529, 2
        %s531 = smul.addr %s530, 8
        %s532 = scalar_lea.vmem %s1, %s531
        %p533 = scmp.lt.s32.totalorder %s22, 1
        %s534 = scalar_select %p533, %s22, 1
        %s535 = smul.addr %s534, 2
        %s536 = smul.addr %s535, 8
        %s537 = scalar_lea.vmem %s2, %s536
        %p538 = scmp.lt.s32.totalorder %s22, 1
        %s539 = scalar_select %p538, %s22, 1
        %s540 = smul.addr %s539, 2
        %s541 = smul.addr %s540, 8
        %s542 = scalar_lea.vmem %s11, %s541
        %v544 = vld [vmem:[%s532] sm:$0xff]
        %v545 = vld [vmem:[%s532 + $0x8] sm:$0xff]
        %546 = vst [vmem:[#allocation2] sm:$0xff] 0.0
        %547 = vst [vmem:[#allocation2 + $0x8] sm:$0xff] 0.0
        %vm548 = vcmask 277504
        %549 = vst.msk [vmem:[#allocation2 + $0x10] sm:$0xff] %vm548, 0.0
        %550 = vst [vmem:[#allocation2 + $0x18] sm:$0xff] 0.0
        %551 = vst [vmem:[#allocation2 + $0x20] sm:$0xff] 0.0
        %552 = vst.msk [vmem:[#allocation2 + $0x28] sm:$0xff] %vm548, 0.0
        %v553 = vld [vmem:[%s3] sm:$0xf]
        %v554 = vld [vmem:[%s3 + $0x4] sm:$0xf]
        %557 = vrot.lane.b32.xlu0 %v544, 17
        %v558 = vpop.permute.xlu0 %557
        %559 = vrot.lane.b32.xlu0 %v545, 17
        %v560 = vpop.permute.xlu0 %559
        %vm561 = vcmask 138240
        %v562 = vsel %vm561, %v558, %v560
        %vm566 = vcmask 1047688
        %567 = vst.msk [vmem:[#allocation2] sm:$0xff] %vm566, %v558
        %568 = vst [vmem:[#allocation2 + $0x8] sm:$0xff] %v562
        %569 = vst.msk [vmem:[#allocation2 + $0x10] sm:$0xff] %vm561, %v560
        %v570 = vld [vmem:[#allocation2] sm:$0xff]
        %v571 = vld [vmem:[#allocation2 + $0x8] sm:$0xff]
        %v572 = vld [vmem:[%s0] ss:$4 sm:$0x3]
        %v574 = vlaneseq
        %v575 = vshrl.u32 %v574, 7
        %v576 = vsub.s32 0, %v575
        %v577 = vrot.slane %v572, %v576
        %v578 = vlaneseq
        %v579 = vshrl.u32 %v578, 7
        %v580 = vsub.s32 1, %v579
        %v581 = vrot.slane %v572, %v580
        %v584 = vmul.f32 %v570, %v577
        %v585 = vmul.f32 %v571, %v581
        %v586 = vld [vmem:[#allocation2 + $0x10] sm:$0xff]
        %s587 = scalar_lea.vmem %s0, 2
        %v588 = vld [vmem:[%s587] ss:$4 sm:$0x3]
        %v590 = vlaneseq
        %v591 = vshrl.u32 %v590, 7
        %v592 = vsub.s32 0, %v591
        %v593 = vrot.slane %v588, %v592
        %v594 = vlaneseq
        %v595 = vshrl.u32 %v594, 7
        %v596 = vsub.s32 1, %v595
        %v597 = vrot.slane %v588, %v596
        %598 = vrot.lane.b32.xlu0 %v593, 2
        %v599 = vpop.permute.xlu0 %598
        %600 = vrot.lane.b32.xlu0 %v597, 2
        %v601 = vpop.permute.xlu0 %600
        %vm602 = vcmask 15360
        %v603 = vsel %vm602, %v599, %v601
        %v607 = vmul.f32 %v570, %v599
        %v608 = vmul.f32 %v571, %v603
        %v609 = vmul.f32 %v586, %v601
        %610 = vrot.lane.b32.xlu0 %v577, 16
        %v611 = vpop.permute.xlu0 %610
        %612 = vrot.lane.b32.xlu0 %v581, 16
        %v613 = vpop.permute.xlu0 %612
        %vm614 = vcmask 130048
        %v615 = vsel %vm614, %v611, %v613
        %v619 = vmul.f32 %v570, %v611
        %v620 = vmul.f32 %v571, %v615
        %v621 = vmul.f32 %v586, %v613
        %622 = vrot.lane.b32.xlu0 %v593, 18
        %v623 = vpop.permute.xlu0 %622
        %624 = vrot.lane.b32.xlu0 %v597, 18
        %v625 = vpop.permute.xlu0 %624
        %vm626 = vcmask 146432
        %v627 = vsel %vm626, %v623, %v625
        %v631 = vmul.f32 %v570, %v623
        %v632 = vmul.f32 %v571, %v627
        %v633 = vmul.f32 %v586, %v625
        %634 = vrot.lane.b32.xlu0 %v577, 32
        %v635 = vpop.permute.xlu0 %634
        %636 = vrot.lane.b32.xlu0 %v581, 32
        %v637 = vpop.permute.xlu0 %636
        %vm638 = vcmask 261120
        %v639 = vsel %vm638, %v635, %v637
        %v643 = vmul.f32 %v570, %v635
        %v644 = vmul.f32 %v571, %v639
        %v645 = vmul.f32 %v586, %v637
        %646 = vrot.lane.b32.xlu0 %v593, 34
        %v647 = vpop.permute.xlu0 %646
        %648 = vrot.lane.b32.xlu0 %v597, 34
        %v649 = vpop.permute.xlu0 %648
        %v650 = vsel %vm548, %v647, %v649
        %v654 = vmul.f32 %v570, %v647
        %v655 = vmul.f32 %v571, %v650
        %v656 = vmul.f32 %v586, %v649
        %660 = vrot.lane.b32.xlu0 %v570, 127
        %v661 = vpop.permute.xlu0 %660
        %662 = vrot.lane.b32.xlu0 %v571, 127
        %v663 = vpop.permute.xlu0 %662
        %664 = vrot.lane.b32.xlu0 %v586, 127
        %v665 = vpop.permute.xlu0 %664
        %vm666 = vcmask 1039360
        %v667 = vsel %vm666, %v661, %v663
        %v668 = vsel %vm666, %v663, %v665
        %674 = vrot.lane.b32.xlu0 %v607, 126
        %v675 = vpop.permute.xlu0 %674
        %676 = vrot.lane.b32.xlu0 %v608, 126
        %v677 = vpop.permute.xlu0 %676
        %678 = vrot.lane.b32.xlu0 %v609, 126
        %v679 = vpop.permute.xlu0 %678
        %vm680 = vcmask 1031168
        %v681 = vsel %vm680, %v675, %v677
        %v682 = vsel %vm680, %v677, %v679
        %688 = vrot.lane.b32.xlu0 %v619, 112
        %v689 = vpop.permute.xlu0 %688
        %690 = vrot.lane.b32.xlu0 %v620, 112
        %v691 = vpop.permute.xlu0 %690
        %692 = vrot.lane.b32.xlu0 %v621, 112
        %v693 = vpop.permute.xlu0 %692
        %vm694 = vcmask 916480
        %v695 = vsel %vm694, %v689, %v691
        %v696 = vsel %vm694, %v691, %v693
        %699 = vrot.lane.b32.xlu0 %v570, 111
        %v700 = vpop.permute.xlu0 %699
        %701 = vrot.lane.b32.xlu0 %v571, 111
        %v702 = vpop.permute.xlu0 %701
        %703 = vrot.lane.b32.xlu0 %v586, 111
        %v704 = vpop.permute.xlu0 %703
        %vm705 = vcmask 908288
        %v706 = vsel %vm705, %v700, %v702
        %v707 = vsel %vm705, %v702, %v704
        %713 = vrot.lane.b32.xlu0 %v631, 110
        %v714 = vpop.permute.xlu0 %713
        %715 = vrot.lane.b32.xlu0 %v632, 110
        %v716 = vpop.permute.xlu0 %715
        %717 = vrot.lane.b32.xlu0 %v633, 110
        %v718 = vpop.permute.xlu0 %717
        %vm719 = vcmask 900096
        %v720 = vsel %vm719, %v714, %v716
        %v721 = vsel %vm719, %v716, %v718
        %727 = vrot.lane.b32.xlu0 %v643, 96
        %v728 = vpop.permute.xlu0 %727
        %729 = vrot.lane.b32.xlu0 %v644, 96
        %v730 = vpop.permute.xlu0 %729
        %731 = vrot.lane.b32.xlu0 %v645, 96
        %v732 = vpop.permute.xlu0 %731
        %vm733 = vcmask 785408
        %v734 = vsel %vm733, %v728, %v730
        %v735 = vsel %vm733, %v730, %v732
        %738 = vrot.lane.b32.xlu0 %v570, 95
        %v739 = vpop.permute.xlu0 %738
        %740 = vrot.lane.b32.xlu0 %v571, 95
        %v741 = vpop.permute.xlu0 %740
        %742 = vrot.lane.b32.xlu0 %v586, 95
        %v743 = vpop.permute.xlu0 %742
        %vm744 = vcmask 777216
        %v745 = vsel %vm744, %v739, %v741
        %v746 = vsel %vm744, %v741, %v743
        %752 = vrot.lane.b32.xlu0 %v654, 94
        %v753 = vpop.permute.xlu0 %752
        %754 = vrot.lane.b32.xlu0 %v655, 94
        %v755 = vpop.permute.xlu0 %754
        %756 = vrot.lane.b32.xlu0 %v656, 94
        %v757 = vpop.permute.xlu0 %756
        %vm758 = vcmask 769024
        %v759 = vsel %vm758, %v753, %v755
        %v760 = vsel %vm758, %v755, %v757
        %v763 = vpack.c.bf16 %v667, %v584
        %v764 = vpack.c.bf16 %v668, %v585
        %v765 = vpack.c.bf16 %v695, %v681
        %v766 = vpack.c.bf16 %v696, %v682
        %v767 = vpack.c.bf16 %v720, %v706
        %v768 = vpack.c.bf16 %v721, %v707
        %v769 = vpack.c.bf16 %v745, %v734
        %v770 = vpack.c.bf16 %v746, %v735
        %v771 = vpack.c.bf16 %v759, %v759
        %v772 = vpack.c.bf16 %v760, %v760
        %v773 = vld [vmem:[%s4] sm:$0xff]
        %v774 = vld [vmem:[%s4 + $0x8] sm:$0xff]
        %776 = vset.pattern.permute.xlu0 0
        %777 = vperm.xlu0 %776, %v773
        %v778 = vpop.permute.xlu0 %777
        %781 = vset.pattern.permute.xlu0 0
        %782 = vperm.xlu0 %781, %v774
        %v783 = vpop.permute.xlu0 %782
        %v787 = vunpack.c.l.b16 %v553
        %v788 = vunpack.c.l.b16 %v554
        %v789 = vpack.c.b16 %v788, %v787
        %vm790 = vcmask 588800
        %v792 = vsel %vm790, %v789, 0
        %vm794 = vcmask 1043456
        %v796 = vsel %vm794, %v771, 0
        %v799 = vsel %vm794, %v772, 0
        %801 = vmatprep.subr.bf16.mxu0 0
        %802 = vmatpush1.bf16.msra.mxu0 0
        %803 = vmatprep.subr.bf16.mxu0 0
        %804 = vmatpush1.bf16.msra.mxu0 0
        %805 = vmatprep.subr.bf16.mxu0 0
        %806 = vmatpush1.bf16.msra.mxu0 0
        %807 = vmatprep.subr.bf16.mxu0 %v799
        %808 = vmatpush1.bf16.msra.mxu0 %v796
        %809 = vmatprep.subr.bf16.mxu0 %v770
        %810 = vmatpush1.bf16.msra.mxu0 %v769
        %811 = vmatprep.subr.bf16.mxu0 %v768
        %812 = vmatpush1.bf16.msra.mxu0 %v767
        %813 = vmatprep.subr.bf16.mxu0 %v766
        %814 = vmatpush1.bf16.msra.mxu0 %v765
        %815 = vmatprep.subr.bf16.mxu0 %v764
        %816 = vmatpush1.bf16.msra.mxu0 %v763
        %817 = vmatprep.subr.bf16.mxu0 0
        %818 = vmatpush2.bf16.msra.mxu0 0
        %819 = vmatprep.subr.bf16.mxu0 0
        %820 = vmatpush2.bf16.msra.mxu0 0
        %821 = vmatprep.subr.bf16.mxu0 0
        %822 = vmatpush2.bf16.msra.mxu0 0
        %823 = vmatprep.subr.bf16.mxu0 0
        %824 = vmatpush2.bf16.msra.mxu0 0
        %825 = vmatprep.subr.bf16.mxu0 0
        %826 = vmatpush2.bf16.msra.mxu0 0
        %827 = vmatprep.subr.bf16.mxu0 0
        %828 = vmatpush2.bf16.msra.mxu0 0
        %829 = vmatprep.subr.bf16.mxu0 0
        %830 = vmatpush2.bf16.msra.mxu0 0
        %831 = vmatprep.subr.bf16.mxu0 0
        %832 = vmatpush2.bf16.msra.mxu0 0
        %833 = vmatprep.mubr.bf16.mxu0 0
        %834 = vmatmul.mubr.bf16.gmra.mxu0 %v792
        %v835 = vpop.f32.mrf.mxu0
        %v836 = vadd.f32 %v778, %v835
        %v837 = vpop.f32.mrf.mxu0
        %v838 = vadd.f32 %v778, %v837
        %v839 = vpop.f32.mrf.mxu0
        %v840 = vadd.f32 %v783, %v839
        %v841 = vpop.f32.mrf.mxu0
        %v842 = vadd.f32 %v783, %v841
        %843 = vdwg.mxu0
        %v844 = vld [vmem:[%s5] sm:$0xff]
        %v845 = vld [vmem:[%s5 + $0x8] sm:$0xff]
        %850 = vrot.lane.b32.xlu0 %v836, 17
        %v851 = vpop.permute.xlu0 %850
        %852 = vrot.lane.b32.xlu0 %v838, 17
        %v853 = vpop.permute.xlu0 %852
        %854 = vrot.lane.b32.xlu0 %v840, 17
        %v855 = vpop.permute.xlu0 %854
        %856 = vrot.lane.b32.xlu0 %v842, 17
        %v857 = vpop.permute.xlu0 %856
        %v858 = vsel %vm561, %v851, %v853
        %v859 = vsel %vm561, %v855, %v857
        %866 = vst.msk [vmem:[#allocation2] sm:$0xff] %vm566, %v851
        %867 = vst [vmem:[#allocation2 + $0x8] sm:$0xff] %v858
        %868 = vst.msk [vmem:[#allocation2 + $0x10] sm:$0xff] %vm561, %v853
        %869 = vst.msk [vmem:[#allocation2 + $0x18] sm:$0xff] %vm566, %v855
        %870 = vst [vmem:[#allocation2 + $0x20] sm:$0xff] %v859
        %871 = vst.msk [vmem:[#allocation2 + $0x28] sm:$0xff] %vm561, %v857
        %v872 = vld [vmem:[#allocation2] sm:$0xff]
        %v873 = vld [vmem:[#allocation2 + $0x8] sm:$0xff]
        %v874 = vld [vmem:[#allocation2 + $0x18] sm:$0xff]
        %v875 = vld [vmem:[#allocation2 + $0x20] sm:$0xff]
        %v876 = vld [vmem:[%s0] ss:$4 sm:$0x3]
        %v878 = vlaneseq
        %v879 = vshrl.u32 %v878, 7
        %v880 = vsub.s32 0, %v879
        %v881 = vrot.slane %v876, %v880
        %v882 = vlaneseq
        %v883 = vshrl.u32 %v882, 7
        %v884 = vsub.s32 1, %v883
        %v885 = vrot.slane %v876, %v884
        %v888 = vmul.f32 %v872, %v881
        %v889 = vmul.f32 %v873, %v885
        %v890 = vmul.f32 %v874, %v881
        %v891 = vmul.f32 %v875, %v885
        %v892 = vld [vmem:[#allocation2 + $0x10] sm:$0xff]
        %v893 = vld [vmem:[#allocation2 + $0x28] sm:$0xff]
        %v894 = vld [vmem:[%s587] ss:$4 sm:$0x3]
        %v896 = vlaneseq
        %v897 = vshrl.u32 %v896, 7
        %v898 = vsub.s32 0, %v897
        %v899 = vrot.slane %v894, %v898
        %v900 = vlaneseq
        %v901 = vshrl.u32 %v900, 7
        %v902 = vsub.s32 1, %v901
        %v903 = vrot.slane %v894, %v902
        %904 = vrot.lane.b32.xlu0 %v899, 2
        %v905 = vpop.permute.xlu0 %904
        %906 = vrot.lane.b32.xlu0 %v903, 2
        %v907 = vpop.permute.xlu0 %906
        %v908 = vsel %vm602, %v905, %v907
        %v912 = vmul.f32 %v872, %v905
        %v913 = vmul.f32 %v873, %v908
        %v914 = vmul.f32 %v892, %v907
        %v915 = vmul.f32 %v874, %v905
        %v916 = vmul.f32 %v875, %v908
        %v917 = vmul.f32 %v893, %v907
        %918 = vrot.lane.b32.xlu0 %v881, 16
        %v919 = vpop.permute.xlu0 %918
        %920 = vrot.lane.b32.xlu0 %v885, 16
        %v921 = vpop.permute.xlu0 %920
        %v922 = vsel %vm614, %v919, %v921
        %v926 = vmul.f32 %v872, %v919
        %v927 = vmul.f32 %v873, %v922
        %v928 = vmul.f32 %v892, %v921
        %v929 = vmul.f32 %v874, %v919
        %v930 = vmul.f32 %v875, %v922
        %v931 = vmul.f32 %v893, %v921
        %932 = vrot.lane.b32.xlu0 %v899, 18
        %v933 = vpop.permute.xlu0 %932
        %934 = vrot.lane.b32.xlu0 %v903, 18
        %v935 = vpop.permute.xlu0 %934
        %v936 = vsel %vm626, %v933, %v935
        %v940 = vmul.f32 %v872, %v933
        %v941 = vmul.f32 %v873, %v936
        %v942 = vmul.f32 %v892, %v935
        %v943 = vmul.f32 %v874, %v933
        %v944 = vmul.f32 %v875, %v936
        %v945 = vmul.f32 %v893, %v935
        %946 = vrot.lane.b32.xlu0 %v881, 32
        %v947 = vpop.permute.xlu0 %946
        %948 = vrot.lane.b32.xlu0 %v885, 32
        %v949 = vpop.permute.xlu0 %948
        %v950 = vsel %vm638, %v947, %v949
        %v954 = vmul.f32 %v872, %v947
        %v955 = vmul.f32 %v873, %v950
        %v956 = vmul.f32 %v892, %v949
        %v957 = vmul.f32 %v874, %v947
        %v958 = vmul.f32 %v875, %v950
        %v959 = vmul.f32 %v893, %v949
        %960 = vrot.lane.b32.xlu0 %v899, 34
        %v961 = vpop.permute.xlu0 %960
        %962 = vrot.lane.b32.xlu0 %v903, 34
        %v963 = vpop.permute.xlu0 %962
        %v964 = vsel %vm548, %v961, %v963
        %v968 = vmul.f32 %v872, %v961
        %v969 = vmul.f32 %v873, %v964
        %v970 = vmul.f32 %v892, %v963
        %v971 = vmul.f32 %v874, %v961
        %v972 = vmul.f32 %v875, %v964
        %v973 = vmul.f32 %v893, %v963
        %980 = vrot.lane.b32.xlu0 %v872, 127
        %v981 = vpop.permute.xlu0 %980
        %982 = vrot.lane.b32.xlu0 %v873, 127
        %v983 = vpop.permute.xlu0 %982
        %984 = vrot.lane.b32.xlu0 %v892, 127
        %v985 = vpop.permute.xlu0 %984
        %986 = vrot.lane.b32.xlu0 %v874, 127
        %v987 = vpop.permute.xlu0 %986
        %988 = vrot.lane.b32.xlu0 %v875, 127
        %v989 = vpop.permute.xlu0 %988
        %990 = vrot.lane.b32.xlu0 %v893, 127
        %v991 = vpop.permute.xlu0 %990
        %v992 = vsel %vm666, %v981, %v983
        %v993 = vsel %vm666, %v983, %v985
        %v994 = vsel %vm666, %v987, %v989
        %v995 = vsel %vm666, %v989, %v991
        %1006 = vrot.lane.b32.xlu0 %v912, 126
        %v1007 = vpop.permute.xlu0 %1006
        %1008 = vrot.lane.b32.xlu0 %v913, 126
        %v1009 = vpop.permute.xlu0 %1008
        %1010 = vrot.lane.b32.xlu0 %v914, 126
        %v1011 = vpop.permute.xlu0 %1010
        %1012 = vrot.lane.b32.xlu0 %v915, 126
        %v1013 = vpop.permute.xlu0 %1012
        %1014 = vrot.lane.b32.xlu0 %v916, 126
        %v1015 = vpop.permute.xlu0 %1014
        %1016 = vrot.lane.b32.xlu0 %v917, 126
        %v1017 = vpop.permute.xlu0 %1016
        %v1018 = vsel %vm680, %v1007, %v1009
        %v1019 = vsel %vm680, %v1009, %v1011
        %v1020 = vsel %vm680, %v1013, %v1015
        %v1021 = vsel %vm680, %v1015, %v1017
        %1032 = vrot.lane.b32.xlu0 %v926, 112
        %v1033 = vpop.permute.xlu0 %1032
        %1034 = vrot.lane.b32.xlu0 %v927, 112
        %v1035 = vpop.permute.xlu0 %1034
        %1036 = vrot.lane.b32.xlu0 %v928, 112
        %v1037 = vpop.permute.xlu0 %1036
        %1038 = vrot.lane.b32.xlu0 %v929, 112
        %v1039 = vpop.permute.xlu0 %1038
        %1040 = vrot.lane.b32.xlu0 %v930, 112
        %v1041 = vpop.permute.xlu0 %1040
        %1042 = vrot.lane.b32.xlu0 %v931, 112
        %v1043 = vpop.permute.xlu0 %1042
        %v1044 = vsel %vm694, %v1033, %v1035
        %v1045 = vsel %vm694, %v1035, %v1037
        %v1046 = vsel %vm694, %v1039, %v1041
        %v1047 = vsel %vm694, %v1041, %v1043
        %1052 = vrot.lane.b32.xlu0 %v872, 111
        %v1053 = vpop.permute.xlu0 %1052
        %1054 = vrot.lane.b32.xlu0 %v873, 111
        %v1055 = vpop.permute.xlu0 %1054
        %1056 = vrot.lane.b32.xlu0 %v892, 111
        %v1057 = vpop.permute.xlu0 %1056
        %1058 = vrot.lane.b32.xlu0 %v874, 111
        %v1059 = vpop.permute.xlu0 %1058
        %1060 = vrot.lane.b32.xlu0 %v875, 111
        %v1061 = vpop.permute.xlu0 %1060
        %1062 = vrot.lane.b32.xlu0 %v893, 111
        %v1063 = vpop.permute.xlu0 %1062
        %v1064 = vsel %vm705, %v1053, %v1055
        %v1065 = vsel %vm705, %v1055, %v1057
        %v1066 = vsel %vm705, %v1059, %v1061
        %v1067 = vsel %vm705, %v1061, %v1063
        %1078 = vrot.lane.b32.xlu0 %v940, 110
        %v1079 = vpop.permute.xlu0 %1078
        %1080 = vrot.lane.b32.xlu0 %v941, 110
        %v1081 = vpop.permute.xlu0 %1080
        %1082 = vrot.lane.b32.xlu0 %v942, 110
        %v1083 = vpop.permute.xlu0 %1082
        %1084 = vrot.lane.b32.xlu0 %v943, 110
        %v1085 = vpop.permute.xlu0 %1084
        %1086 = vrot.lane.b32.xlu0 %v944, 110
        %v1087 = vpop.permute.xlu0 %1086
        %1088 = vrot.lane.b32.xlu0 %v945, 110
        %v1089 = vpop.permute.xlu0 %1088
        %v1090 = vsel %vm719, %v1079, %v1081
        %v1091 = vsel %vm719, %v1081, %v1083
        %v1092 = vsel %vm719, %v1085, %v1087
        %v1093 = vsel %vm719, %v1087, %v1089
        %1104 = vrot.lane.b32.xlu0 %v954, 96
        %v1105 = vpop.permute.xlu0 %1104
        %1106 = vrot.lane.b32.xlu0 %v955, 96
        %v1107 = vpop.permute.xlu0 %1106
        %1108 = vrot.lane.b32.xlu0 %v956, 96
        %v1109 = vpop.permute.xlu0 %1108
        %1110 = vrot.lane.b32.xlu0 %v957, 96
        %v1111 = vpop.permute.xlu0 %1110
        %1112 = vrot.lane.b32.xlu0 %v958, 96
        %v1113 = vpop.permute.xlu0 %1112
        %1114 = vrot.lane.b32.xlu0 %v959, 96
        %v1115 = vpop.permute.xlu0 %1114
        %v1116 = vsel %vm733, %v1105, %v1107
        %v1117 = vsel %vm733, %v1107, %v1109
        %v1118 = vsel %vm733, %v1111, %v1113
        %v1119 = vsel %vm733, %v1113, %v1115
        %1124 = vrot.lane.b32.xlu0 %v872, 95
        %v1125 = vpop.permute.xlu0 %1124
        %1126 = vrot.lane.b32.xlu0 %v873, 95
        %v1127 = vpop.permute.xlu0 %1126
        %1128 = vrot.lane.b32.xlu0 %v892, 95
        %v1129 = vpop.permute.xlu0 %1128
        %1130 = vrot.lane.b32.xlu0 %v874, 95
        %v1131 = vpop.permute.xlu0 %1130
        %1132 = vrot.lane.b32.xlu0 %v875, 95
        %v1133 = vpop.permute.xlu0 %1132
        %1134 = vrot.lane.b32.xlu0 %v893, 95
        %v1135 = vpop.permute.xlu0 %1134
        %v1136 = vsel %vm744, %v1125, %v1127
        %v1137 = vsel %vm744, %v1127, %v1129
        %v1138 = vsel %vm744, %v1131, %v1133
        %v1139 = vsel %vm744, %v1133, %v1135
        %1150 = vrot.lane.b32.xlu0 %v968, 94
        %v1151 = vpop.permute.xlu0 %1150
        %1152 = vrot.lane.b32.xlu0 %v969, 94
        %v1153 = vpop.permute.xlu0 %1152
        %1154 = vrot.lane.b32.xlu0 %v970, 94
        %v1155 = vpop.permute.xlu0 %1154
        %1156 = vrot.lane.b32.xlu0 %v971, 94
        %v1157 = vpop.permute.xlu0 %1156
        %1158 = vrot.lane.b32.xlu0 %v972, 94
        %v1159 = vpop.permute.xlu0 %1158
        %1160 = vrot.lane.b32.xlu0 %v973, 94
        %v1161 = vpop.permute.xlu0 %1160
        %v1162 = vsel %vm758, %v1151, %v1153
        %v1163 = vsel %vm758, %v1153, %v1155
        %v1164 = vsel %vm758, %v1157, %v1159
        %v1165 = vsel %vm758, %v1159, %v1161
        %v1170 = vpack.c.bf16 %v890, %v888
        %v1171 = vpack.c.bf16 %v891, %v889
        %v1172 = vpack.c.bf16 %v994, %v992
        %v1173 = vpack.c.bf16 %v995, %v993
        %v1174 = vpack.c.bf16 %v1020, %v1018
        %v1175 = vpack.c.bf16 %v1021, %v1019
        %v1176 = vpack.c.bf16 %v1046, %v1044
        %v1177 = vpack.c.bf16 %v1047, %v1045
        %v1178 = vpack.c.bf16 %v1066, %v1064
        %v1179 = vpack.c.bf16 %v1067, %v1065
        %v1180 = vpack.c.bf16 %v1092, %v1090
        %v1181 = vpack.c.bf16 %v1093, %v1091
        %v1182 = vpack.c.bf16 %v1118, %v1116
        %v1183 = vpack.c.bf16 %v1119, %v1117
        %v1184 = vpack.c.bf16 %v1138, %v1136
        %v1185 = vpack.c.bf16 %v1139, %v1137
        %v1186 = vpack.c.bf16 %v1164, %v1162
        %v1187 = vpack.c.bf16 %v1165, %v1163
        %v1188 = vld [vmem:[%s6] sm:$0xff]
        %v1189 = vld [vmem:[%s6 + $0x8] sm:$0xff]
        %1191 = vset.pattern.permute.xlu0 0
        %1192 = vperm.xlu0 %1191, %v1188
        %v1193 = vpop.permute.xlu0 %1192
        %1196 = vset.pattern.permute.xlu0 0
        %1197 = vperm.xlu0 %1196, %v1189
        %v1198 = vpop.permute.xlu0 %1197
        %v1202 = vunpack.c.l.b16 %v844
        %v1203 = vunpack.c.h.b16 %v844
        %v1204 = vunpack.c.l.b16 %v845
        %v1205 = vunpack.c.h.b16 %v845
        %v1206 = vpack.c.b16 %v1204, %v1202
        %v1207 = vpack.c.b16 %v1205, %v1203
        %v1210 = vsel %vm614, %v1207, 0
        %1212 = vmatprep.subr.bf16.mxu0 %v1185
        %1213 = vmatpush1.bf16.msra.mxu0 %v1184
        %1214 = vmatprep.subr.bf16.mxu0 %v1183
        %1215 = vmatpush1.bf16.msra.mxu0 %v1182
        %1216 = vmatprep.subr.bf16.mxu0 %v1181
        %1217 = vmatpush1.bf16.msra.mxu0 %v1180
        %1218 = vmatprep.subr.bf16.mxu0 %v1179
        %1219 = vmatpush1.bf16.msra.mxu0 %v1178
        %1220 = vmatprep.subr.bf16.mxu0 %v1177
        %1221 = vmatpush1.bf16.msra.mxu0 %v1176
        %1222 = vmatprep.subr.bf16.mxu0 %v1175
        %1223 = vmatpush1.bf16.msra.mxu0 %v1174
        %1224 = vmatprep.subr.bf16.mxu0 %v1173
        %1225 = vmatpush1.bf16.msra.mxu0 %v1172
        %1226 = vmatprep.subr.bf16.mxu0 %v1171
        %1227 = vmatpush1.bf16.msra.mxu0 %v1170
        %1228 = vmatprep.subr.bf16.mxu0 0
        %1229 = vmatpush2.bf16.msra.mxu0 0
        %1230 = vmatprep.subr.bf16.mxu0 0
        %1231 = vmatpush2.bf16.msra.mxu0 0
        %1232 = vmatprep.subr.bf16.mxu0 0
        %1233 = vmatpush2.bf16.msra.mxu0 0
        %1234 = vmatprep.subr.bf16.mxu0 0
        %1235 = vmatpush2.bf16.msra.mxu0 0
        %1236 = vmatprep.subr.bf16.mxu0 0
        %1237 = vmatpush2.bf16.msra.mxu0 0
        %1238 = vmatprep.subr.bf16.mxu0 0
        %1239 = vmatpush2.bf16.msra.mxu0 0
        %1240 = vmatprep.subr.bf16.mxu0 0
        %1241 = vmatpush2.bf16.msra.mxu0 0
        %1242 = vmatprep.subr.bf16.mxu0 %v1187
        %1243 = vmatpush2.bf16.msra.mxu0 %v1186
        %1244 = vmatprep.mubr.bf16.mxu0 %v1210
        %1245 = vmatmul.mubr.bf16.gmra.mxu0 %v1206
        %v1246 = vpop.f32.mrf.mxu0
        %v1247 = vadd.f32 %v1193, %v1246
        %v1248 = vpop.f32.mrf.mxu0
        %v1249 = vadd.f32 %v1193, %v1248
        %v1250 = vpop.f32.mrf.mxu0
        %v1251 = vadd.f32 %v1198, %v1250
        %v1252 = vpop.f32.mrf.mxu0
        %v1253 = vadd.f32 %v1198, %v1252
        %1254 = vdwg.mxu0
        %v1256 = vsel %vm614, 0.0625, 0
        %1258 = vmatprep.subr.mxu0 0.0
        %1259 = vmatpush1.msra.mxu0 0.0
        %1260 = vmatprep.subr.mxu0 0.0
        %1261 = vmatpush1.msra.mxu0 0.0
        %1262 = vmatprep.subr.mxu0 0.0
        %1263 = vmatpush1.msra.mxu0 0.0
        %1264 = vmatprep.subr.mxu0 0.0
        %1265 = vmatpush1.msra.mxu0 0.0
        %1266 = vmatprep.subr.mxu0 0.0
        %1267 = vmatpush1.msra.mxu0 0.0
        %1268 = vmatprep.subr.mxu0 0.0
        %1269 = vmatpush1.msra.mxu0 0.0
        %1270 = vmatprep.subr.mxu0 0.0
        %1271 = vmatpush1.msra.mxu0 0.0
        %1272 = vmatprep.subr.mxu0 0.0
        %1273 = vmatpush1.msra.mxu0 0.0
        %1274 = vmatprep.subr.mxu0 0.0
        %1275 = vmatpush1.msra.mxu0 0.0
        %1276 = vmatprep.subr.mxu0 0.0
        %1277 = vmatpush1.msra.mxu0 0.0
        %1278 = vmatprep.subr.mxu0 0.0
        %1279 = vmatpush1.msra.mxu0 0.0
        %1280 = vmatprep.subr.mxu0 0.0
        %1281 = vmatpush1.msra.mxu0 0.0
        %1282 = vmatprep.subr.mxu0 0.0
        %1283 = vmatpush1.msra.mxu0 0.0
        %1284 = vmatprep.subr.mxu0 0.0
        %1285 = vmatpush1.msra.mxu0 0.0
        %1286 = vmatprep.subr.mxu0 %v1253
        %1287 = vmatpush1.msra.mxu0 %v1251
        %1288 = vmatprep.subr.mxu0 %v1249
        %1289 = vmatpush1.msra.mxu0 %v1247
        %1290 = vmatprep.subr.mxu0 0.0
        %1291 = vmatpush2.msra.mxu0 0.0
        %1292 = vmatprep.subr.mxu0 0.0
        %1293 = vmatpush2.msra.mxu0 0.0
        %1294 = vmatprep.subr.mxu0 0.0
        %1295 = vmatpush2.msra.mxu0 0.0
        %1296 = vmatprep.subr.mxu0 0.0
        %1297 = vmatpush2.msra.mxu0 0.0
        %1298 = vmatprep.subr.mxu0 0.0
        %1299 = vmatpush2.msra.mxu0 0.0
        %1300 = vmatprep.subr.mxu0 0.0
        %1301 = vmatpush2.msra.mxu0 0.0
        %1302 = vmatprep.subr.mxu0 0.0
        %1303 = vmatpush2.msra.mxu0 0.0
        %1304 = vmatprep.subr.mxu0 0.0
        %1305 = vmatpush2.msra.mxu0 0.0
        %1306 = vmatprep.subr.mxu0 0.0
        %1307 = vmatpush2.msra.mxu0 0.0
        %1308 = vmatprep.subr.mxu0 0.0
        %1309 = vmatpush2.msra.mxu0 0.0
        %1310 = vmatprep.subr.mxu0 0.0
        %1311 = vmatpush2.msra.mxu0 0.0
        %1312 = vmatprep.subr.mxu0 0.0
        %1313 = vmatpush2.msra.mxu0 0.0
        %1314 = vmatprep.subr.mxu0 0.0
        %1315 = vmatpush2.msra.mxu0 0.0
        %1316 = vmatprep.subr.mxu0 0.0
        %1317 = vmatpush2.msra.mxu0 0.0
        %1318 = vmatprep.subr.mxu0 0.0
        %1319 = vmatpush2.msra.mxu0 0.0
        %1320 = vmatprep.subr.mxu0 0.0
        %1321 = vmatpush2.msra.mxu0 0.0
        %1322 = vmatprep.mubr.f32.mxu0 0.0
        %1323 = vmatmul.mubr.f32.gmra.mxu0 %v1256
        %v1324 = vpop.f32.mrf.mxu0
        %v1325 = vadd.f32 0.0, %v1324
        %v1326 = vpop.f32.mrf.mxu0
        %v1327 = vadd.f32 0.0, %v1326
        %1328 = vdwg.mxu0
        %v1329 = vlaneseq
        %v1330 = vshrl.u32 %v1329, 7
        %v1331 = vsub.s32 0, %v1330
        %v1332 = vrot.slane %v1325, %v1331
        %v1333 = vlaneseq
        %v1334 = vshrl.u32 %v1333, 7
        %v1335 = vsub.s32 0, %v1334
        %v1336 = vrot.slane %v1327, %v1335
        %v1337 = vsub.f32 %v1247, %v1332
        %v1338 = vsub.f32 %v1249, %v1336
        %v1339 = vsub.f32 %v1251, %v1332
        %v1340 = vsub.f32 %v1253, %v1336
        %v1341 = vmul.f32 %v1337, %v1337
        %v1342 = vmul.f32 %v1338, %v1338
        %v1343 = vmul.f32 %v1339, %v1339
        %v1344 = vmul.f32 %v1340, %v1340
        %1345 = vmatprep.subr.mxu0 0.0
        %1346 = vmatpush1.msra.mxu0 0.0
        %1347 = vmatprep.subr.mxu0 0.0
        %1348 = vmatpush1.msra.mxu0 0.0
        %1349 = vmatprep.subr.mxu0 0.0
        %1350 = vmatpush1.msra.mxu0 0.0
        %1351 = vmatprep.subr.mxu0 0.0
        %1352 = vmatpush1.msra.mxu0 0.0
        %1353 = vmatprep.subr.mxu0 0.0
        %1354 = vmatpush1.msra.mxu0 0.0
        %1355 = vmatprep.subr.mxu0 0.0
        %1356 = vmatpush1.msra.mxu0 0.0
        %1357 = vmatprep.subr.mxu0 0.0
        %1358 = vmatpush1.msra.mxu0 0.0
        %1359 = vmatprep.subr.mxu0 0.0
        %1360 = vmatpush1.msra.mxu0 0.0
        %1361 = vmatprep.subr.mxu0 0.0
        %1362 = vmatpush1.msra.mxu0 0.0
        %1363 = vmatprep.subr.mxu0 0.0
        %1364 = vmatpush1.msra.mxu0 0.0
        %1365 = vmatprep.subr.mxu0 0.0
        %1366 = vmatpush1.msra.mxu0 0.0
        %1367 = vmatprep.subr.mxu0 0.0
        %1368 = vmatpush1.msra.mxu0 0.0
        %1369 = vmatprep.subr.mxu0 0.0
        %1370 = vmatpush1.msra.mxu0 0.0
        %1371 = vmatprep.subr.mxu0 0.0
        %1372 = vmatpush1.msra.mxu0 0.0
        %1373 = vmatprep.subr.mxu0 %v1344
        %1374 = vmatpush1.msra.mxu0 %v1343
        %1375 = vmatprep.subr.mxu0 %v1342
        %1376 = vmatpush1.msra.mxu0 %v1341
        %1377 = vmatprep.subr.mxu0 0.0
        %1378 = vmatpush2.msra.mxu0 0.0
        %1379 = vmatprep.subr.mxu0 0.0
        %1380 = vmatpush2.msra.mxu0 0.0
        %1381 = vmatprep.subr.mxu0 0.0
        %1382 = vmatpush2.msra.mxu0 0.0
        %1383 = vmatprep.subr.mxu0 0.0
        %1384 = vmatpush2.msra.mxu0 0.0
        %1385 = vmatprep.subr.mxu0 0.0
        %1386 = vmatpush2.msra.mxu0 0.0
        %1387 = vmatprep.subr.mxu0 0.0
        %1388 = vmatpush2.msra.mxu0 0.0
        %1389 = vmatprep.subr.mxu0 0.0
        %1390 = vmatpush2.msra.mxu0 0.0
        %1391 = vmatprep.subr.mxu0 0.0
        %1392 = vmatpush2.msra.mxu0 0.0
        %1393 = vmatprep.subr.mxu0 0.0
        %1394 = vmatpush2.msra.mxu0 0.0
        %1395 = vmatprep.subr.mxu0 0.0
        %1396 = vmatpush2.msra.mxu0 0.0
        %1397 = vmatprep.subr.mxu0 0.0
        %1398 = vmatpush2.msra.mxu0 0.0
        %1399 = vmatprep.subr.mxu0 0.0
        %1400 = vmatpush2.msra.mxu0 0.0
        %1401 = vmatprep.subr.mxu0 0.0
        %1402 = vmatpush2.msra.mxu0 0.0
        %1403 = vmatprep.subr.mxu0 0.0
        %1404 = vmatpush2.msra.mxu0 0.0
        %1405 = vmatprep.subr.mxu0 0.0
        %1406 = vmatpush2.msra.mxu0 0.0
        %1407 = vmatprep.subr.mxu0 0.0
        %1408 = vmatpush2.msra.mxu0 0.0
        %1409 = vmatprep.mubr.f32.mxu0 0.0
        %1410 = vmatmul.mubr.f32.gmra.mxu0 %v1256
        %v1411 = vpop.f32.mrf.mxu0
        %v1412 = vadd.f32 1e-05, %v1411
        %v1413 = vpop.f32.mrf.mxu0
        %v1414 = vadd.f32 1e-05, %v1413
        %1415 = vdwg.mxu0
        %v1416 = vrsqrt.pop %v1412
        %v1417 = vrsqrt.pop %v1414
        %v1418 = vlaneseq
        %v1419 = vshrl.u32 %v1418, 7
        %v1420 = vsub.s32 0, %v1419
        %v1421 = vrot.slane %v1416, %v1420
        %v1422 = vlaneseq
        %v1423 = vshrl.u32 %v1422, 7
        %v1424 = vsub.s32 0, %v1423
        %v1425 = vrot.slane %v1417, %v1424
        %v1426 = vmul.f32 %v1337, %v1421
        %v1427 = vmul.f32 %v1338, %v1425
        %v1428 = vmul.f32 %v1339, %v1421
        %v1429 = vmul.f32 %v1340, %v1425
        %v1430 = vld [vmem:[%s470] sm:$0xff]
        %v1431 = vld [vmem:[%s470 + $0x8] sm:$0xff]
        %1433 = vset.pattern.permute.xlu0 0
        %1434 = vperm.xlu0 %1433, %v1430
        %v1435 = vpop.permute.xlu0 %1434
        %1438 = vset.pattern.permute.xlu0 0
        %1439 = vperm.xlu0 %1438, %v1431
        %v1440 = vpop.permute.xlu0 %1439
        %v1442 = vmul.f32 %v1426, %v1435
        %v1443 = vmul.f32 %v1427, %v1435
        %v1444 = vmul.f32 %v1428, %v1440
        %v1445 = vmul.f32 %v1429, %v1440
        %v1446 = vld [vmem:[%s477] sm:$0xff]
        %v1447 = vld [vmem:[%s477 + $0x8] sm:$0xff]
        %1449 = vset.pattern.permute.xlu0 0
        %1450 = vperm.xlu0 %1449, %v1446
        %v1451 = vpop.permute.xlu0 %1450
        %1454 = vset.pattern.permute.xlu0 0
        %1455 = vperm.xlu0 %1454, %v1447
        %v1456 = vpop.permute.xlu0 %1455
        %v1458 = vadd.f32 %v1442, %v1451
        %v1459 = vadd.f32 %v1443, %v1451
        %v1460 = vadd.f32 %v1444, %v1456
        %v1461 = vadd.f32 %v1445, %v1456
        %v1462 = vmax.f32 %v1458, 0.0
        %v1463 = vmax.f32 %v1459, 0.0
        %v1464 = vmax.f32 %v1460, 0.0
        %v1465 = vmax.f32 %v1461, 0.0
        %s1466 = scalar_lea.vmem %s5, 16
        %v1467 = vld [vmem:[%s1466] sm:$0xff]
        %v1468 = vld [vmem:[%s1466 + $0x8] sm:$0xff]
        %1473 = vrot.lane.b32.xlu0 %v1462, 17
        %v1474 = vpop.permute.xlu0 %1473
        %1475 = vrot.lane.b32.xlu0 %v1463, 17
        %v1476 = vpop.permute.xlu0 %1475
        %1477 = vrot.lane.b32.xlu0 %v1464, 17
        %v1478 = vpop.permute.xlu0 %1477
        %1479 = vrot.lane.b32.xlu0 %v1465, 17
        %v1480 = vpop.permute.xlu0 %1479
        %v1481 = vsel %vm561, %v1474, %v1476
        %v1482 = vsel %vm561, %v1478, %v1480
        %1489 = vst.msk [vmem:[#allocation2] sm:$0xff] %vm566, %v1474
        %1490 = vst [vmem:[#allocation2 + $0x8] sm:$0xff] %v1481
        %1491 = vst.msk [vmem:[#allocation2 + $0x10] sm:$0xff] %vm561, %v1476
        %1492 = vst.msk [vmem:[#allocation2 + $0x18] sm:$0xff] %vm566, %v1478
        %1493 = vst [vmem:[#allocation2 + $0x20] sm:$0xff] %v1482
        %1494 = vst.msk [vmem:[#allocation2 + $0x28] sm:$0xff] %vm561, %v1480
        %v1495 = vld [vmem:[#allocation2] sm:$0xff]
        %v1496 = vld [vmem:[#allocation2 + $0x8] sm:$0xff]
        %v1497 = vld [vmem:[#allocation2 + $0x18] sm:$0xff]
        %v1498 = vld [vmem:[#allocation2 + $0x20] sm:$0xff]
        %v1499 = vld [vmem:[%s0] ss:$4 sm:$0x3]
        %v1501 = vlaneseq
        %v1502 = vshrl.u32 %v1501, 7
        %v1503 = vsub.s32 0, %v1502
        %v1504 = vrot.slane %v1499, %v1503
        %v1505 = vlaneseq
        %v1506 = vshrl.u32 %v1505, 7
        %v1507 = vsub.s32 1, %v1506
        %v1508 = vrot.slane %v1499, %v1507
        %v1511 = vmul.f32 %v1495, %v1504
        %v1512 = vmul.f32 %v1496, %v1508
        %v1513 = vmul.f32 %v1497, %v1504
        %v1514 = vmul.f32 %v1498, %v1508
        %v1515 = vld [vmem:[#allocation2 + $0x10] sm:$0xff]
        %v1516 = vld [vmem:[#allocation2 + $0x28] sm:$0xff]
        %v1517 = vld [vmem:[%s587] ss:$4 sm:$0x3]
        %v1519 = vlaneseq
        %v1520 = vshrl.u32 %v1519, 7
        %v1521 = vsub.s32 0, %v1520
        %v1522 = vrot.slane %v1517, %v1521
        %v1523 = vlaneseq
        %v1524 = vshrl.u32 %v1523, 7
        %v1525 = vsub.s32 1, %v1524
        %v1526 = vrot.slane %v1517, %v1525
        %1527 = vrot.lane.b32.xlu0 %v1522, 2
        %v1528 = vpop.permute.xlu0 %1527
        %1529 = vrot.lane.b32.xlu0 %v1526, 2
        %v1530 = vpop.permute.xlu0 %1529
        %v1531 = vsel %vm602, %v1528, %v1530
        %v1535 = vmul.f32 %v1495, %v1528
        %v1536 = vmul.f32 %v1496, %v1531
        %v1537 = vmul.f32 %v1515, %v1530
        %v1538 = vmul.f32 %v1497, %v1528
        %v1539 = vmul.f32 %v1498, %v1531
        %v1540 = vmul.f32 %v1516, %v1530
        %1541 = vrot.lane.b32.xlu0 %v1504, 16
        %v1542 = vpop.permute.xlu0 %1541
        %1543 = vrot.lane.b32.xlu0 %v1508, 16
        %v1544 = vpop.permute.xlu0 %1543
        %v1545 = vsel %vm614, %v1542, %v1544
        %v1549 = vmul.f32 %v1495, %v1542
        %v1550 = vmul.f32 %v1496, %v1545
        %v1551 = vmul.f32 %v1515, %v1544
        %v1552 = vmul.f32 %v1497, %v1542
        %v1553 = vmul.f32 %v1498, %v1545
        %v1554 = vmul.f32 %v1516, %v1544
        %1555 = vrot.lane.b32.xlu0 %v1522, 18
        %v1556 = vpop.permute.xlu0 %1555
        %1557 = vrot.lane.b32.xlu0 %v1526, 18
        %v1558 = vpop.permute.xlu0 %1557
        %v1559 = vsel %vm626, %v1556, %v1558
        %v1563 = vmul.f32 %v1495, %v1556
        %v1564 = vmul.f32 %v1496, %v1559
        %v1565 = vmul.f32 %v1515, %v1558
        %v1566 = vmul.f32 %v1497, %v1556
        %v1567 = vmul.f32 %v1498, %v1559
        %v1568 = vmul.f32 %v1516, %v1558
        %1569 = vrot.lane.b32.xlu0 %v1504, 32
        %v1570 = vpop.permute.xlu0 %1569
        %1571 = vrot.lane.b32.xlu0 %v1508, 32
        %v1572 = vpop.permute.xlu0 %1571
        %v1573 = vsel %vm638, %v1570, %v1572
        %v1577 = vmul.f32 %v1495, %v1570
        %v1578 = vmul.f32 %v1496, %v1573
        %v1579 = vmul.f32 %v1515, %v1572
        %v1580 = vmul.f32 %v1497, %v1570
        %v1581 = vmul.f32 %v1498, %v1573
        %v1582 = vmul.f32 %v1516, %v1572
        %1583 = vrot.lane.b32.xlu0 %v1522, 34
        %v1584 = vpop.permute.xlu0 %1583
        %1585 = vrot.lane.b32.xlu0 %v1526, 34
        %v1586 = vpop.permute.xlu0 %1585
        %v1587 = vsel %vm548, %v1584, %v1586
        %v1591 = vmul.f32 %v1495, %v1584
        %v1592 = vmul.f32 %v1496, %v1587
        %v1593 = vmul.f32 %v1515, %v1586
        %v1594 = vmul.f32 %v1497, %v1584
        %v1595 = vmul.f32 %v1498, %v1587
        %v1596 = vmul.f32 %v1516, %v1586
        %1603 = vrot.lane.b32.xlu0 %v1495, 127
        %v1604 = vpop.permute.xlu0 %1603
        %1605 = vrot.lane.b32.xlu0 %v1496, 127
        %v1606 = vpop.permute.xlu0 %1605
        %1607 = vrot.lane.b32.xlu0 %v1515, 127
        %v1608 = vpop.permute.xlu0 %1607
        %1609 = vrot.lane.b32.xlu0 %v1497, 127
        %v1610 = vpop.permute.xlu0 %1609
        %1611 = vrot.lane.b32.xlu0 %v1498, 127
        %v1612 = vpop.permute.xlu0 %1611
        %1613 = vrot.lane.b32.xlu0 %v1516, 127
        %v1614 = vpop.permute.xlu0 %1613
        %v1615 = vsel %vm666, %v1604, %v1606
        %v1616 = vsel %vm666, %v1606, %v1608
        %v1617 = vsel %vm666, %v1610, %v1612
        %v1618 = vsel %vm666, %v1612, %v1614
        %1629 = vrot.lane.b32.xlu0 %v1535, 126
        %v1630 = vpop.permute.xlu0 %1629
        %1631 = vrot.lane.b32.xlu0 %v1536, 126
        %v1632 = vpop.permute.xlu0 %1631
        %1633 = vrot.lane.b32.xlu0 %v1537, 126
        %v1634 = vpop.permute.xlu0 %1633
        %1635 = vrot.lane.b32.xlu0 %v1538, 126
        %v1636 = vpop.permute.xlu0 %1635
        %1637 = vrot.lane.b32.xlu0 %v1539, 126
        %v1638 = vpop.permute.xlu0 %1637
        %1639 = vrot.lane.b32.xlu0 %v1540, 126
        %v1640 = vpop.permute.xlu0 %1639
        %v1641 = vsel %vm680, %v1630, %v1632
        %v1642 = vsel %vm680, %v1632, %v1634
        %v1643 = vsel %vm680, %v1636, %v1638
        %v1644 = vsel %vm680, %v1638, %v1640
        %1655 = vrot.lane.b32.xlu0 %v1549, 112
        %v1656 = vpop.permute.xlu0 %1655
        %1657 = vrot.lane.b32.xlu0 %v1550, 112
        %v1658 = vpop.permute.xlu0 %1657
        %1659 = vrot.lane.b32.xlu0 %v1551, 112
        %v1660 = vpop.permute.xlu0 %1659
        %1661 = vrot.lane.b32.xlu0 %v1552, 112
        %v1662 = vpop.permute.xlu0 %1661
        %1663 = vrot.lane.b32.xlu0 %v1553, 112
        %v1664 = vpop.permute.xlu0 %1663
        %1665 = vrot.lane.b32.xlu0 %v1554, 112
        %v1666 = vpop.permute.xlu0 %1665
        %v1667 = vsel %vm694, %v1656, %v1658
        %v1668 = vsel %vm694, %v1658, %v1660
        %v1669 = vsel %vm694, %v1662, %v1664
        %v1670 = vsel %vm694, %v1664, %v1666
        %1675 = vrot.lane.b32.xlu0 %v1495, 111
        %v1676 = vpop.permute.xlu0 %1675
        %1677 = vrot.lane.b32.xlu0 %v1496, 111
        %v1678 = vpop.permute.xlu0 %1677
        %1679 = vrot.lane.b32.xlu0 %v1515, 111
        %v1680 = vpop.permute.xlu0 %1679
        %1681 = vrot.lane.b32.xlu0 %v1497, 111
        %v1682 = vpop.permute.xlu0 %1681
        %1683 = vrot.lane.b32.xlu0 %v1498, 111
        %v1684 = vpop.permute.xlu0 %1683
        %1685 = vrot.lane.b32.xlu0 %v1516, 111
        %v1686 = vpop.permute.xlu0 %1685
        %v1687 = vsel %vm705, %v1676, %v1678
        %v1688 = vsel %vm705, %v1678, %v1680
        %v1689 = vsel %vm705, %v1682, %v1684
        %v1690 = vsel %vm705, %v1684, %v1686
        %1701 = vrot.lane.b32.xlu0 %v1563, 110
        %v1702 = vpop.permute.xlu0 %1701
        %1703 = vrot.lane.b32.xlu0 %v1564, 110
        %v1704 = vpop.permute.xlu0 %1703
        %1705 = vrot.lane.b32.xlu0 %v1565, 110
        %v1706 = vpop.permute.xlu0 %1705
        %1707 = vrot.lane.b32.xlu0 %v1566, 110
        %v1708 = vpop.permute.xlu0 %1707
        %1709 = vrot.lane.b32.xlu0 %v1567, 110
        %v1710 = vpop.permute.xlu0 %1709
        %1711 = vrot.lane.b32.xlu0 %v1568, 110
        %v1712 = vpop.permute.xlu0 %1711
        %v1713 = vsel %vm719, %v1702, %v1704
        %v1714 = vsel %vm719, %v1704, %v1706
        %v1715 = vsel %vm719, %v1708, %v1710
        %v1716 = vsel %vm719, %v1710, %v1712
        %1727 = vrot.lane.b32.xlu0 %v1577, 96
        %v1728 = vpop.permute.xlu0 %1727
        %1729 = vrot.lane.b32.xlu0 %v1578, 96
        %v1730 = vpop.permute.xlu0 %1729
        %1731 = vrot.lane.b32.xlu0 %v1579, 96
        %v1732 = vpop.permute.xlu0 %1731
        %1733 = vrot.lane.b32.xlu0 %v1580, 96
        %v1734 = vpop.permute.xlu0 %1733
        %1735 = vrot.lane.b32.xlu0 %v1581, 96
        %v1736 = vpop.permute.xlu0 %1735
        %1737 = vrot.lane.b32.xlu0 %v1582, 96
        %v1738 = vpop.permute.xlu0 %1737
        %v1739 = vsel %vm733, %v1728, %v1730
        %v1740 = vsel %vm733, %v1730, %v1732
        %v1741 = vsel %vm733, %v1734, %v1736
        %v1742 = vsel %vm733, %v1736, %v1738
        %1747 = vrot.lane.b32.xlu0 %v1495, 95
        %v1748 = vpop.permute.xlu0 %1747
        %1749 = vrot.lane.b32.xlu0 %v1496, 95
        %v1750 = vpop.permute.xlu0 %1749
        %1751 = vrot.lane.b32.xlu0 %v1515, 95
        %v1752 = vpop.permute.xlu0 %1751
        %1753 = vrot.lane.b32.xlu0 %v1497, 95
        %v1754 = vpop.permute.xlu0 %1753
        %1755 = vrot.lane.b32.xlu0 %v1498, 95
        %v1756 = vpop.permute.xlu0 %1755
        %1757 = vrot.lane.b32.xlu0 %v1516, 95
        %v1758 = vpop.permute.xlu0 %1757
        %v1759 = vsel %vm744, %v1748, %v1750
        %v1760 = vsel %vm744, %v1750, %v1752
        %v1761 = vsel %vm744, %v1754, %v1756
        %v1762 = vsel %vm744, %v1756, %v1758
        %1773 = vrot.lane.b32.xlu0 %v1591, 94
        %v1774 = vpop.permute.xlu0 %1773
        %1775 = vrot.lane.b32.xlu0 %v1592, 94
        %v1776 = vpop.permute.xlu0 %1775
        %1777 = vrot.lane.b32.xlu0 %v1593, 94
        %v1778 = vpop.permute.xlu0 %1777
        %1779 = vrot.lane.b32.xlu0 %v1594, 94
        %v1780 = vpop.permute.xlu0 %1779
        %1781 = vrot.lane.b32.xlu0 %v1595, 94
        %v1782 = vpop.permute.xlu0 %1781
        %1783 = vrot.lane.b32.xlu0 %v1596, 94
        %v1784 = vpop.permute.xlu0 %1783
        %v1785 = vsel %vm758, %v1774, %v1776
        %v1786 = vsel %vm758, %v1776, %v1778
        %v1787 = vsel %vm758, %v1780, %v1782
        %v1788 = vsel %vm758, %v1782, %v1784
        %v1793 = vpack.c.bf16 %v1513, %v1511
        %v1794 = vpack.c.bf16 %v1514, %v1512
        %v1795 = vpack.c.bf16 %v1617, %v1615
        %v1796 = vpack.c.bf16 %v1618, %v1616
        %v1797 = vpack.c.bf16 %v1643, %v1641
        %v1798 = vpack.c.bf16 %v1644, %v1642
        %v1799 = vpack.c.bf16 %v1669, %v1667
        %v1800 = vpack.c.bf16 %v1670, %v1668
        %v1801 = vpack.c.bf16 %v1689, %v1687
        %v1802 = vpack.c.bf16 %v1690, %v1688
        %v1803 = vpack.c.bf16 %v1715, %v1713
        %v1804 = vpack.c.bf16 %v1716, %v1714
        %v1805 = vpack.c.bf16 %v1741, %v1739
        %v1806 = vpack.c.bf16 %v1742, %v1740
        %v1807 = vpack.c.bf16 %v1761, %v1759
        %v1808 = vpack.c.bf16 %v1762, %v1760
        %v1809 = vpack.c.bf16 %v1787, %v1785
        %v1810 = vpack.c.bf16 %v1788, %v1786
        %s1811 = scalar_lea.vmem %s6, 16
        %v1812 = vld [vmem:[%s1811] sm:$0xff]
        %v1813 = vld [vmem:[%s1811 + $0x8] sm:$0xff]
        %1815 = vset.pattern.permute.xlu0 0
        %1816 = vperm.xlu0 %1815, %v1812
        %v1817 = vpop.permute.xlu0 %1816
        %1820 = vset.pattern.permute.xlu0 0
        %1821 = vperm.xlu0 %1820, %v1813
        %v1822 = vpop.permute.xlu0 %1821
        %v1826 = vunpack.c.l.b16 %v1467
        %v1827 = vunpack.c.h.b16 %v1467
        %v1828 = vunpack.c.l.b16 %v1468
        %v1829 = vunpack.c.h.b16 %v1468
        %v1830 = vpack.c.b16 %v1828, %v1826
        %v1831 = vpack.c.b16 %v1829, %v1827
        %v1834 = vsel %vm614, %v1831, 0
        %1836 = vmatprep.subr.bf16.mxu0 %v1808
        %1837 = vmatpush1.bf16.msra.mxu0 %v1807
        %1838 = vmatprep.subr.bf16.mxu0 %v1806
        %1839 = vmatpush1.bf16.msra.mxu0 %v1805
        %1840 = vmatprep.subr.bf16.mxu0 %v1804
        %1841 = vmatpush1.bf16.msra.mxu0 %v1803
        %1842 = vmatprep.subr.bf16.mxu0 %v1802
        %1843 = vmatpush1.bf16.msra.mxu0 %v1801
        %1844 = vmatprep.subr.bf16.mxu0 %v1800
        %1845 = vmatpush1.bf16.msra.mxu0 %v1799
        %1846 = vmatprep.subr.bf16.mxu0 %v1798
        %1847 = vmatpush1.bf16.msra.mxu0 %v1797
        %1848 = vmatprep.subr.bf16.mxu0 %v1796
        %1849 = vmatpush1.bf16.msra.mxu0 %v1795
        %1850 = vmatprep.subr.bf16.mxu0 %v1794
        %1851 = vmatpush1.bf16.msra.mxu0 %v1793
        %1852 = vmatprep.subr.bf16.mxu0 0
        %1853 = vmatpush2.bf16.msra.mxu0 0
        %1854 = vmatprep.subr.bf16.mxu0 0
        %1855 = vmatpush2.bf16.msra.mxu0 0
        %1856 = vmatprep.subr.bf16.mxu0 0
        %1857 = vmatpush2.bf16.msra.mxu0 0
        %1858 = vmatprep.subr.bf16.mxu0 0
        %1859 = vmatpush2.bf16.msra.mxu0 0
        %1860 = vmatprep.subr.bf16.mxu0 0
        %1861 = vmatpush2.bf16.msra.mxu0 0
        %1862 = vmatprep.subr.bf16.mxu0 0
        %1863 = vmatpush2.bf16.msra.mxu0 0
        %1864 = vmatprep.subr.bf16.mxu0 0
        %1865 = vmatpush2.bf16.msra.mxu0 0
        %1866 = vmatprep.subr.bf16.mxu0 %v1810
        %1867 = vmatpush2.bf16.msra.mxu0 %v1809
        %1868 = vmatprep.mubr.bf16.mxu0 %v1834
        %1869 = vmatmul.mubr.bf16.gmra.mxu0 %v1830
        %v1870 = vpop.f32.mrf.mxu0
        %v1871 = vadd.f32 %v1817, %v1870
        %v1872 = vpop.f32.mrf.mxu0
        %v1873 = vadd.f32 %v1817, %v1872
        %v1874 = vpop.f32.mrf.mxu0
        %v1875 = vadd.f32 %v1822, %v1874
        %v1876 = vpop.f32.mrf.mxu0
        %v1877 = vadd.f32 %v1822, %v1876
        %1878 = vdwg.mxu0
        %1879 = vmatprep.subr.mxu0 0.0
        %1880 = vmatpush1.msra.mxu0 0.0
        %1881 = vmatprep.subr.mxu0 0.0
        %1882 = vmatpush1.msra.mxu0 0.0
        %1883 = vmatprep.subr.mxu0 0.0
        %1884 = vmatpush1.msra.mxu0 0.0
        %1885 = vmatprep.subr.mxu0 0.0
        %1886 = vmatpush1.msra.mxu0 0.0
        %1887 = vmatprep.subr.mxu0 0.0
        %1888 = vmatpush1.msra.mxu0 0.0
        %1889 = vmatprep.subr.mxu0 0.0
        %1890 = vmatpush1.msra.mxu0 0.0
        %1891 = vmatprep.subr.mxu0 0.0
        %1892 = vmatpush1.msra.mxu0 0.0
        %1893 = vmatprep.subr.mxu0 0.0
        %1894 = vmatpush1.msra.mxu0 0.0
        %1895 = vmatprep.subr.mxu0 0.0
        %1896 = vmatpush1.msra.mxu0 0.0
        %1897 = vmatprep.subr.mxu0 0.0
        %1898 = vmatpush1.msra.mxu0 0.0
        %1899 = vmatprep.subr.mxu0 0.0
        %1900 = vmatpush1.msra.mxu0 0.0
        %1901 = vmatprep.subr.mxu0 0.0
        %1902 = vmatpush1.msra.mxu0 0.0
        %1903 = vmatprep.subr.mxu0 0.0
        %1904 = vmatpush1.msra.mxu0 0.0
        %1905 = vmatprep.subr.mxu0 0.0
        %1906 = vmatpush1.msra.mxu0 0.0
        %1907 = vmatprep.subr.mxu0 %v1877
        %1908 = vmatpush1.msra.mxu0 %v1875
        %1909 = vmatprep.subr.mxu0 %v1873
        %1910 = vmatpush1.msra.mxu0 %v1871
        %1911 = vmatprep.subr.mxu0 0.0
        %1912 = vmatpush2.msra.mxu0 0.0
        %1913 = vmatprep.subr.mxu0 0.0
        %1914 = vmatpush2.msra.mxu0 0.0
        %1915 = vmatprep.subr.mxu0 0.0
        %1916 = vmatpush2.msra.mxu0 0.0
        %1917 = vmatprep.subr.mxu0 0.0
        %1918 = vmatpush2.msra.mxu0 0.0
        %1919 = vmatprep.subr.mxu0 0.0
        %1920 = vmatpush2.msra.mxu0 0.0
        %1921 = vmatprep.subr.mxu0 0.0
        %1922 = vmatpush2.msra.mxu0 0.0
        %1923 = vmatprep.subr.mxu0 0.0
        %1924 = vmatpush2.msra.mxu0 0.0
        %1925 = vmatprep.subr.mxu0 0.0
        %1926 = vmatpush2.msra.mxu0 0.0
        %1927 = vmatprep.subr.mxu0 0.0
        %1928 = vmatpush2.msra.mxu0 0.0
        %1929 = vmatprep.subr.mxu0 0.0
        %1930 = vmatpush2.msra.mxu0 0.0
        %1931 = vmatprep.subr.mxu0 0.0
        %1932 = vmatpush2.msra.mxu0 0.0
        %1933 = vmatprep.subr.mxu0 0.0
        %1934 = vmatpush2.msra.mxu0 0.0
        %1935 = vmatprep.subr.mxu0 0.0
        %1936 = vmatpush2.msra.mxu0 0.0
        %1937 = vmatprep.subr.mxu0 0.0
        %1938 = vmatpush2.msra.mxu0 0.0
        %1939 = vmatprep.subr.mxu0 0.0
        %1940 = vmatpush2.msra.mxu0 0.0
        %1941 = vmatprep.subr.mxu0 0.0
        %1942 = vmatpush2.msra.mxu0 0.0
        %1943 = vmatprep.mubr.f32.mxu0 0.0
        %1944 = vmatmul.mubr.f32.gmra.mxu0 %v1256
        %v1945 = vpop.f32.mrf.mxu0
        %v1946 = vadd.f32 0.0, %v1945
        %v1947 = vpop.f32.mrf.mxu0
        %v1948 = vadd.f32 0.0, %v1947
        %1949 = vdwg.mxu0
        %v1950 = vlaneseq
        %v1951 = vshrl.u32 %v1950, 7
        %v1952 = vsub.s32 0, %v1951
        %v1953 = vrot.slane %v1946, %v1952
        %v1954 = vlaneseq
        %v1955 = vshrl.u32 %v1954, 7
        %v1956 = vsub.s32 0, %v1955
        %v1957 = vrot.slane %v1948, %v1956
        %v1958 = vsub.f32 %v1871, %v1953
        %v1959 = vsub.f32 %v1873, %v1957
        %v1960 = vsub.f32 %v1875, %v1953
        %v1961 = vsub.f32 %v1877, %v1957
        %v1962 = vmul.f32 %v1958, %v1958
        %v1963 = vmul.f32 %v1959, %v1959
        %v1964 = vmul.f32 %v1960, %v1960
        %v1965 = vmul.f32 %v1961, %v1961
        %1966 = vmatprep.subr.mxu0 0.0
        %1967 = vmatpush1.msra.mxu0 0.0
        %1968 = vmatprep.subr.mxu0 0.0
        %1969 = vmatpush1.msra.mxu0 0.0
        %1970 = vmatprep.subr.mxu0 0.0
        %1971 = vmatpush1.msra.mxu0 0.0
        %1972 = vmatprep.subr.mxu0 0.0
        %1973 = vmatpush1.msra.mxu0 0.0
        %1974 = vmatprep.subr.mxu0 0.0
        %1975 = vmatpush1.msra.mxu0 0.0
        %1976 = vmatprep.subr.mxu0 0.0
        %1977 = vmatpush1.msra.mxu0 0.0
        %1978 = vmatprep.subr.mxu0 0.0
        %1979 = vmatpush1.msra.mxu0 0.0
        %1980 = vmatprep.subr.mxu0 0.0
        %1981 = vmatpush1.msra.mxu0 0.0
        %1982 = vmatprep.subr.mxu0 0.0
        %1983 = vmatpush1.msra.mxu0 0.0
        %1984 = vmatprep.subr.mxu0 0.0
        %1985 = vmatpush1.msra.mxu0 0.0
        %1986 = vmatprep.subr.mxu0 0.0
        %1987 = vmatpush1.msra.mxu0 0.0
        %1988 = vmatprep.subr.mxu0 0.0
        %1989 = vmatpush1.msra.mxu0 0.0
        %1990 = vmatprep.subr.mxu0 0.0
        %1991 = vmatpush1.msra.mxu0 0.0
        %1992 = vmatprep.subr.mxu0 0.0
        %1993 = vmatpush1.msra.mxu0 0.0
        %1994 = vmatprep.subr.mxu0 %v1965
        %1995 = vmatpush1.msra.mxu0 %v1964
        %1996 = vmatprep.subr.mxu0 %v1963
        %1997 = vmatpush1.msra.mxu0 %v1962
        %1998 = vmatprep.subr.mxu0 0.0
        %1999 = vmatpush2.msra.mxu0 0.0
        %2000 = vmatprep.subr.mxu0 0.0
        %2001 = vmatpush2.msra.mxu0 0.0
        %2002 = vmatprep.subr.mxu0 0.0
        %2003 = vmatpush2.msra.mxu0 0.0
        %2004 = vmatprep.subr.mxu0 0.0
        %2005 = vmatpush2.msra.mxu0 0.0
        %2006 = vmatprep.subr.mxu0 0.0
        %2007 = vmatpush2.msra.mxu0 0.0
        %2008 = vmatprep.subr.mxu0 0.0
        %2009 = vmatpush2.msra.mxu0 0.0
        %2010 = vmatprep.subr.mxu0 0.0
        %2011 = vmatpush2.msra.mxu0 0.0
        %2012 = vmatprep.subr.mxu0 0.0
        %2013 = vmatpush2.msra.mxu0 0.0
        %2014 = vmatprep.subr.mxu0 0.0
        %2015 = vmatpush2.msra.mxu0 0.0
        %2016 = vmatprep.subr.mxu0 0.0
        %2017 = vmatpush2.msra.mxu0 0.0
        %2018 = vmatprep.subr.mxu0 0.0
        %2019 = vmatpush2.msra.mxu0 0.0
        %2020 = vmatprep.subr.mxu0 0.0
        %2021 = vmatpush2.msra.mxu0 0.0
        %2022 = vmatprep.subr.mxu0 0.0
        %2023 = vmatpush2.msra.mxu0 0.0
        %2024 = vmatprep.subr.mxu0 0.0
        %2025 = vmatpush2.msra.mxu0 0.0
        %2026 = vmatprep.subr.mxu0 0.0
        %2027 = vmatpush2.msra.mxu0 0.0
        %2028 = vmatprep.subr.mxu0 0.0
        %2029 = vmatpush2.msra.mxu0 0.0
        %2030 = vmatprep.mubr.f32.mxu0 0.0
        %2031 = vmatmul.mubr.f32.gmra.mxu0 %v1256
        %v2032 = vpop.f32.mrf.mxu0
        %v2033 = vadd.f32 1e-05, %v2032
        %v2034 = vpop.f32.mrf.mxu0
        %v2035 = vadd.f32 1e-05, %v2034
        %2036 = vdwg.mxu0
        %v2037 = vrsqrt.pop %v2033
        %v2038 = vrsqrt.pop %v2035
        %v2039 = vlaneseq
        %v2040 = vshrl.u32 %v2039, 7
        %v2041 = vsub.s32 0, %v2040
        %v2042 = vrot.slane %v2037, %v2041
        %v2043 = vlaneseq
        %v2044 = vshrl.u32 %v2043, 7
        %v2045 = vsub.s32 0, %v2044
        %v2046 = vrot.slane %v2038, %v2045
        %v2047 = vmul.f32 %v1958, %v2042
        %v2048 = vmul.f32 %v1959, %v2046
        %v2049 = vmul.f32 %v1960, %v2042
        %v2050 = vmul.f32 %v1961, %v2046
        %s2051 = scalar_lea.vmem %s470, 16 [#allocation3]
        %v2052 = vld [vmem:[%s2051] sm:$0xff]
        %v2053 = vld [vmem:[%s2051 + $0x8] sm:$0xff]
        %2055 = vset.pattern.permute.xlu0 0
        %2056 = vperm.xlu0 %2055, %v2052
        %v2057 = vpop.permute.xlu0 %2056
        %2060 = vset.pattern.permute.xlu0 0
        %2061 = vperm.xlu0 %2060, %v2053
        %v2062 = vpop.permute.xlu0 %2061
        %v2064 = vmul.f32 %v2047, %v2057
        %v2065 = vmul.f32 %v2048, %v2057
        %v2066 = vmul.f32 %v2049, %v2062
        %v2067 = vmul.f32 %v2050, %v2062
        %s2068 = scalar_lea.vmem %s477, 16 [#allocation4]
        %v2069 = vld [vmem:[%s2068] sm:$0xff]
        %v2070 = vld [vmem:[%s2068 + $0x8] sm:$0xff]
        %2072 = vset.pattern.permute.xlu0 0
        %2073 = vperm.xlu0 %2072, %v2069
        %v2074 = vpop.permute.xlu0 %2073
        %2077 = vset.pattern.permute.xlu0 0
        %2078 = vperm.xlu0 %2077, %v2070
        %v2079 = vpop.permute.xlu0 %2078
        %v2081 = vadd.f32 %v2064, %v2074
        %v2082 = vadd.f32 %v2065, %v2074
        %v2083 = vadd.f32 %v2066, %v2079
        %v2084 = vadd.f32 %v2067, %v2079
        %v2085 = vmax.f32 %v2081, 0.0
        %v2086 = vmax.f32 %v2082, 0.0
        %v2087 = vmax.f32 %v2083, 0.0
        %v2088 = vmax.f32 %v2084, 0.0
        %v2089 = vld [vmem:[%s9] sm:$0xf]
        %v2090 = vpack.c.bf16 %v2087, %v2085
        %v2091 = vpack.c.bf16 %v2088, %v2086
        %v2092 = vld [vmem:[%s10] sm:$0xff]
        %2094 = vset.pattern.permute.xlu0 0
        %2095 = vperm.xlu0 %2094, %v2092
        %v2096 = vpop.permute.xlu0 %2095
        %v2099 = vsel %vm614, %v2089, 0
        %2101 = vmatprep.subr.bf16.mxu0 0
        %2102 = vmatpush1.bf16.msra.mxu0 0
        %2103 = vmatprep.subr.bf16.mxu0 0
        %2104 = vmatpush1.bf16.msra.mxu0 0
        %2105 = vmatprep.subr.bf16.mxu0 0
        %2106 = vmatpush1.bf16.msra.mxu0 0
        %2107 = vmatprep.subr.bf16.mxu0 0
        %2108 = vmatpush1.bf16.msra.mxu0 0
        %2109 = vmatprep.subr.bf16.mxu0 0
        %2110 = vmatpush1.bf16.msra.mxu0 0
        %2111 = vmatprep.subr.bf16.mxu0 0
        %2112 = vmatpush1.bf16.msra.mxu0 0
        %2113 = vmatprep.subr.bf16.mxu0 0
        %2114 = vmatpush1.bf16.msra.mxu0 0
        %2115 = vmatprep.subr.bf16.mxu0 %v2091
        %2116 = vmatpush1.bf16.msra.mxu0 %v2090
        %2117 = vmatprep.subr.bf16.mxu0 0
        %2118 = vmatpush2.bf16.msra.mxu0 0
        %2119 = vmatprep.subr.bf16.mxu0 0
        %2120 = vmatpush2.bf16.msra.mxu0 0
        %2121 = vmatprep.subr.bf16.mxu0 0
        %2122 = vmatpush2.bf16.msra.mxu0 0
        %2123 = vmatprep.subr.bf16.mxu0 0
        %2124 = vmatpush2.bf16.msra.mxu0 0
        %2125 = vmatprep.subr.bf16.mxu0 0
        %2126 = vmatpush2.bf16.msra.mxu0 0
        %2127 = vmatprep.subr.bf16.mxu0 0
        %2128 = vmatpush2.bf16.msra.mxu0 0
        %2129 = vmatprep.subr.bf16.mxu0 0
        %2130 = vmatpush2.bf16.msra.mxu0 0
        %2131 = vmatprep.subr.bf16.mxu0 0
        %2132 = vmatpush2.bf16.msra.mxu0 0
        %2133 = vmatprep.mubr.bf16.mxu0 0
        %2134 = vmatmul.mubr.bf16.gmra.mxu0 %v2099
        %v2135 = vpop.f32.mrf.mxu0
        %v2136 = vadd.f32 %v2096, %v2135
        %v2137 = vpop.f32.mrf.mxu0
        %v2138 = vadd.f32 %v2096, %v2137
        %v2139 = vpop.f32.mrf.mxu0
        %v2140 = vpop.f32.mrf.mxu0
        %2141 = vdwg.mxu0
        %v2142 = vxor.u32 %v2136, 2147483648
        %v2143 = vxor.u32 %v2138, 2147483648
        %v2144 = vmul.f32 %v2142, 1.442695
        %v2145 = vpow.pop %v2144
        %v2146 = vmul.f32 %v2143, 1.442695
        %v2147 = vpow.pop %v2146
        %v2148 = vadd.f32 %v2145, 1.0
        %v2149 = vadd.f32 %v2147, 1.0
        %v2150 = vrcp.pop %v2148
        %v2151 = vmul.f32 1.0, %v2150
        %v2152 = vrcp.pop %v2149
        %v2153 = vmul.f32 1.0, %v2152
        %v2154 = vmul.f32 %v544, %v2151
        %v2155 = vmul.f32 %v545, %v2153
        %v2156 = vld [vmem:[%s537] sm:$0xff]
        %v2157 = vld [vmem:[%s537 + $0x8] sm:$0xff]
        %v2158 = vmul.f32 %v2154, %v2156
        %v2159 = vmul.f32 %v2155, %v2157
        %2160 = vst [vmem:[%s542] sm:$0xff] %v2158
        %2161 = vst [vmem:[%s542 + $0x8] sm:$0xff] %v2159
        %p2162 = scmp.lt.s32.totalorder %s22, 1
        %s2163 = scalar_select %p2162, %s22, 1
        %s2164 = smul.addr %s2163, 2
        %s2165 = smul.addr %s2164, 8
        %s2166 = scalar_lea.vmem %s11, %s2165
        // Predicated region
        $region141: #{attfno_forward.5} parent=131 // pred_check
          %p2167 = pneg %p291
        $region142: #{attfno_forward.5} parent=131 // pred_check_branch
          %2169 = sbr.rel (%p2167) target = $region144
        $region143: #{attfno_forward.5} parent=131 // pred_region
          _
        $region144: #{attfno_forward.5} parent=131 // pred_fallthru
          _
      $region132: #{attfno_forward.5} parent=5 // pred_fallthru
        _
      %p2170 = scmp.le.s32.totalorder 2, %s17
      // Predicated region
      $region145: #{attfno_forward.5} parent=5 // pred_check
        %p2171 = pneg %p2170
      $region146: #{attfno_forward.5} parent=5 // pred_check_branch
        %2173 = sbr.rel (%p2171) target = $region148
      $region147: #{attfno_forward.5} parent=5 // pred_region
        %s2174 = ssub.s32 %s17, 2
        // Predicated region
        $region149: #{attfno_forward.5} parent=147 // pred_check
          %p2175 = pneg %p297
        $region150: #{attfno_forward.5} parent=147 // pred_check_branch
          %2177 = sbr.rel (%p2175) target = $region152
        $region151: #{attfno_forward.5} parent=147 // pred_region
          %p2178 = scmp.lt.s32.totalorder %s23, 1
          %s2179 = scalar_select %p2178, %s23, 1
          %s2180 = smul.addr %s2179, 2
          %s2181 = smul.addr %s2180, 8
          %s2182 = scalar_lea.vmem %s11, %s2181
        $region152: #{attfno_forward.5} parent=147 // pred_fallthru
          _
      $region148: #{attfno_forward.5} parent=5 // pred_fallthru
        _
    $region6: #{attfno_forward.5} parent=1 // loop_footer
      %s21 = sadd.s32 1, %s17
    $region7: #{attfno_forward.5} parent=1 // loop_footer_branch
      %16 = sbr.rel target = $region3
    $region8: #{attfno_forward.5} parent=1 // loop_exit
      _

</llo_original>
